<compile_context>
chip_gen: v5e
topology: v5e:2x2
jax: 0.10.0
libtpu: 0.0.40
codegen_flags: <defaults>
</compile_context>

<pallas_src>
import functools

import jax
import jax.numpy as jnp
from jax.experimental import pallas as pl
from jax.experimental.pallas import tpu as pltpu

_NEG_INF = float(-1e30)   # finite "minus infinity" -> no inf-inf NaN hazards


# ----------------------------------------------------------------------------- utils
def _round_up(x, m):
    return ((x + m - 1) // m) * m


def _full_spec(arr):
    """Whole-array BlockSpec with a constant index map (weights stay VMEM-resident)."""
    nd = arr.ndim
    return pl.BlockSpec(arr.shape, lambda b, t, _nd=nd: (0,) * _nd)


def _vmem_limit_bytes(n_tile, c_in, k, m, c_out, weight_bytes, out_itemsize):
    per_tile = (n_tile * c_in * 2 * 2                        # x tile (bf16), 2-deep
                + n_tile * c_out * out_itemsize * 2          # out tile, 2-deep
                + n_tile * (2 * k + 2 * m + c_in + c_out) * 4  # f32 intermediates
                + 2 * weight_bytes                           # resident weights
                + 4 * m * c_in)                              # proxy / k / v / stats
    # 2x margin; keep >= 32 MiB (>= every generation's scoped default) and cap at
    # 64 MiB so the same setting still fits v7x's 64 MiB physical VMEM.
    return int(min(max(2 * per_tile, 32 * 1024 * 1024), 64 * 1024 * 1024))


# -------------------------------------------------------------------------- kernels
def _query_key_sim(x, proxy, wp1_ref, bp1_ref, wp2_ref, bp2_ref, wobj_ref):
    """f_pixel(x_tile) @ f_object(proxy)^T  ->  (n_tile, M) f32 similarity tile."""
    # f_pixel: (conv1x1 -> BN -> ReLU) x 2 ; BN scale folded into the weights.
    q = jnp.dot(x, wp1_ref[...], preferred_element_type=jnp.float32)
    q = jnp.maximum(q + bp1_ref[...], 0.0)
    q = jnp.dot(q.astype(wp2_ref.dtype), wp2_ref[...],
                preferred_element_type=jnp.float32)
    q = jnp.maximum(q + bp2_ref[...], 0.0)                                  # (n, K)
    # f_object (key); key_channels**-0.5 is folded into wobj on the host.
    k = jnp.dot(proxy, wobj_ref[...], preferred_element_type=jnp.float32)   # (M, K)
    # Contract the K axes directly -- no transposed copy of k is materialized.
    return jax.lax.dot_general(
        q.astype(jnp.bfloat16), k.astype(jnp.bfloat16),
        dimension_numbers=(((1,), (1,)), ((), ())),
        preferred_element_type=jnp.float32)                                 # (n, M)


def _ocr_stats_kernel(x_ref, p_ref,
                      wp1_ref, bp1_ref, wp2_ref, bp2_ref, wobj_ref,
                      stats_ref, m_sc, l_sc, *, n_total=None):
    """Pass 1: online per-proxy-column max / exp-sum over the N tiles of one batch."""
    t = pl.program_id(1)

    @pl.when(t == 0)
    def _():
        m_sc[...] = jnp.full_like(m_sc, _NEG_INF)
        l_sc[...] = jnp.zeros_like(l_sc)

    sim = _query_key_sim(x_ref[0], p_ref[0],
                         wp1_ref, bp1_ref, wp2_ref, bp2_ref, wobj_ref)      # (n, M)

    if n_total is not None:  # mask rows that are zero-padding of the N axis
        n_tile = x_ref.shape[1]
        rows = jax.lax.broadcasted_iota(jnp.int32, sim.shape, 0) + t * n_tile
        sim = jnp.where(rows < n_total, sim, _NEG_INF)

    m_new = jnp.maximum(m_sc[...], jnp.max(sim, axis=0, keepdims=True))     # (1, M)
    l_sc[...] = (l_sc[...] * jnp.exp(m_sc[...] - m_new)
                 + jnp.sum(jnp.exp(sim - m_new), axis=0, keepdims=True))
    m_sc[...] = m_new

    @pl.when(t == pl.num_programs(1) - 1)
    def _():
        stats_ref[0] = jnp.concatenate([m_sc[...], l_sc[...]], axis=0)      # (2, M)


def _ocr_out_kernel(cmax_ref, csum_ref, x_ref, p_ref,
                    wp1_ref, bp1_ref, wp2_ref, bp2_ref, wobj_ref,
                    wdown_ref, wup_ref, bup_ref, woc_ref, wox_ref, bo_ref,
                    out_ref):
    """Pass 2: per N-tile attention + f_up + fused concat conv (bias+ReLU only)."""
    x = x_ref[0]                 # (n_tile, C_in) bf16
    proxy = p_ref[0]             # (M, C_in)      bf16

    sim = _query_key_sim(x, proxy, wp1_ref, bp1_ref, wp2_ref, bp2_ref, wobj_ref)

    col_max = cmax_ref[0]                                     # (1, M) f32
    e = jnp.exp(sim - col_max)                                # (n, M), values <= 1

    # Fold the softmax denominator into the value rows: an (M,K) multiply instead of
    # an (N,M) one; the approximate reciprocal runs on the EUP slot.
    inv_den = pl.reciprocal(csum_ref[0], approx=True)         # (M, 1) f32
    v = jnp.dot(proxy, wdown_ref[...], preferred_element_type=jnp.float32)  # (M, K)
    v = v * inv_den

    ctx = jnp.dot(e.astype(jnp.bfloat16), v.astype(jnp.bfloat16),
                  preferred_element_type=jnp.float32)         # (n, K)

    # f_up: conv1x1 -> BN -> ReLU (BN scale folded into wup)
    ctx = jnp.dot(ctx.astype(wup_ref.dtype), wup_ref[...],
                  preferred_element_type=jnp.float32)
    ctx = jnp.maximum(ctx + bup_ref[...], 0.0)                # (n, C_in)

    # conv_bn_dropout on concat([context, feats]): the (2*C_in, C_out) weight is split
    # into its context / feats halves so no concatenation is needed in the kernel.
    out = (jnp.dot(ctx.astype(woc_ref.dtype), woc_ref[...],
                   preferred_element_type=jnp.float32)
           + jnp.dot(x, wox_ref[...], preferred_element_type=jnp.float32))
    out = jnp.maximum(out + bo_ref[...], 0.0)                 # (n, C_out)
    out_ref[0] = out.astype(out_ref.dtype)


# ------------------------------------------------------------------------- wrappers
def _prepare_weights(params, key_channels, compute_dtype=jnp.bfloat16):
    """Fold eval-mode BN scales and the key_channels**-0.5 attention scale into the
    1x1-conv weights; pre-cast the matmul operands to bf16 (biases stay f32)."""
    f32 = jnp.float32
    return dict(
        wp1=(params["wp1"] * params["sp1"]).astype(compute_dtype),
        bp1=params["bp1"].astype(f32),
        wp2=(params["wp2"] * params["sp2"]).astype(compute_dtype),
        bp2=params["bp2"].astype(f32),
        wobj=(params["wobj"] * (float(key_channels) ** -0.5)).astype(compute_dtype),
        wdown=params["wdown"].astype(compute_dtype),
        wup=(params["wup"] * params["sup"]).astype(compute_dtype),
        bup=params["bup"].astype(f32),
        woc=(params["woc"] * params["so"]).astype(compute_dtype),
        wox=(params["wox"] * params["so"]).astype(compute_dtype),
        bo=params["bo"].astype(f32),
    )


def spatial_ocr_pallas_flat(x, p, kw, *, n_tile=512, out_dtype=None):
    """x: (B, N, C_in), p: (B, M, C_in), kw: folded/bf16 weights -> (B, N, C_out)."""
    B, N, C_in = x.shape
    _, M, _ = p.shape
    K = kw["wp1"].shape[1]
    C_out = kw["woc"].shape[1]
    cdt = kw["wp1"].dtype
    out_dtype = out_dtype if out_dtype is not None else x.dtype

    # Tile the N = H*W axis (sublane aligned); pad N up to a whole number of tiles.
    n_tile = max(8, min(_round_up(n_tile, 8), _round_up(N, 8)))
    n_tiles = pl.cdiv(N, n_tile)
    n_pad = n_tiles * n_tile

    x_k = x.astype(cdt)       # bf16 activations halve HBM traffic for the feature map
    p_k = p.astype(cdt)
    if n_pad != N:
        x_k = jnp.pad(x_k, ((0, 0), (0, n_pad - N), (0, 0)))

    weight_bytes = sum(int(v.size) * v.dtype.itemsize for v in kw.values())
    vmem_limit = _vmem_limit_bytes(n_tile, C_in, K, M, C_out, weight_bytes,
                                   jnp.dtype(out_dtype).itemsize)

    # -------- pass 1: per-proxy-column softmax statistics over the full N axis -----
    stats_in = [kw[k] for k in ("wp1", "bp1", "wp2", "bp2", "wobj")]
    stats = pl.pallas_call(
        functools.partial(_ocr_stats_kernel,
                          n_total=(N if n_pad != N else None)),
        out_shape=jax.ShapeDtypeStruct((B, 2, M), jnp.float32),
        grid_spec=pltpu.PrefetchScalarGridSpec(
            num_scalar_prefetch=0,
            grid=(B, n_tiles),
            in_specs=[pl.BlockSpec((1, n_tile, C_in), lambda b, t: (b, t, 0)),
                      pl.BlockSpec((1, M, C_in), lambda b, t: (b, 0, 0))]
                     + [_full_spec(w) for w in stats_in],
            out_specs=pl.BlockSpec((1, 2, M), lambda b, t: (b, 0, 0)),
            scratch_shapes=[pltpu.VMEM((1, M), jnp.float32),
                            pltpu.VMEM((1, M), jnp.float32)]),
        compiler_params=pltpu.CompilerParams(
            dimension_semantics=("parallel", "arbitrary"),
            vmem_limit_bytes=vmem_limit),
    )(x_k, p_k, *stats_in)

    col_max = stats[:, 0:1, :]                          # (B, 1, M) row-oriented
    col_sum = jnp.reshape(stats[:, 1, :], (B, M, 1))    # (B, M, 1) column-oriented

    # -------- pass 2: recompute q/sim per tile and emit the fused OCR output -------
    out_in = [kw[k] for k in ("wp1", "bp1", "wp2", "bp2", "wobj", "wdown",
                              "wup", "bup", "woc", "wox", "bo")]
    out_padded = pl.pallas_call(
        _ocr_out_kernel,
        out_shape=jax.ShapeDtypeStruct((B, n_pad, C_out), out_dtype),
        grid_spec=pltpu.PrefetchScalarGridSpec(
            num_scalar_prefetch=0,
            grid=(B, n_tiles),
            in_specs=[pl.BlockSpec((1, 1, M), lambda b, t: (b, 0, 0)),
                      pl.BlockSpec((1, M, 1), lambda b, t: (b, 0, 0)),
                      pl.BlockSpec((1, n_tile, C_in), lambda b, t: (b, t, 0)),
                      pl.BlockSpec((1, M, C_in), lambda b, t: (b, 0, 0))]
                     + [_full_spec(w) for w in out_in],
            out_specs=pl.BlockSpec((1, n_tile, C_out), lambda b, t: (b, t, 0))),
        compiler_params=pltpu.CompilerParams(
            dimension_semantics=("parallel", "parallel"),
            vmem_limit_bytes=vmem_limit),
    )(col_max, col_sum, x_k, p_k, *out_in)

    return out_padded if n_pad == N else out_padded[:, :N, :]


def spatial_ocr_pallas(feats_nchw, proxy_nchw, params, *, n_tile=512,
                       compute_dtype=jnp.bfloat16):
    """feats: (B, C_in, H, W), proxy: (B, C_in, Hp, Wp) -> (B, C_out, H, W)."""
    B, C_in, H, W = feats_nchw.shape
    _, _, Hp, Wp = proxy_nchw.shape
    K = params["wp1"].shape[1]
    C_out = params["woc"].shape[1]

    # TODO(synk): for production keep activations channels-last end-to-end and call
    # spatial_ocr_pallas_flat directly; these NCHW<->NHWC transposes are an extra
    # HBM round trip of the feature map per call.
    x = jnp.transpose(feats_nchw, (0, 2, 3, 1)).reshape(B, H * W, C_in)
    p = jnp.transpose(proxy_nchw, (0, 2, 3, 1)).reshape(B, Hp * Wp, C_in)

    kweights = _prepare_weights(params, K, compute_dtype)
    out_flat = spatial_ocr_pallas_flat(x, p, kweights, n_tile=n_tile,
                                       out_dtype=feats_nchw.dtype)
    return jnp.transpose(out_flat.reshape(B, H, W, C_out), (0, 3, 1, 2))


# ------------------------------------------------------------------------ reference
def _fold_bn(gamma, beta, mean, var, eps=1e-5):
    s = gamma / jnp.sqrt(var + eps)
    b = beta - mean * s
    return s[None, :], b[None, :]   # (1, C) for broadcasting


def _reference(feats_nchw, proxy_nchw, params):
    """Pure-JAX f32 reference mirroring the PyTorch forward (eval mode)."""
    B, C_in, H, W = feats_nchw.shape
    _, _, Hp, Wp = proxy_nchw.shape
    N, M = H * W, Hp * Wp
    K = params["wp1"].shape[1]
    x = jnp.transpose(feats_nchw, (0, 2, 3, 1)).reshape(B, N, C_in)
    p = jnp.transpose(proxy_nchw, (0, 2, 3, 1)).reshape(B, M, C_in)

    q = jnp.maximum(x @ params["wp1"] * params["sp1"] + params["bp1"], 0.0)
    q = jnp.maximum(q @ params["wp2"] * params["sp2"] + params["bp2"], 0.0)
    k = p @ params["wobj"]
    v = p @ params["wdown"]
    sim = jnp.einsum("bnk,bmk->bnm", q, k) * (float(K) ** -0.5)
    sim = jax.nn.softmax(sim, axis=1)                 # dim=1 == query axis
    ctx = jnp.einsum("bnm,bmk->bnk", sim, v)
    ctx = jnp.maximum(ctx @ params["wup"] * params["sup"] + params["bup"], 0.0)
    out = ctx @ params["woc"] + x @ params["wox"]
    out = jnp.maximum(out * params["so"] + params["bo"], 0.0)
    C_out = out.shape[-1]
    return jnp.transpose(out.reshape(B, H, W, C_out), (0, 3, 1, 2))


def make_params(key, in_channels, key_channels, out_channels):
    ks = jax.random.split(key, 16)
    f32 = jnp.float32

    def w(k, i, o):
        return jax.random.normal(k, (i, o), f32) * (i ** -0.5)

    def bn(k, c):
        g = 1.0 + 0.1 * jax.random.normal(jax.random.fold_in(k, 0), (c,), f32)
        b = 0.1 * jax.random.normal(jax.random.fold_in(k, 1), (c,), f32)
        m = 0.1 * jax.random.normal(jax.random.fold_in(k, 2), (c,), f32)
        v = jnp.abs(1.0 + 0.1 * jax.random.normal(jax.random.fold_in(k, 3), (c,), f32))
        return _fold_bn(g, b, m, v)

    sp1, bp1 = bn(ks[1], key_channels)
    sp2, bp2 = bn(ks[3], key_channels)
    sup, bup = bn(ks[7], in_channels)
    so, bo = bn(ks[10], out_channels)
    w_out_full = w(ks[8], 2 * in_channels, out_channels)
    return dict(
        wp1=w(ks[0], in_channels, key_channels), sp1=sp1, bp1=bp1,
        wp2=w(ks[2], key_channels, key_channels), sp2=sp2, bp2=bp2,
        wobj=w(ks[4], in_channels, key_channels),
        wdown=w(ks[5], in_channels, key_channels),
        wup=w(ks[6], key_channels, in_channels), sup=sup, bup=bup,
        woc=w_out_full[:in_channels], wox=w_out_full[in_channels:], so=so, bo=bo,
    )


if __name__ == "__main__":
    # Small but layout-friendly shapes: channel dims are multiples of 128 so every
    # matmul operand and the output stay lane-dense; N = 1024 exercises the N-tiling
    # (two 512-row tiles per batch) and the two-pass query-axis softmax.
    B, C_in, H, W = 2, 128, 32, 32       # feats: (2, 128, 32, 32)
    key_channels, C_out = 128, 128
    Hp, Wp = 8, 1                        # 8 object regions (proxy)

    root = jax.random.PRNGKey(0)
    k_feat, k_proxy, k_par = jax.random.split(root, 3)
    feats = jax.random.normal(k_feat, (B, C_in, H, W), jnp.float32)
    proxy = jax.random.normal(k_proxy, (B, C_in, Hp, Wp), jnp.float32)
    params = make_params(k_par, C_in, key_channels, C_out)

    run = jax.jit(functools.partial(spatial_ocr_pallas, params=params, n_tile=512))
    out = jax.block_until_ready(run(feats, proxy))

    ref = _reference(feats, proxy, params)
    assert out.shape == (B, C_out, H, W)
    max_err = float(jnp.max(jnp.abs(out - ref)))
    # bf16 matmul operands + approx reciprocal => slightly looser tolerance vs f32 ref.
    assert jnp.allclose(out, ref, atol=5e-2, rtol=5e-2), \
        f"mismatch vs reference (max abs err {max_err:.3e})"
    print("KERNEL_OK")
</pallas_src>

<mosaic_0001>
module attributes {stable_mosaic.version = 11 : i64} {
  func.func @_ocr_stats_kernel(%arg0: i32, %arg1: i32, %arg2: memref<1x512x128xbf16, #tpu.memory_space<vmem>>, %arg3: memref<1x8x128xbf16, #tpu.memory_space<vmem>>, %arg4: memref<128x128xbf16, #tpu.memory_space<vmem>>, %arg5: memref<1x128xf32, #tpu.memory_space<vmem>>, %arg6: memref<128x128xbf16, #tpu.memory_space<vmem>>, %arg7: memref<1x128xf32, #tpu.memory_space<vmem>>, %arg8: memref<128x128xbf16, #tpu.memory_space<vmem>>, %arg9: memref<1x2x8xf32, #tpu.memory_space<vmem>>, %arg10: memref<1x8xf32, #tpu.memory_space<vmem>>, %arg11: memref<1x8xf32, #tpu.memory_space<vmem>>) attributes {dimension_semantics = [#tpu.dimension_semantics<parallel>, #tpu.dimension_semantics<arbitrary>], iteration_bounds = array<i64: 2, 2>, scalar_prefetch = 0 : i64, scratch_operands = 2 : i64, tpu.core_type = #tpu.core_type<tc>, window_params = [{transform_indices = @transform_0, window_bounds = array<i64: 1, 512, 128>}, {transform_indices = @transform_1, window_bounds = array<i64: 1, 8, 128>}, {pipeline_mode = #tpu.pipeline_mode<synchronous>, transform_indices = @transform_2, window_bounds = array<i64: 128, 128>}, {pipeline_mode = #tpu.pipeline_mode<synchronous>, transform_indices = @transform_3, window_bounds = array<i64: 1, 128>}, {pipeline_mode = #tpu.pipeline_mode<synchronous>, transform_indices = @transform_4, window_bounds = array<i64: 128, 128>}, {pipeline_mode = #tpu.pipeline_mode<synchronous>, transform_indices = @transform_5, window_bounds = array<i64: 1, 128>}, {pipeline_mode = #tpu.pipeline_mode<synchronous>, transform_indices = @transform_6, window_bounds = array<i64: 128, 128>}, {transform_indices = @transform_7, window_bounds = array<i64: 1, 2, 8>}]} {
    %c0_i32 = arith.constant 0 : i32
    %0 = arith.cmpi eq, %arg1, %c0_i32 : i32
    %1 = arith.extui %0 : i1 to i32
    %c0_i32_0 = arith.constant 0 : i32
    %2 = arith.cmpi ne, %1, %c0_i32_0 : i32
    scf.if %2 {
      %cst_34 = arith.constant -1.000000e+30 : f32
      %47 = vector.broadcast %cst_34 : f32 to vector<1x8xf32>
      %c0_35 = arith.constant 0 : index
      %c0_36 = arith.constant 0 : index
      %48 = vector.load %arg10[%c0_35, %c0_36] : memref<1x8xf32, #tpu.memory_space<vmem>>, vector<1x8xf32>
      tpu.vector_store %arg10[%c0_35, %c0_36], %47 {strides = array<i32>} : memref<1x8xf32, #tpu.memory_space<vmem>>, vector<1x8xf32>,
      %cst_37 = arith.constant 0.000000e+00 : f32
      %49 = vector.broadcast %cst_37 : f32 to vector<1x8xf32>
      %c0_38 = arith.constant 0 : index
      %c0_39 = arith.constant 0 : index
      %50 = vector.load %arg11[%c0_38, %c0_39] : memref<1x8xf32, #tpu.memory_space<vmem>>, vector<1x8xf32>
      tpu.vector_store %arg11[%c0_38, %c0_39], %49 {strides = array<i32>} : memref<1x8xf32, #tpu.memory_space<vmem>>, vector<1x8xf32>,
    } else {
    }
    %c0 = arith.constant 0 : index
    %c0_1 = arith.constant 0 : index
    %c0_2 = arith.constant 0 : index
    %3 = vector.load %arg2[%c0, %c0_1, %c0_2] : memref<1x512x128xbf16, #tpu.memory_space<vmem>>, vector<1x512x128xbf16>
    %4 = vector.shape_cast %3 : vector<1x512x128xbf16> to vector<512x128xbf16>
    %c0_3 = arith.constant 0 : index
    %c0_4 = arith.constant 0 : index
    %c0_5 = arith.constant 0 : index
    %5 = vector.load %arg3[%c0_3, %c0_4, %c0_5] : memref<1x8x128xbf16, #tpu.memory_space<vmem>>, vector<1x8x128xbf16>
    %6 = vector.shape_cast %5 : vector<1x8x128xbf16> to vector<8x128xbf16>
    %c0_6 = arith.constant 0 : index
    %c0_7 = arith.constant 0 : index
    %7 = vector.load %arg4[%c0_6, %c0_7] : memref<128x128xbf16, #tpu.memory_space<vmem>>, vector<128x128xbf16>
    %cst = arith.constant dense<0.000000e+00> : vector<512x128xf32>
    %8 = tpu.matmul %4, %7, %cst {dimension_numbers = #tpu.dot_dimension_numbers<[1], [0], [0], [1], [0, 0, 1, 1], [], []>} : vector<512x128xbf16>, vector<128x128xbf16>, vector<512x128xf32> -> vector<512x128xf32>
    %c0_8 = arith.constant 0 : index
    %c0_9 = arith.constant 0 : index
    %9 = vector.load %arg5[%c0_8, %c0_9] : memref<1x128xf32, #tpu.memory_space<vmem>>, vector<1x128xf32>
    %10 = vector.broadcast %9 : vector<1x128xf32> to vector<512x128xf32>
    %11 = arith.addf %8, %10 : vector<512x128xf32>
    %cst_10 = arith.constant 0.000000e+00 : f32
    %12 = vector.broadcast %cst_10 : f32 to vector<512x128xf32>
    %13 = arith.maximumf %11, %12 : vector<512x128xf32>
    %14 = arith.truncf %13 : vector<512x128xf32> to vector<512x128xbf16>
    %c0_11 = arith.constant 0 : index
    %c0_12 = arith.constant 0 : index
    %15 = vector.load %arg6[%c0_11, %c0_12] : memref<128x128xbf16, #tpu.memory_space<vmem>>, vector<128x128xbf16>
    %cst_13 = arith.constant dense<0.000000e+00> : vector<512x128xf32>
    %16 = tpu.matmul %14, %15, %cst_13 {dimension_numbers = #tpu.dot_dimension_numbers<[1], [0], [0], [1], [0, 0, 1, 1], [], []>} : vector<512x128xbf16>, vector<128x128xbf16>, vector<512x128xf32> -> vector<512x128xf32>
    %c0_14 = arith.constant 0 : index
    %c0_15 = arith.constant 0 : index
    %17 = vector.load %arg7[%c0_14, %c0_15] : memref<1x128xf32, #tpu.memory_space<vmem>>, vector<1x128xf32>
    %18 = vector.broadcast %17 : vector<1x128xf32> to vector<512x128xf32>
    %19 = arith.addf %16, %18 : vector<512x128xf32>
    %cst_16 = arith.constant 0.000000e+00 : f32
    %20 = vector.broadcast %cst_16 : f32 to vector<512x128xf32>
    %21 = arith.maximumf %19, %20 : vector<512x128xf32>
    %c0_17 = arith.constant 0 : index
    %c0_18 = arith.constant 0 : index
    %22 = vector.load %arg8[%c0_17, %c0_18] : memref<128x128xbf16, #tpu.memory_space<vmem>>, vector<128x128xbf16>
    %cst_19 = arith.constant dense<0.000000e+00> : vector<8x128xf32>
    %23 = tpu.matmul %6, %22, %cst_19 {dimension_numbers = #tpu.dot_dimension_numbers<[1], [0], [0], [1], [0, 0, 1, 1], [], []>} : vector<8x128xbf16>, vector<128x128xbf16>, vector<8x128xf32> -> vector<8x128xf32>
    %24 = arith.truncf %21 : vector<512x128xf32> to vector<512x128xbf16>
    %25 = arith.truncf %23 : vector<8x128xf32> to vector<8x128xbf16>
    %cst_20 = arith.constant dense<0.000000e+00> : vector<512x8xf32>
    %26 = tpu.matmul %24, %25, %cst_20 {dimension_numbers = #tpu.dot_dimension_numbers<[1], [1], [0], [0], [0, 0, 1, 0], [], []>} : vector<512x128xbf16>, vector<8x128xbf16>, vector<512x8xf32> -> vector<512x8xf32>
    %c0_21 = arith.constant 0 : index
    %c0_22 = arith.constant 0 : index
    %27 = vector.load %arg10[%c0_21, %c0_22] : memref<1x8xf32, #tpu.memory_space<vmem>>, vector<1x8xf32>
    %cst_23 = arith.constant dense<0xFF800000> : vector<8xf32>
    %28 = vector.multi_reduction <maximumf>, %26, %cst_23 [0] : vector<512x8xf32> to vector<8xf32>
    %29 = vector.shape_cast %28 : vector<8xf32> to vector<1x8xf32>
    %30 = arith.maximumf %27, %29 : vector<1x8xf32>
    %c0_24 = arith.constant 0 : index
    %c0_25 = arith.constant 0 : index
    %31 = vector.load %arg11[%c0_24, %c0_25] : memref<1x8xf32, #tpu.memory_space<vmem>>, vector<1x8xf32>
    %c0_26 = arith.constant 0 : index
    %c0_27 = arith.constant 0 : index
    %32 = vector.load %arg10[%c0_26, %c0_27] : memref<1x8xf32, #tpu.memory_space<vmem>>, vector<1x8xf32>
    %33 = arith.subf %32, %30 : vector<1x8xf32>
    %34 = math.exp %33 : vector<1x8xf32>
    %35 = arith.mulf %31, %34 : vector<1x8xf32>
    %36 = vector.broadcast %30 : vector<1x8xf32> to vector<512x8xf32>
    %37 = arith.subf %26, %36 : vector<512x8xf32>
    %38 = math.exp %37 : vector<512x8xf32>
    %cst_28 = arith.constant dense<0.000000e+00> : vector<8xf32>
    %39 = vector.multi_reduction <add>, %38, %cst_28 [0] : vector<512x8xf32> to vector<8xf32>
    %40 = vector.shape_cast %39 : vector<8xf32> to vector<1x8xf32>
    %41 = arith.addf %35, %40 : vector<1x8xf32>
    %c0_29 = arith.constant 0 : index
    %c0_30 = arith.constant 0 : index
    %42 = vector.load %arg11[%c0_29, %c0_30] : memref<1x8xf32, #tpu.memory_space<vmem>>, vector<1x8xf32>
    tpu.vector_store %arg11[%c0_29, %c0_30], %41 {strides = array<i32>} : memref<1x8xf32, #tpu.memory_space<vmem>>, vector<1x8xf32>,
    %c0_31 = arith.constant 0 : index
    %c0_32 = arith.constant 0 : index
    %43 = vector.load %arg10[%c0_31, %c0_32] : memref<1x8xf32, #tpu.memory_space<vmem>>, vector<1x8xf32>
    tpu.vector_store %arg10[%c0_31, %c0_32], %30 {strides = array<i32>} : memref<1x8xf32, #tpu.memory_space<vmem>>, vector<1x8xf32>,
    %c1_i32 = arith.constant 1 : i32
    %44 = arith.cmpi eq, %arg1, %c1_i32 : i32
    %45 = arith.extui %44 : i1 to i32
    %c0_i32_33 = arith.constant 0 : i32
    %46 = arith.cmpi ne, %45, %c0_i32_33 : i32
    scf.if %46 {
      %c0_34 = arith.constant 0 : index
      %c0_35 = arith.constant 0 : index
      %47 = vector.load %arg10[%c0_34, %c0_35] : memref<1x8xf32, #tpu.memory_space<vmem>>, vector<1x8xf32>
      %c0_36 = arith.constant 0 : index
      %c0_37 = arith.constant 0 : index
      %48 = vector.load %arg11[%c0_36, %c0_37] : memref<1x8xf32, #tpu.memory_space<vmem>>, vector<1x8xf32>
      %49 = tpu.concatenate %47, %48 in 0 : vector<1x8xf32>, vector<1x8xf32> -> vector<2x8xf32>
      %c0_38 = arith.constant 0 : index
      %c0_39 = arith.constant 0 : index
      %c0_40 = arith.constant 0 : index
      %50 = vector.load %arg9[%c0_38, %c0_39, %c0_40] : memref<1x2x8xf32, #tpu.memory_space<vmem>>, vector<1x2x8xf32>
      %51 = vector.shape_cast %50 : vector<1x2x8xf32> to vector<2x8xf32>
      %52 = vector.shape_cast %49 : vector<2x8xf32> to vector<1x2x8xf32>
      tpu.vector_store %arg9[%c0_38, %c0_39, %c0_40], %52 {strides = array<i32>} : memref<1x2x8xf32, #tpu.memory_space<vmem>>, vector<1x2x8xf32>,
    } else {
    }
    return
  }
  func.func @transform_0(%arg0: i32, %arg1: i32) -> (i32, i32, i32) {
    %c0_i32 = arith.constant 0 : i32
    %c0_i32_0 = arith.constant 0 : i32
    return %arg0, %arg1, %c0_i32 : i32, i32, i32
  }
  func.func @transform_1(%arg0: i32, %arg1: i32) -> (i32, i32, i32) {
    %c0_i32 = arith.constant 0 : i32
    %c0_i32_0 = arith.constant 0 : i32
    %c0_i32_1 = arith.constant 0 : i32
    return %arg0, %c0_i32, %c0_i32_0 : i32, i32, i32
  }
  func.func @transform_2(%arg0: i32, %arg1: i32) -> (i32, i32) {
    %c0_i32 = arith.constant 0 : i32
    %c0_i32_0 = arith.constant 0 : i32
    %c0_i32_1 = arith.constant 0 : i32
    return %c0_i32, %c0_i32_0 : i32, i32
  }
  func.func @transform_3(%arg0: i32, %arg1: i32) -> (i32, i32) {
    %c0_i32 = arith.constant 0 : i32
    %c0_i32_0 = arith.constant 0 : i32
    %c0_i32_1 = arith.constant 0 : i32
    return %c0_i32, %c0_i32_0 : i32, i32
  }
  func.func @transform_4(%arg0: i32, %arg1: i32) -> (i32, i32) {
    %c0_i32 = arith.constant 0 : i32
    %c0_i32_0 = arith.constant 0 : i32
    %c0_i32_1 = arith.constant 0 : i32
    return %c0_i32, %c0_i32_0 : i32, i32
  }
  func.func @transform_5(%arg0: i32, %arg1: i32) -> (i32, i32) {
    %c0_i32 = arith.constant 0 : i32
    %c0_i32_0 = arith.constant 0 : i32
    %c0_i32_1 = arith.constant 0 : i32
    return %c0_i32, %c0_i32_0 : i32, i32
  }
  func.func @transform_6(%arg0: i32, %arg1: i32) -> (i32, i32) {
    %c0_i32 = arith.constant 0 : i32
    %c0_i32_0 = arith.constant 0 : i32
    %c0_i32_1 = arith.constant 0 : i32
    return %c0_i32, %c0_i32_0 : i32, i32
  }
  func.func @transform_7(%arg0: i32, %arg1: i32) -> (i32, i32, i32) {
    %c0_i32 = arith.constant 0 : i32
    %c0_i32_0 = arith.constant 0 : i32
    %c0_i32_1 = arith.constant 0 : i32
    return %arg0, %c0_i32, %c0_i32_0 : i32, i32, i32
  }
}

module attributes {stable_mosaic.version = 11 : i64} {
  func.func @_ocr_out_kernel(%arg0: i32, %arg1: i32, %arg2: memref<1x1x8xf32, #tpu.memory_space<vmem>>, %arg3: memref<1x8x1xf32, #tpu.memory_space<vmem>>, %arg4: memref<1x512x128xbf16, #tpu.memory_space<vmem>>, %arg5: memref<1x8x128xbf16, #tpu.memory_space<vmem>>, %arg6: memref<128x128xbf16, #tpu.memory_space<vmem>>, %arg7: memref<1x128xf32, #tpu.memory_space<vmem>>, %arg8: memref<128x128xbf16, #tpu.memory_space<vmem>>, %arg9: memref<1x128xf32, #tpu.memory_space<vmem>>, %arg10: memref<128x128xbf16, #tpu.memory_space<vmem>>, %arg11: memref<128x128xbf16, #tpu.memory_space<vmem>>, %arg12: memref<128x128xbf16, #tpu.memory_space<vmem>>, %arg13: memref<1x128xf32, #tpu.memory_space<vmem>>, %arg14: memref<128x128xbf16, #tpu.memory_space<vmem>>, %arg15: memref<128x128xbf16, #tpu.memory_space<vmem>>, %arg16: memref<1x128xf32, #tpu.memory_space<vmem>>, %arg17: memref<1x512x128xf32, #tpu.memory_space<vmem>>) attributes {dimension_semantics = [#tpu.dimension_semantics<parallel>, #tpu.dimension_semantics<parallel>], iteration_bounds = array<i64: 2, 2>, scalar_prefetch = 0 : i64, scratch_operands = 0 : i64, tpu.core_type = #tpu.core_type<tc>, window_params = [{transform_indices = @transform_0, window_bounds = array<i64: 1, 1, 8>}, {transform_indices = @transform_1, window_bounds = array<i64: 1, 8, 1>}, {transform_indices = @transform_2, window_bounds = array<i64: 1, 512, 128>}, {transform_indices = @transform_3, window_bounds = array<i64: 1, 8, 128>}, {pipeline_mode = #tpu.pipeline_mode<synchronous>, transform_indices = @transform_4, window_bounds = array<i64: 128, 128>}, {pipeline_mode = #tpu.pipeline_mode<synchronous>, transform_indices = @transform_5, window_bounds = array<i64: 1, 128>}, {pipeline_mode = #tpu.pipeline_mode<synchronous>, transform_indices = @transform_6, window_bounds = array<i64: 128, 128>}, {pipeline_mode = #tpu.pipeline_mode<synchronous>, transform_indices = @transform_7, window_bounds = array<i64: 1, 128>}, {pipeline_mode = #tpu.pipeline_mode<synchronous>, transform_indices = @transform_8, window_bounds = array<i64: 128, 128>}, {pipeline_mode = #tpu.pipeline_mode<synchronous>, transform_indices = @transform_9, window_bounds = array<i64: 128, 128>}, {pipeline_mode = #tpu.pipeline_mode<synchronous>, transform_indices = @transform_10, window_bounds = array<i64: 128, 128>}, {pipeline_mode = #tpu.pipeline_mode<synchronous>, transform_indices = @transform_11, window_bounds = array<i64: 1, 128>}, {pipeline_mode = #tpu.pipeline_mode<synchronous>, transform_indices = @transform_12, window_bounds = array<i64: 128, 128>}, {pipeline_mode = #tpu.pipeline_mode<synchronous>, transform_indices = @transform_13, window_bounds = array<i64: 128, 128>}, {pipeline_mode = #tpu.pipeline_mode<synchronous>, transform_indices = @transform_14, window_bounds = array<i64: 1, 128>}, {transform_indices = @transform_15, window_bounds = array<i64: 1, 512, 128>}]} {
    %c0 = arith.constant 0 : index
    %c0_0 = arith.constant 0 : index
    %c0_1 = arith.constant 0 : index
    %0 = vector.load %arg4[%c0, %c0_0, %c0_1] : memref<1x512x128xbf16, #tpu.memory_space<vmem>>, vector<1x512x128xbf16>
    %1 = vector.shape_cast %0 : vector<1x512x128xbf16> to vector<512x128xbf16>
    %c0_2 = arith.constant 0 : index
    %c0_3 = arith.constant 0 : index
    %c0_4 = arith.constant 0 : index
    %2 = vector.load %arg5[%c0_2, %c0_3, %c0_4] : memref<1x8x128xbf16, #tpu.memory_space<vmem>>, vector<1x8x128xbf16>
    %3 = vector.shape_cast %2 : vector<1x8x128xbf16> to vector<8x128xbf16>
    %c0_5 = arith.constant 0 : index
    %c0_6 = arith.constant 0 : index
    %4 = vector.load %arg6[%c0_5, %c0_6] : memref<128x128xbf16, #tpu.memory_space<vmem>>, vector<128x128xbf16>
    %cst = arith.constant dense<0.000000e+00> : vector<512x128xf32>
    %5 = tpu.matmul %1, %4, %cst {dimension_numbers = #tpu.dot_dimension_numbers<[1], [0], [0], [1], [0, 0, 1, 1], [], []>} : vector<512x128xbf16>, vector<128x128xbf16>, vector<512x128xf32> -> vector<512x128xf32>
    %c0_7 = arith.constant 0 : index
    %c0_8 = arith.constant 0 : index
    %6 = vector.load %arg7[%c0_7, %c0_8] : memref<1x128xf32, #tpu.memory_space<vmem>>, vector<1x128xf32>
    %7 = vector.broadcast %6 : vector<1x128xf32> to vector<512x128xf32>
    %8 = arith.addf %5, %7 : vector<512x128xf32>
    %cst_9 = arith.constant 0.000000e+00 : f32
    %9 = vector.broadcast %cst_9 : f32 to vector<512x128xf32>
    %10 = arith.maximumf %8, %9 : vector<512x128xf32>
    %11 = arith.truncf %10 : vector<512x128xf32> to vector<512x128xbf16>
    %c0_10 = arith.constant 0 : index
    %c0_11 = arith.constant 0 : index
    %12 = vector.load %arg8[%c0_10, %c0_11] : memref<128x128xbf16, #tpu.memory_space<vmem>>, vector<128x128xbf16>
    %cst_12 = arith.constant dense<0.000000e+00> : vector<512x128xf32>
    %13 = tpu.matmul %11, %12, %cst_12 {dimension_numbers = #tpu.dot_dimension_numbers<[1], [0], [0], [1], [0, 0, 1, 1], [], []>} : vector<512x128xbf16>, vector<128x128xbf16>, vector<512x128xf32> -> vector<512x128xf32>
    %c0_13 = arith.constant 0 : index
    %c0_14 = arith.constant 0 : index
    %14 = vector.load %arg9[%c0_13, %c0_14] : memref<1x128xf32, #tpu.memory_space<vmem>>, vector<1x128xf32>
    %15 = vector.broadcast %14 : vector<1x128xf32> to vector<512x128xf32>
    %16 = arith.addf %13, %15 : vector<512x128xf32>
    %cst_15 = arith.constant 0.000000e+00 : f32
    %17 = vector.broadcast %cst_15 : f32 to vector<512x128xf32>
    %18 = arith.maximumf %16, %17 : vector<512x128xf32>
    %c0_16 = arith.constant 0 : index
    %c0_17 = arith.constant 0 : index
    %19 = vector.load %arg10[%c0_16, %c0_17] : memref<128x128xbf16, #tpu.memory_space<vmem>>, vector<128x128xbf16>
    %cst_18 = arith.constant dense<0.000000e+00> : vector<8x128xf32>
    %20 = tpu.matmul %3, %19, %cst_18 {dimension_numbers = #tpu.dot_dimension_numbers<[1], [0], [0], [1], [0, 0, 1, 1], [], []>} : vector<8x128xbf16>, vector<128x128xbf16>, vector<8x128xf32> -> vector<8x128xf32>
    %21 = arith.truncf %18 : vector<512x128xf32> to vector<512x128xbf16>
    %22 = arith.truncf %20 : vector<8x128xf32> to vector<8x128xbf16>
    %cst_19 = arith.constant dense<0.000000e+00> : vector<512x8xf32>
    %23 = tpu.matmul %21, %22, %cst_19 {dimension_numbers = #tpu.dot_dimension_numbers<[1], [1], [0], [0], [0, 0, 1, 0], [], []>} : vector<512x128xbf16>, vector<8x128xbf16>, vector<512x8xf32> -> vector<512x8xf32>
    %c0_20 = arith.constant 0 : index
    %c0_21 = arith.constant 0 : index
    %c0_22 = arith.constant 0 : index
    %24 = vector.load %arg2[%c0_20, %c0_21, %c0_22] : memref<1x1x8xf32, #tpu.memory_space<vmem>>, vector<1x1x8xf32>
    %25 = vector.shape_cast %24 : vector<1x1x8xf32> to vector<1x8xf32>
    %26 = vector.broadcast %25 : vector<1x8xf32> to vector<512x8xf32>
    %27 = arith.subf %23, %26 : vector<512x8xf32>
    %28 = math.exp %27 : vector<512x8xf32>
    %c0_23 = arith.constant 0 : index
    %c0_24 = arith.constant 0 : index
    %c0_25 = arith.constant 0 : index
    %29 = vector.load %arg3[%c0_23, %c0_24, %c0_25] : memref<1x8x1xf32, #tpu.memory_space<vmem>>, vector<1x8x1xf32>
    %30 = vector.shape_cast %29 : vector<1x8x1xf32> to vector<8x1xf32>
    %31 = tpu.reciprocal %30 {approx = true} : vector<8x1xf32> -> vector<8x1xf32>
    %c0_26 = arith.constant 0 : index
    %c0_27 = arith.constant 0 : index
    %32 = vector.load %arg11[%c0_26, %c0_27] : memref<128x128xbf16, #tpu.memory_space<vmem>>, vector<128x128xbf16>
    %cst_28 = arith.constant dense<0.000000e+00> : vector<8x128xf32>
    %33 = tpu.matmul %3, %32, %cst_28 {dimension_numbers = #tpu.dot_dimension_numbers<[1], [0], [0], [1], [0, 0, 1, 1], [], []>} : vector<8x128xbf16>, vector<128x128xbf16>, vector<8x128xf32> -> vector<8x128xf32>
    %34 = vector.broadcast %31 : vector<8x1xf32> to vector<8x128xf32>
    %35 = arith.mulf %33, %34 : vector<8x128xf32>
    %36 = arith.truncf %28 : vector<512x8xf32> to vector<512x8xbf16>
    %37 = arith.truncf %35 : vector<8x128xf32> to vector<8x128xbf16>
    %cst_29 = arith.constant dense<0.000000e+00> : vector<512x128xf32>
    %38 = tpu.matmul %36, %37, %cst_29 {dimension_numbers = #tpu.dot_dimension_numbers<[1], [0], [0], [1], [0, 0, 1, 1], [], []>} : vector<512x8xbf16>, vector<8x128xbf16>, vector<512x128xf32> -> vector<512x128xf32>
    %39 = arith.truncf %38 : vector<512x128xf32> to vector<512x128xbf16>
    %c0_30 = arith.constant 0 : index
    %c0_31 = arith.constant 0 : index
    %40 = vector.load %arg12[%c0_30, %c0_31] : memref<128x128xbf16, #tpu.memory_space<vmem>>, vector<128x128xbf16>
    %cst_32 = arith.constant dense<0.000000e+00> : vector<512x128xf32>
    %41 = tpu.matmul %39, %40, %cst_32 {dimension_numbers = #tpu.dot_dimension_numbers<[1], [0], [0], [1], [0, 0, 1, 1], [], []>} : vector<512x128xbf16>, vector<128x128xbf16>, vector<512x128xf32> -> vector<512x128xf32>
    %c0_33 = arith.constant 0 : index
    %c0_34 = arith.constant 0 : index
    %42 = vector.load %arg13[%c0_33, %c0_34] : memref<1x128xf32, #tpu.memory_space<vmem>>, vector<1x128xf32>
    %43 = vector.broadcast %42 : vector<1x128xf32> to vector<512x128xf32>
    %44 = arith.addf %41, %43 : vector<512x128xf32>
    %cst_35 = arith.constant 0.000000e+00 : f32
    %45 = vector.broadcast %cst_35 : f32 to vector<512x128xf32>
    %46 = arith.maximumf %44, %45 : vector<512x128xf32>
    %47 = arith.truncf %46 : vector<512x128xf32> to vector<512x128xbf16>
    %c0_36 = arith.constant 0 : index
    %c0_37 = arith.constant 0 : index
    %48 = vector.load %arg14[%c0_36, %c0_37] : memref<128x128xbf16, #tpu.memory_space<vmem>>, vector<128x128xbf16>
    %cst_38 = arith.constant dense<0.000000e+00> : vector<512x128xf32>
    %49 = tpu.matmul %47, %48, %cst_38 {dimension_numbers = #tpu.dot_dimension_numbers<[1], [0], [0], [1], [0, 0, 1, 1], [], []>} : vector<512x128xbf16>, vector<128x128xbf16>, vector<512x128xf32> -> vector<512x128xf32>
    %c0_39 = arith.constant 0 : index
    %c0_40 = arith.constant 0 : index
    %50 = vector.load %arg15[%c0_39, %c0_40] : memref<128x128xbf16, #tpu.memory_space<vmem>>, vector<128x128xbf16>
    %cst_41 = arith.constant dense<0.000000e+00> : vector<512x128xf32>
    %51 = tpu.matmul %1, %50, %cst_41 {dimension_numbers = #tpu.dot_dimension_numbers<[1], [0], [0], [1], [0, 0, 1, 1], [], []>} : vector<512x128xbf16>, vector<128x128xbf16>, vector<512x128xf32> -> vector<512x128xf32>
    %52 = arith.addf %49, %51 : vector<512x128xf32>
    %c0_42 = arith.constant 0 : index
    %c0_43 = arith.constant 0 : index
    %53 = vector.load %arg16[%c0_42, %c0_43] : memref<1x128xf32, #tpu.memory_space<vmem>>, vector<1x128xf32>
    %54 = vector.broadcast %53 : vector<1x128xf32> to vector<512x128xf32>
    %55 = arith.addf %52, %54 : vector<512x128xf32>
    %cst_44 = arith.constant 0.000000e+00 : f32
    %56 = vector.broadcast %cst_44 : f32 to vector<512x128xf32>
    %57 = arith.maximumf %55, %56 : vector<512x128xf32>
    %c0_45 = arith.constant 0 : index
    %c0_46 = arith.constant 0 : index
    %c0_47 = arith.constant 0 : index
    %58 = vector.load %arg17[%c0_45, %c0_46, %c0_47] : memref<1x512x128xf32, #tpu.memory_space<vmem>>, vector<1x512x128xf32>
    %59 = vector.shape_cast %58 : vector<1x512x128xf32> to vector<512x128xf32>
    %60 = vector.shape_cast %57 : vector<512x128xf32> to vector<1x512x128xf32>
    tpu.vector_store %arg17[%c0_45, %c0_46, %c0_47], %60 {strides = array<i32>} : memref<1x512x128xf32, #tpu.memory_space<vmem>>, vector<1x512x128xf32>,
    return
  }
  func.func @transform_0(%arg0: i32, %arg1: i32) -> (i32, i32, i32) {
    %c0_i32 = arith.constant 0 : i32
    %c0_i32_0 = arith.constant 0 : i32
    %c0_i32_1 = arith.constant 0 : i32
    return %arg0, %c0_i32, %c0_i32_0 : i32, i32, i32
  }
  func.func @transform_1(%arg0: i32, %arg1: i32) -> (i32, i32, i32) {
    %c0_i32 = arith.constant 0 : i32
    %c0_i32_0 = arith.constant 0 : i32
    %c0_i32_1 = arith.constant 0 : i32
    return %arg0, %c0_i32, %c0_i32_0 : i32, i32, i32
  }
  func.func @transform_2(%arg0: i32, %arg1: i32) -> (i32, i32, i32) {
    %c0_i32 = arith.constant 0 : i32
    %c0_i32_0 = arith.constant 0 : i32
    return %arg0, %arg1, %c0_i32 : i32, i32, i32
  }
  func.func @transform_3(%arg0: i32, %arg1: i32) -> (i32, i32, i32) {
    %c0_i32 = arith.constant 0 : i32
    %c0_i32_0 = arith.constant 0 : i32
    %c0_i32_1 = arith.constant 0 : i32
    return %arg0, %c0_i32, %c0_i32_0 : i32, i32, i32
  }
  func.func @transform_4(%arg0: i32, %arg1: i32) -> (i32, i32) {
    %c0_i32 = arith.constant 0 : i32
    %c0_i32_0 = arith.constant 0 : i32
    %c0_i32_1 = arith.constant 0 : i32
    return %c0_i32, %c0_i32_0 : i32, i32
  }
  func.func @transform_5(%arg0: i32, %arg1: i32) -> (i32, i32) {
    %c0_i32 = arith.constant 0 : i32
    %c0_i32_0 = arith.constant 0 : i32
    %c0_i32_1 = arith.constant 0 : i32
    return %c0_i32, %c0_i32_0 : i32, i32
  }
  func.func @transform_6(%arg0: i32, %arg1: i32) -> (i32, i32) {
    %c0_i32 = arith.constant 0 : i32
    %c0_i32_0 = arith.constant 0 : i32
    %c0_i32_1 = arith.constant 0 : i32
    return %c0_i32, %c0_i32_0 : i32, i32
  }
  func.func @transform_7(%arg0: i32, %arg1: i32) -> (i32, i32) {
    %c0_i32 = arith.constant 0 : i32
    %c0_i32_0 = arith.constant 0 : i32
    %c0_i32_1 = arith.constant 0 : i32
    return %c0_i32, %c0_i32_0 : i32, i32
  }
  func.func @transform_8(%arg0: i32, %arg1: i32) -> (i32, i32) {
    %c0_i32 = arith.constant 0 : i32
    %c0_i32_0 = arith.constant 0 : i32
    %c0_i32_1 = arith.constant 0 : i32
    return %c0_i32, %c0_i32_0 : i32, i32
  }
  func.func @transform_9(%arg0: i32, %arg1: i32) -> (i32, i32) {
    %c0_i32 = arith.constant 0 : i32
    %c0_i32_0 = arith.constant 0 : i32
    %c0_i32_1 = arith.constant 0 : i32
    return %c0_i32, %c0_i32_0 : i32, i32
  }
  func.func @transform_10(%arg0: i32, %arg1: i32) -> (i32, i32) {
    %c0_i32 = arith.constant 0 : i32
    %c0_i32_0 = arith.constant 0 : i32
    %c0_i32_1 = arith.constant 0 : i32
    return %c0_i32, %c0_i32_0 : i32, i32
  }
  func.func @transform_11(%arg0: i32, %arg1: i32) -> (i32, i32) {
    %c0_i32 = arith.constant 0 : i32
    %c0_i32_0 = arith.constant 0 : i32
    %c0_i32_1 = arith.constant 0 : i32
    return %c0_i32, %c0_i32_0 : i32, i32
  }
  func.func @transform_12(%arg0: i32, %arg1: i32) -> (i32, i32) {
    %c0_i32 = arith.constant 0 : i32
    %c0_i32_0 = arith.constant 0 : i32
    %c0_i32_1 = arith.constant 0 : i32
    return %c0_i32, %c0_i32_0 : i32, i32
  }
  func.func @transform_13(%arg0: i32, %arg1: i32) -> (i32, i32) {
    %c0_i32 = arith.constant 0 : i32
    %c0_i32_0 = arith.constant 0 : i32
    %c0_i32_1 = arith.constant 0 : i32
    return %c0_i32, %c0_i32_0 : i32, i32
  }
  func.func @transform_14(%arg0: i32, %arg1: i32) -> (i32, i32) {
    %c0_i32 = arith.constant 0 : i32
    %c0_i32_0 = arith.constant 0 : i32
    %c0_i32_1 = arith.constant 0 : i32
    return %c0_i32, %c0_i32_0 : i32, i32
  }
  func.func @transform_15(%arg0: i32, %arg1: i32) -> (i32, i32, i32) {
    %c0_i32 = arith.constant 0 : i32
    %c0_i32_0 = arith.constant 0 : i32
    return %arg0, %arg1, %c0_i32 : i32, i32, i32
  }
}

</mosaic_0001>

<llo_original>
// kernel: spatial_ocr_pallas.2
$region0: #{spatial_ocr_pallas.2}
  #allocation0 [shape = 'u32[]', space=smem, size = 0x4, offset = 0x4, fixed_abs, tag = 'smem constant byte address 0x4 - core index']
  #allocation1 [shape = 'u32[72,128]{1,0:T(1,128)}', space=vmem, size = 0x9000, scoped, tag = 'internal scratch']
  #allocation2 [shape = 'f32[1,8]{1,0:T(1,128)}', space=vmem, size = 0x200, scoped, tag = 'scratch operand']
  #allocation3 [shape = 'f32[1,8]{1,0:T(1,128)}', space=vmem, size = 0x200, scoped, tag = 'scratch operand']
  %s0 = inlined_call_operand.vmem [shape: bf16[2,1024,128], index: 0, kind: input, shape index: {}]
  %s1 = inlined_call_operand.vmem [shape: bf16[2,8,128], index: 1, kind: input, shape index: {}]
  %s2 = inlined_call_operand.vmem [shape: bf16[128,128], index: 2, kind: input, shape index: {}]
  %s3 = inlined_call_operand.vmem [shape: f32[1,128], index: 3, kind: input, shape index: {}]
  %s4 = inlined_call_operand.vmem [shape: bf16[128,128], index: 4, kind: input, shape index: {}]
  %s5 = inlined_call_operand.vmem [shape: f32[1,128], index: 5, kind: input, shape index: {}]
  %s6 = inlined_call_operand.vmem [shape: bf16[128,128], index: 6, kind: input, shape index: {}]
  %s7 = inlined_call_operand.vmem [shape: f32[2,2,8], index: 7, kind: output, shape index: {}]
  %s8 = sld [smem:[#allocation0]]
  $region69: #{spatial_ocr_pallas.2} parent=0
    _
  %s10 = ssub.s32 1, %s8
  %s11 = scalar_select 0, %s10, %s8
  loop: start=0, step=1, limit=6
  $region2: #{spatial_ocr_pallas.2} parent=0 // loop_pre_header
    _
  $region3: #{spatial_ocr_pallas.2} parent=0 // loop_header
    %s13 = sphi 0, %s17
    %p14 = scmp.ge.s32.totalorder %s13, 6
    %s20 = sphi 0, %s32
    %s21 = sphi 0, %s28
    %s22 = sphi 0, %s20
    %s23 = sphi 0, %s21
    %s24 = sphi 0, %s22
    %s25 = sphi 0, %s23
    %s37 = sphi 0, %s39
    %s40 = sphi 0, %s37
    %s41 = sphi 0, %s40
    %s57 = sphi 0, %s41
    %s63 = sphi 0, %s65
    %s66 = sphi 0, %s63
    %s67 = sphi 0, %s66
    %s83 = sphi 0, %s67
    %s87 = sphi 0, %s87
    %s89 = sphi 0, %s87
    %s90 = sphi 0, %s89
    %s104 = sphi 0, %s90
    %s108 = sphi 0, %s108
    %s110 = sphi 0, %s108
    %s111 = sphi 0, %s110
    %s125 = sphi 0, %s111
    %s129 = sphi 0, %s129
    %s131 = sphi 0, %s129
    %s132 = sphi 0, %s131
    %s146 = sphi 0, %s132
    %s150 = sphi 0, %s150
    %s152 = sphi 0, %s150
    %s153 = sphi 0, %s152
    %s167 = sphi 0, %s153
    %s171 = sphi 0, %s171
    %s173 = sphi 0, %s171
    %s174 = sphi 0, %s173
    %s188 = sphi 0, %s174
    %s194 = sphi 0, %s196
    %s197 = sphi 0, %s194
    %s198 = sphi 0, %s197
    %s214 = sphi 0, %s198
  $region4: #{spatial_ocr_pallas.2} parent=0 // loop_header_branch
    %16 = sbr.rel (%p14) target = $region8
  $region5: #{spatial_ocr_pallas.2} parent=0 // loop_body
    %s18 = ssub.s32 %s13, 1
    %s19 = ssub.s32 %s13, 2
    %s26 = sadd.s32 1, %s21
    %p27 = scmp.ge.s32.totalorder %s26, 2
    %s28 = scalar_select %p27, 0, %s26
    %s29 = sadd.s32 1, %s20
    %s30 = scalar_select %p27, %s29, %s20
    %p31 = scmp.ge.s32.totalorder %s30, 2
    %s32 = scalar_select %p31, 0, %s30
    %s33 = ssub.s32 %s20, %s32
    %s34 = ssub.s32 %s21, %s28
    %s35 = sor.u32 %s33, %s34
    %p36 = scmp.eq.s32.totalorder %s35, 0
    %s38 = sadd.s32 %s37, 1
    %s39 = scalar_select %p36, %s37, %s38
    %p42 = pneg %p36
    %p43 = scmp.eq.s32.totalorder %s13, 3
    %p44 = por %p42, %p43
    %p45 = scmp.ne.s32.totalorder %s37, %s40
    %p46 = scmp.eq.s32.totalorder %s13, 0
    %p47 = por %p45, %p46
    %p48 = scmp.ne.s32.totalorder %s37, %s40
    %p49 = scmp.eq.s32.totalorder %s18, 3
    %p50 = por %p48, %p49
    %p51 = scmp.ne.s32.totalorder %s40, %s41
    %p52 = scmp.eq.s32.totalorder %s18, 0
    %p53 = por %p51, %p52
    %p54 = scmp.ne.s32.totalorder %s40, %s41
    %p55 = scmp.eq.s32.totalorder %s19, 3
    %p56 = por %p54, %p55
    %p58 = scmp.ne.s32.totalorder %s41, %s57
    %p59 = scmp.eq.s32.totalorder %s19, 0
    %p60 = por %p58, %p59
    %s61 = ssub.s32 %s20, %s32
    %p62 = scmp.eq.s32.totalorder %s61, 0
    %s64 = sadd.s32 %s63, 1
    %s65 = scalar_select %p62, %s63, %s64
    %p68 = pneg %p62
    %p69 = scmp.eq.s32.totalorder %s13, 3
    %p70 = por %p68, %p69
    %p71 = scmp.ne.s32.totalorder %s63, %s66
    %p72 = scmp.eq.s32.totalorder %s13, 0
    %p73 = por %p71, %p72
    %p74 = scmp.ne.s32.totalorder %s63, %s66
    %p75 = scmp.eq.s32.totalorder %s18, 3
    %p76 = por %p74, %p75
    %p77 = scmp.ne.s32.totalorder %s66, %s67
    %p78 = scmp.eq.s32.totalorder %s18, 0
    %p79 = por %p77, %p78
    %p80 = scmp.ne.s32.totalorder %s66, %s67
    %p81 = scmp.eq.s32.totalorder %s19, 3
    %p82 = por %p80, %p81
    %p84 = scmp.ne.s32.totalorder %s67, %s83
    %p85 = scmp.eq.s32.totalorder %s19, 0
    %p86 = por %p84, %p85
    %s88 = sadd.s32 %s87, 1
    %p91 = scmp.eq.s32.totalorder %s13, 3
    %p92 = scmp.ne.s32.totalorder %s87, %s89
    %p93 = scmp.eq.s32.totalorder %s13, 0
    %p94 = por %p92, %p93
    %p95 = scmp.ne.s32.totalorder %s87, %s89
    %p96 = scmp.eq.s32.totalorder %s18, 3
    %p97 = por %p95, %p96
    %p98 = scmp.ne.s32.totalorder %s89, %s90
    %p99 = scmp.eq.s32.totalorder %s18, 0
    %p100 = por %p98, %p99
    %p101 = scmp.ne.s32.totalorder %s89, %s90
    %p102 = scmp.eq.s32.totalorder %s19, 3
    %p103 = por %p101, %p102
    %p105 = scmp.ne.s32.totalorder %s90, %s104
    %p106 = scmp.eq.s32.totalorder %s19, 0
    %p107 = por %p105, %p106
    %s109 = sadd.s32 %s108, 1
    %p112 = scmp.eq.s32.totalorder %s13, 3
    %p113 = scmp.ne.s32.totalorder %s108, %s110
    %p114 = scmp.eq.s32.totalorder %s13, 0
    %p115 = por %p113, %p114
    %p116 = scmp.ne.s32.totalorder %s108, %s110
    %p117 = scmp.eq.s32.totalorder %s18, 3
    %p118 = por %p116, %p117
    %p119 = scmp.ne.s32.totalorder %s110, %s111
    %p120 = scmp.eq.s32.totalorder %s18, 0
    %p121 = por %p119, %p120
    %p122 = scmp.ne.s32.totalorder %s110, %s111
    %p123 = scmp.eq.s32.totalorder %s19, 3
    %p124 = por %p122, %p123
    %p126 = scmp.ne.s32.totalorder %s111, %s125
    %p127 = scmp.eq.s32.totalorder %s19, 0
    %p128 = por %p126, %p127
    %s130 = sadd.s32 %s129, 1
    %p133 = scmp.eq.s32.totalorder %s13, 3
    %p134 = scmp.ne.s32.totalorder %s129, %s131
    %p135 = scmp.eq.s32.totalorder %s13, 0
    %p136 = por %p134, %p135
    %p137 = scmp.ne.s32.totalorder %s129, %s131
    %p138 = scmp.eq.s32.totalorder %s18, 3
    %p139 = por %p137, %p138
    %p140 = scmp.ne.s32.totalorder %s131, %s132
    %p141 = scmp.eq.s32.totalorder %s18, 0
    %p142 = por %p140, %p141
    %p143 = scmp.ne.s32.totalorder %s131, %s132
    %p144 = scmp.eq.s32.totalorder %s19, 3
    %p145 = por %p143, %p144
    %p147 = scmp.ne.s32.totalorder %s132, %s146
    %p148 = scmp.eq.s32.totalorder %s19, 0
    %p149 = por %p147, %p148
    %s151 = sadd.s32 %s150, 1
    %p154 = scmp.eq.s32.totalorder %s13, 3
    %p155 = scmp.ne.s32.totalorder %s150, %s152
    %p156 = scmp.eq.s32.totalorder %s13, 0
    %p157 = por %p155, %p156
    %p158 = scmp.ne.s32.totalorder %s150, %s152
    %p159 = scmp.eq.s32.totalorder %s18, 3
    %p160 = por %p158, %p159
    %p161 = scmp.ne.s32.totalorder %s152, %s153
    %p162 = scmp.eq.s32.totalorder %s18, 0
    %p163 = por %p161, %p162
    %p164 = scmp.ne.s32.totalorder %s152, %s153
    %p165 = scmp.eq.s32.totalorder %s19, 3
    %p166 = por %p164, %p165
    %p168 = scmp.ne.s32.totalorder %s153, %s167
    %p169 = scmp.eq.s32.totalorder %s19, 0
    %p170 = por %p168, %p169
    %s172 = sadd.s32 %s171, 1
    %p175 = scmp.eq.s32.totalorder %s13, 3
    %p176 = scmp.ne.s32.totalorder %s171, %s173
    %p177 = scmp.eq.s32.totalorder %s13, 0
    %p178 = por %p176, %p177
    %p179 = scmp.ne.s32.totalorder %s171, %s173
    %p180 = scmp.eq.s32.totalorder %s18, 3
    %p181 = por %p179, %p180
    %p182 = scmp.ne.s32.totalorder %s173, %s174
    %p183 = scmp.eq.s32.totalorder %s18, 0
    %p184 = por %p182, %p183
    %p185 = scmp.ne.s32.totalorder %s173, %s174
    %p186 = scmp.eq.s32.totalorder %s19, 3
    %p187 = por %p185, %p186
    %p189 = scmp.ne.s32.totalorder %s174, %s188
    %p190 = scmp.eq.s32.totalorder %s19, 0
    %p191 = por %p189, %p190
    %s192 = ssub.s32 %s20, %s32
    %p193 = scmp.eq.s32.totalorder %s192, 0
    %s195 = sadd.s32 %s194, 1
    %s196 = scalar_select %p193, %s194, %s195
    %p199 = pneg %p193
    %p200 = scmp.eq.s32.totalorder %s13, 3
    %p201 = por %p199, %p200
    %p202 = scmp.ne.s32.totalorder %s194, %s197
    %p203 = scmp.eq.s32.totalorder %s13, 0
    %p204 = por %p202, %p203
    %p205 = scmp.ne.s32.totalorder %s194, %s197
    %p206 = scmp.eq.s32.totalorder %s18, 3
    %p207 = por %p205, %p206
    %p208 = scmp.ne.s32.totalorder %s197, %s198
    %p209 = scmp.eq.s32.totalorder %s18, 0
    %p210 = por %p208, %p209
    %p211 = scmp.ne.s32.totalorder %s197, %s198
    %p212 = scmp.eq.s32.totalorder %s19, 3
    %p213 = por %p211, %p212
    %p215 = scmp.ne.s32.totalorder %s198, %s214
    %p216 = scmp.eq.s32.totalorder %s19, 0
    %p217 = por %p215, %p216
    %p218 = scmp.le.s32.totalorder 1, %s13
    %p219 = scmp.lt.s32.totalorder %s13, 5
    %p220 = pnand %p218, %p219
    %p221 = pneg %p220
    // Predicated region
    $region9: #{spatial_ocr_pallas.2} parent=5 // pred_check
      _
    $region10: #{spatial_ocr_pallas.2} parent=5 // pred_check_branch
      %223 = sbr.rel (%p220) target = $region12
    $region11: #{spatial_ocr_pallas.2} parent=5 // pred_region
      %s224 = ssub.s32 %s13, 1
      // Predicated region
      $region13: #{spatial_ocr_pallas.2} parent=11 // pred_check
        %p225 = pneg %p100
      $region14: #{spatial_ocr_pallas.2} parent=11 // pred_check_branch
        %227 = sbr.rel (%p225) target = $region16
      $region15: #{spatial_ocr_pallas.2} parent=11 // pred_region
        _
      $region16: #{spatial_ocr_pallas.2} parent=11 // pred_fallthru
        _
      // Predicated region
      $region17: #{spatial_ocr_pallas.2} parent=11 // pred_check
        %p228 = pneg %p121
      $region18: #{spatial_ocr_pallas.2} parent=11 // pred_check_branch
        %230 = sbr.rel (%p228) target = $region20
      $region19: #{spatial_ocr_pallas.2} parent=11 // pred_region
        _
      $region20: #{spatial_ocr_pallas.2} parent=11 // pred_fallthru
        _
      // Predicated region
      $region21: #{spatial_ocr_pallas.2} parent=11 // pred_check
        %p231 = pneg %p142
      $region22: #{spatial_ocr_pallas.2} parent=11 // pred_check_branch
        %233 = sbr.rel (%p231) target = $region24
      $region23: #{spatial_ocr_pallas.2} parent=11 // pred_region
        _
      $region24: #{spatial_ocr_pallas.2} parent=11 // pred_fallthru
        _
      // Predicated region
      $region25: #{spatial_ocr_pallas.2} parent=11 // pred_check
        %p234 = pneg %p163
      $region26: #{spatial_ocr_pallas.2} parent=11 // pred_check_branch
        %236 = sbr.rel (%p234) target = $region28
      $region27: #{spatial_ocr_pallas.2} parent=11 // pred_region
        _
      $region28: #{spatial_ocr_pallas.2} parent=11 // pred_fallthru
        _
      // Predicated region
      $region29: #{spatial_ocr_pallas.2} parent=11 // pred_check
        %p237 = pneg %p184
      $region30: #{spatial_ocr_pallas.2} parent=11 // pred_check_branch
        %239 = sbr.rel (%p237) target = $region32
      $region31: #{spatial_ocr_pallas.2} parent=11 // pred_region
        _
      $region32: #{spatial_ocr_pallas.2} parent=11 // pred_fallthru
        _
    $region12: #{spatial_ocr_pallas.2} parent=5 // pred_fallthru
      _
    %p240 = scmp.lt.s32.totalorder %s13, 4
    // Predicated region
    $region33: #{spatial_ocr_pallas.2} parent=5 // pred_check
      %p241 = pneg %p240
    $region34: #{spatial_ocr_pallas.2} parent=5 // pred_check_branch
      %243 = sbr.rel (%p241) target = $region36
    $region35: #{spatial_ocr_pallas.2} parent=5 // pred_region
      // Predicated region
      $region37: #{spatial_ocr_pallas.2} parent=35 // pred_check
        %p244 = pneg %p47
      $region38: #{spatial_ocr_pallas.2} parent=35 // pred_check_branch
        %246 = sbr.rel (%p244) target = $region40
      $region39: #{spatial_ocr_pallas.2} parent=35 // pred_region
        %s247 = smul.u32 64, %s21
        %p248 = scmp.lt.s32.totalorder %s20, 1
        %s249 = scalar_select %p248, %s20, 1
        %p250 = scmp.lt.s32.totalorder %s247, 127
        %s251 = scalar_select %p250, %s247, 127
        %s252 = smul.addr %s249, 128
        %s253 = sadd.s32 %s251, %s252
        %s254 = smul.addr %s253, 4
        %s255 = scalar_lea.vmem %s0, %s254
        %s256 = smul.u32 64, %s21
      $region40: #{spatial_ocr_pallas.2} parent=35 // pred_fallthru
        _
      // Predicated region
      $region41: #{spatial_ocr_pallas.2} parent=35 // pred_check
        %p257 = pneg %p73
      $region42: #{spatial_ocr_pallas.2} parent=35 // pred_check_branch
        %259 = sbr.rel (%p257) target = $region44
      $region43: #{spatial_ocr_pallas.2} parent=35 // pred_region
        %p260 = scmp.lt.s32.totalorder %s20, 1
        %s261 = scalar_select %p260, %s20, 1
        %s262 = smul.addr %s261, 4
        %s263 = scalar_lea.vmem %s1, %s262
      $region44: #{spatial_ocr_pallas.2} parent=35 // pred_fallthru
        _
    $region36: #{spatial_ocr_pallas.2} parent=5 // pred_fallthru
      _
    %p264 = scmp.le.s32.totalorder 1, %s13
    %p265 = scmp.lt.s32.totalorder %s13, 5
    %p266 = pnand %p264, %p265
    %p267 = pneg %p266
    // Predicated region
    $region45: #{spatial_ocr_pallas.2} parent=5 // pred_check
      _
    $region46: #{spatial_ocr_pallas.2} parent=5 // pred_check_branch
      %269 = sbr.rel (%p266) target = $region48
    $region47: #{spatial_ocr_pallas.2} parent=5 // pred_region
      %s270 = ssub.s32 %s13, 1
      %s271 = smul.u32 64, %s23
      %p272 = scmp.lt.s32.totalorder %s22, 1
      %s273 = scalar_select %p272, %s22, 1
      %p274 = scmp.lt.s32.totalorder %s271, 127
      %s275 = scalar_select %p274, %s271, 127
      %s276 = smul.addr %s273, 128
      %s277 = sadd.s32 %s275, %s276
      %s278 = smul.addr %s277, 4
      %s279 = scalar_lea.vmem %s0, %s278
      %p280 = pneg %p53
      %p281 = pneg %p50
      %p282 = scmp.lt.s32.totalorder %s22, 1
      %s283 = scalar_select %p282, %s22, 1
      %s284 = smul.addr %s283, 4
      %s285 = scalar_lea.vmem %s1, %s284
      %p286 = pneg %p79
      %p287 = pneg %p76
      %p288 = pneg %p100
      %p289 = pneg %p97
      %p290 = pneg %p121
      %p291 = pneg %p118
      %p292 = pneg %p142
      %p293 = pneg %p139
      %p294 = pneg %p163
      %p295 = pneg %p160
      %p296 = pneg %p184
      %p297 = pneg %p181
      %p298 = pneg %p210
      %p299 = pneg %p207
      %p300 = scmp.lt.s32.totalorder %s22, 1
      %s301 = scalar_select %p300, %s22, 1
      %s302 = smul.addr %s301, 2
      %s303 = scalar_lea.vmem %s7, %s302
      %s304 = smul.u32 64, %s23
      %p305 = scmp.lt.s32.totalorder %s22, 1
      %s306 = scalar_select %p305, %s22, 1
      %p307 = scmp.lt.s32.totalorder %s304, 127
      %s308 = scalar_select %p307, %s304, 127
      %s309 = smul.addr %s306, 128
      %s310 = sadd.s32 %s308, %s309
      %s311 = smul.addr %s310, 4
      %s312 = scalar_lea.vmem %s0, %s311
      %s313 = smul.u32 64, %s23
      %p314 = scmp.lt.s32.totalorder %s22, 1
      %s315 = scalar_select %p314, %s22, 1
      %s316 = smul.addr %s315, 4
      %s317 = scalar_lea.vmem %s1, %s316
      %p318 = scmp.lt.s32.totalorder %s22, 1
      %s319 = scalar_select %p318, %s22, 1
      %s320 = smul.addr %s319, 2
      %s321 = scalar_lea.vmem %s7, %s320
      %p323 = scmp.eq.s32.totalorder %s23, 0
      // Predicated region
      $region49: #{spatial_ocr_pallas.2} parent=47 // pred_check
        %p324 = pneg %p323
      $region50: #{spatial_ocr_pallas.2} parent=47 // pred_check_branch
        %326 = sbr.rel (%p324) target = $region52
      $region51: #{spatial_ocr_pallas.2} parent=47 // pred_region
        %vm327 = vcmask 57344
        %328 = vst.msk [vmem:[#allocation2] sm:$0x1] %vm327, -1e+30
        %329 = vst.msk [vmem:[#allocation3] sm:$0x1] %vm327, 0.0
      $region52: #{spatial_ocr_pallas.2} parent=47 // pred_fallthru
        _
      %v330 = vld [vmem:[%s312] sm:$0xf]
      %v331 = vld [vmem:[%s312 + $0x4] sm:$0xf]
      %v332 = vld [vmem:[%s312 + $0x8] sm:$0xf]
      %v333 = vld [vmem:[%s312 + $0xc] sm:$0xf]
      %v334 = vld [vmem:[%s312 + $0x10] sm:$0xf]
      %v335 = vld [vmem:[%s312 + $0x14] sm:$0xf]
      %v336 = vld [vmem:[%s312 + $0x18] sm:$0xf]
      %v337 = vld [vmem:[%s312 + $0x1c] sm:$0xf]
      %v338 = vld [vmem:[%s312 + $0x20] sm:$0xf]
      %v339 = vld [vmem:[%s312 + $0x24] sm:$0xf]
      %v340 = vld [vmem:[%s312 + $0x28] sm:$0xf]
      %v341 = vld [vmem:[%s312 + $0x2c] sm:$0xf]
      %v342 = vld [vmem:[%s312 + $0x30] sm:$0xf]
      %v343 = vld [vmem:[%s312 + $0x34] sm:$0xf]
      %v344 = vld [vmem:[%s312 + $0x38] sm:$0xf]
      %v345 = vld [vmem:[%s312 + $0x3c] sm:$0xf]
      %v346 = vld [vmem:[%s312 + $0x40] sm:$0xf]
      %v347 = vld [vmem:[%s312 + $0x44] sm:$0xf]
      %v348 = vld [vmem:[%s312 + $0x48] sm:$0xf]
      %v349 = vld [vmem:[%s312 + $0x4c] sm:$0xf]
      %v350 = vld [vmem:[%s312 + $0x50] sm:$0xf]
      %v351 = vld [vmem:[%s312 + $0x54] sm:$0xf]
      %v352 = vld [vmem:[%s312 + $0x58] sm:$0xf]
      %v353 = vld [vmem:[%s312 + $0x5c] sm:$0xf]
      %v354 = vld [vmem:[%s312 + $0x60] sm:$0xf]
      %v355 = vld [vmem:[%s312 + $0x64] sm:$0xf]
      %v356 = vld [vmem:[%s312 + $0x68] sm:$0xf]
      %v357 = vld [vmem:[%s312 + $0x6c] sm:$0xf]
      %v358 = vld [vmem:[%s312 + $0x70] sm:$0xf]
      %v359 = vld [vmem:[%s312 + $0x74] sm:$0xf]
      %v360 = vld [vmem:[%s312 + $0x78] sm:$0xf]
      %v361 = vld [vmem:[%s312 + $0x7c] sm:$0xf]
      %v362 = vld [vmem:[%s312 + $0x80] sm:$0xf]
      %v363 = vld [vmem:[%s312 + $0x84] sm:$0xf]
      %v364 = vld [vmem:[%s312 + $0x88] sm:$0xf]
      %v365 = vld [vmem:[%s312 + $0x8c] sm:$0xf]
      %v366 = vld [vmem:[%s312 + $0x90] sm:$0xf]
      %v367 = vld [vmem:[%s312 + $0x94] sm:$0xf]
      %v368 = vld [vmem:[%s312 + $0x98] sm:$0xf]
      %v369 = vld [vmem:[%s312 + $0x9c] sm:$0xf]
      %v370 = vld [vmem:[%s312 + $0xa0] sm:$0xf]
      %v371 = vld [vmem:[%s312 + $0xa4] sm:$0xf]
      %v372 = vld [vmem:[%s312 + $0xa8] sm:$0xf]
      %v373 = vld [vmem:[%s312 + $0xac] sm:$0xf]
      %v374 = vld [vmem:[%s312 + $0xb0] sm:$0xf]
      %v375 = vld [vmem:[%s312 + $0xb4] sm:$0xf]
      %v376 = vld [vmem:[%s312 + $0xb8] sm:$0xf]
      %v377 = vld [vmem:[%s312 + $0xbc] sm:$0xf]
      %v378 = vld [vmem:[%s312 + $0xc0] sm:$0xf]
      %v379 = vld [vmem:[%s312 + $0xc4] sm:$0xf]
      %v380 = vld [vmem:[%s312 + $0xc8] sm:$0xf]
      %v381 = vld [vmem:[%s312 + $0xcc] sm:$0xf]
      %v382 = vld [vmem:[%s312 + $0xd0] sm:$0xf]
      %v383 = vld [vmem:[%s312 + $0xd4] sm:$0xf]
      %v384 = vld [vmem:[%s312 + $0xd8] sm:$0xf]
      %v385 = vld [vmem:[%s312 + $0xdc] sm:$0xf]
      %v386 = vld [vmem:[%s312 + $0xe0] sm:$0xf]
      %v387 = vld [vmem:[%s312 + $0xe4] sm:$0xf]
      %v388 = vld [vmem:[%s312 + $0xe8] sm:$0xf]
      %v389 = vld [vmem:[%s312 + $0xec] sm:$0xf]
      %v390 = vld [vmem:[%s312 + $0xf0] sm:$0xf]
      %v391 = vld [vmem:[%s312 + $0xf4] sm:$0xf]
      %v392 = vld [vmem:[%s312 + $0xf8] sm:$0xf]
      %v393 = vld [vmem:[%s312 + $0xfc] sm:$0xf]
      %v394 = vld [vmem:[%s317] sm:$0xf]
      %v395 = vld [vmem:[%s2] sm:$0xf]
      %v396 = vld [vmem:[%s2 + $0x4] sm:$0xf]
      %v397 = vld [vmem:[%s2 + $0x8] sm:$0xf]
      %v398 = vld [vmem:[%s2 + $0xc] sm:$0xf]
      %v399 = vld [vmem:[%s2 + $0x10] sm:$0xf]
      %v400 = vld [vmem:[%s2 + $0x14] sm:$0xf]
      %v401 = vld [vmem:[%s2 + $0x18] sm:$0xf]
      %v402 = vld [vmem:[%s2 + $0x1c] sm:$0xf]
      %v403 = vld [vmem:[%s2 + $0x20] sm:$0xf]
      %v404 = vld [vmem:[%s2 + $0x24] sm:$0xf]
      %v405 = vld [vmem:[%s2 + $0x28] sm:$0xf]
      %v406 = vld [vmem:[%s2 + $0x2c] sm:$0xf]
      %v407 = vld [vmem:[%s2 + $0x30] sm:$0xf]
      %v408 = vld [vmem:[%s2 + $0x34] sm:$0xf]
      %v409 = vld [vmem:[%s2 + $0x38] sm:$0xf]
      %v410 = vld [vmem:[%s2 + $0x3c] sm:$0xf]
      %v411 = vld [vmem:[%s3] sm:$0x1]
      %v413 = vperm.slane %v411, 0
      %v479 = vunpack.c.l.b16 %v330
      %v480 = vunpack.c.l.b16 %v331
      %v481 = vunpack.c.l.b16 %v332
      %v482 = vunpack.c.l.b16 %v333
      %v483 = vunpack.c.l.b16 %v334
      %v484 = vunpack.c.l.b16 %v335
      %v485 = vunpack.c.l.b16 %v336
      %v486 = vunpack.c.l.b16 %v337
      %v487 = vunpack.c.l.b16 %v338
      %v488 = vunpack.c.l.b16 %v339
      %v489 = vunpack.c.l.b16 %v340
      %v490 = vunpack.c.l.b16 %v341
      %v491 = vunpack.c.l.b16 %v342
      %v492 = vunpack.c.l.b16 %v343
      %v493 = vunpack.c.l.b16 %v344
      %v494 = vunpack.c.l.b16 %v345
      %v495 = vunpack.c.l.b16 %v346
      %v496 = vunpack.c.l.b16 %v347
      %v497 = vunpack.c.l.b16 %v348
      %v498 = vunpack.c.l.b16 %v349
      %v499 = vunpack.c.l.b16 %v350
      %v500 = vunpack.c.l.b16 %v351
      %v501 = vunpack.c.l.b16 %v352
      %v502 = vunpack.c.l.b16 %v353
      %v503 = vunpack.c.l.b16 %v354
      %v504 = vunpack.c.l.b16 %v355
      %v505 = vunpack.c.l.b16 %v356
      %v506 = vunpack.c.l.b16 %v357
      %v507 = vunpack.c.l.b16 %v358
      %v508 = vunpack.c.l.b16 %v359
      %v509 = vunpack.c.l.b16 %v360
      %v510 = vunpack.c.l.b16 %v361
      %v511 = vunpack.c.l.b16 %v362
      %v512 = vunpack.c.l.b16 %v363
      %v513 = vunpack.c.l.b16 %v364
      %v514 = vunpack.c.l.b16 %v365
      %v515 = vunpack.c.l.b16 %v366
      %v516 = vunpack.c.l.b16 %v367
      %v517 = vunpack.c.l.b16 %v368
      %v518 = vunpack.c.l.b16 %v369
      %v519 = vunpack.c.l.b16 %v370
      %v520 = vunpack.c.l.b16 %v371
      %v521 = vunpack.c.l.b16 %v372
      %v522 = vunpack.c.l.b16 %v373
      %v523 = vunpack.c.l.b16 %v374
      %v524 = vunpack.c.l.b16 %v375
      %v525 = vunpack.c.l.b16 %v376
      %v526 = vunpack.c.l.b16 %v377
      %v527 = vunpack.c.l.b16 %v378
      %v528 = vunpack.c.l.b16 %v379
      %v529 = vunpack.c.l.b16 %v380
      %v530 = vunpack.c.l.b16 %v381
      %v531 = vunpack.c.l.b16 %v382
      %v532 = vunpack.c.l.b16 %v383
      %v533 = vunpack.c.l.b16 %v384
      %v534 = vunpack.c.l.b16 %v385
      %v535 = vunpack.c.l.b16 %v386
      %v536 = vunpack.c.l.b16 %v387
      %v537 = vunpack.c.l.b16 %v388
      %v538 = vunpack.c.l.b16 %v389
      %v539 = vunpack.c.l.b16 %v390
      %v540 = vunpack.c.l.b16 %v391
      %v541 = vunpack.c.l.b16 %v392
      %v542 = vunpack.c.l.b16 %v393
      %v543 = vpack.c.b16 %v480, %v479
      %v544 = vpack.c.b16 %v482, %v481
      %v545 = vpack.c.b16 %v484, %v483
      %v546 = vpack.c.b16 %v486, %v485
      %v547 = vpack.c.b16 %v488, %v487
      %v548 = vpack.c.b16 %v490, %v489
      %v549 = vpack.c.b16 %v492, %v491
      %v550 = vpack.c.b16 %v494, %v493
      %v551 = vpack.c.b16 %v496, %v495
      %v552 = vpack.c.b16 %v498, %v497
      %v553 = vpack.c.b16 %v500, %v499
      %v554 = vpack.c.b16 %v502, %v501
      %v555 = vpack.c.b16 %v504, %v503
      %v556 = vpack.c.b16 %v506, %v505
      %v557 = vpack.c.b16 %v508, %v507
      %v558 = vpack.c.b16 %v510, %v509
      %v559 = vpack.c.b16 %v512, %v511
      %v560 = vpack.c.b16 %v514, %v513
      %v561 = vpack.c.b16 %v516, %v515
      %v562 = vpack.c.b16 %v518, %v517
      %v563 = vpack.c.b16 %v520, %v519
      %v564 = vpack.c.b16 %v522, %v521
      %v565 = vpack.c.b16 %v524, %v523
      %v566 = vpack.c.b16 %v526, %v525
      %v567 = vpack.c.b16 %v528, %v527
      %v568 = vpack.c.b16 %v530, %v529
      %v569 = vpack.c.b16 %v532, %v531
      %v570 = vpack.c.b16 %v534, %v533
      %v571 = vpack.c.b16 %v536, %v535
      %v572 = vpack.c.b16 %v538, %v537
      %v573 = vpack.c.b16 %v540, %v539
      %v574 = vpack.c.b16 %v542, %v541
      %v623 = vunpack.c.l.b16 %v395
      %v624 = vunpack.c.l.b16 %v396
      %v625 = vunpack.c.l.b16 %v397
      %v626 = vunpack.c.l.b16 %v398
      %v627 = vunpack.c.l.b16 %v399
      %v628 = vunpack.c.l.b16 %v400
      %v629 = vunpack.c.l.b16 %v401
      %v630 = vunpack.c.l.b16 %v402
      %v631 = vunpack.c.l.b16 %v403
      %v632 = vunpack.c.l.b16 %v404
      %v633 = vunpack.c.l.b16 %v405
      %v634 = vunpack.c.l.b16 %v406
      %v635 = vunpack.c.l.b16 %v407
      %v636 = vunpack.c.l.b16 %v408
      %v637 = vunpack.c.l.b16 %v409
      %v638 = vunpack.c.l.b16 %v410
      %v639 = vpack.c.b16 %v624, %v623
      %v640 = vpack.c.b16 %v626, %v625
      %v641 = vpack.c.b16 %v628, %v627
      %v642 = vpack.c.b16 %v630, %v629
      %v643 = vpack.c.b16 %v632, %v631
      %v644 = vpack.c.b16 %v634, %v633
      %v645 = vpack.c.b16 %v636, %v635
      %v646 = vpack.c.b16 %v638, %v637
      %655 = vmatpush.bf16.msra.mxu0 %v646
      %656 = vmatpush.bf16.msra.mxu0 %v645
      %657 = vmatpush.bf16.msra.mxu0 %v644
      %658 = vmatpush.bf16.msra.mxu0 %v643
      %659 = vmatpush.bf16.msra.mxu0 %v642
      %660 = vmatpush.bf16.msra.mxu0 %v641
      %661 = vmatpush.bf16.msra.mxu0 %v640
      %662 = vmatpush.bf16.msra.mxu0 %v639
      %663 = vmatmul.bf16.gmra.mxu0 %v543
      %v664 = vpop.f32.mrf.mxu0
      %v665 = vadd.f32 %v413, %v664
      %v666 = vpop.f32.mrf.mxu0
      %v667 = vadd.f32 %v413, %v666
      %668 = vmatmul.bf16.gmra.mxu0 %v544
      %v669 = vpop.f32.mrf.mxu0
      %v670 = vadd.f32 %v413, %v669
      %v671 = vpop.f32.mrf.mxu0
      %v672 = vadd.f32 %v413, %v671
      %673 = vmatmul.bf16.gmra.mxu0 %v545
      %v674 = vpop.f32.mrf.mxu0
      %v675 = vadd.f32 %v413, %v674
      %v676 = vpop.f32.mrf.mxu0
      %v677 = vadd.f32 %v413, %v676
      %678 = vmatmul.bf16.gmra.mxu0 %v546
      %v679 = vpop.f32.mrf.mxu0
      %v680 = vadd.f32 %v413, %v679
      %v681 = vpop.f32.mrf.mxu0
      %v682 = vadd.f32 %v413, %v681
      %683 = vmatmul.bf16.gmra.mxu0 %v547
      %v684 = vpop.f32.mrf.mxu0
      %v685 = vadd.f32 %v413, %v684
      %v686 = vpop.f32.mrf.mxu0
      %v687 = vadd.f32 %v413, %v686
      %688 = vmatmul.bf16.gmra.mxu0 %v548
      %v689 = vpop.f32.mrf.mxu0
      %v690 = vadd.f32 %v413, %v689
      %v691 = vpop.f32.mrf.mxu0
      %v692 = vadd.f32 %v413, %v691
      %693 = vmatmul.bf16.gmra.mxu0 %v549
      %v694 = vpop.f32.mrf.mxu0
      %v695 = vadd.f32 %v413, %v694
      %v696 = vpop.f32.mrf.mxu0
      %v697 = vadd.f32 %v413, %v696
      %698 = vmatmul.bf16.gmra.mxu0 %v550
      %v699 = vpop.f32.mrf.mxu0
      %v700 = vadd.f32 %v413, %v699
      %v701 = vpop.f32.mrf.mxu0
      %v702 = vadd.f32 %v413, %v701
      %703 = vmatmul.bf16.gmra.mxu0 %v551
      %v704 = vpop.f32.mrf.mxu0
      %v705 = vadd.f32 %v413, %v704
      %v706 = vpop.f32.mrf.mxu0
      %v707 = vadd.f32 %v413, %v706
      %708 = vmatmul.bf16.gmra.mxu0 %v552
      %v709 = vpop.f32.mrf.mxu0
      %v710 = vadd.f32 %v413, %v709
      %v711 = vpop.f32.mrf.mxu0
      %v712 = vadd.f32 %v413, %v711
      %713 = vmatmul.bf16.gmra.mxu0 %v553
      %v714 = vpop.f32.mrf.mxu0
      %v715 = vadd.f32 %v413, %v714
      %v716 = vpop.f32.mrf.mxu0
      %v717 = vadd.f32 %v413, %v716
      %718 = vmatmul.bf16.gmra.mxu0 %v554
      %v719 = vpop.f32.mrf.mxu0
      %v720 = vadd.f32 %v413, %v719
      %v721 = vpop.f32.mrf.mxu0
      %v722 = vadd.f32 %v413, %v721
      %723 = vmatmul.bf16.gmra.mxu0 %v555
      %v724 = vpop.f32.mrf.mxu0
      %v725 = vadd.f32 %v413, %v724
      %v726 = vpop.f32.mrf.mxu0
      %v727 = vadd.f32 %v413, %v726
      %728 = vmatmul.bf16.gmra.mxu0 %v556
      %v729 = vpop.f32.mrf.mxu0
      %v730 = vadd.f32 %v413, %v729
      %v731 = vpop.f32.mrf.mxu0
      %v732 = vadd.f32 %v413, %v731
      %733 = vmatmul.bf16.gmra.mxu0 %v557
      %v734 = vpop.f32.mrf.mxu0
      %v735 = vadd.f32 %v413, %v734
      %v736 = vpop.f32.mrf.mxu0
      %v737 = vadd.f32 %v413, %v736
      %738 = vmatmul.bf16.gmra.mxu0 %v558
      %v739 = vpop.f32.mrf.mxu0
      %v740 = vadd.f32 %v413, %v739
      %v741 = vpop.f32.mrf.mxu0
      %v742 = vadd.f32 %v413, %v741
      %743 = vmatmul.bf16.gmra.mxu0 %v559
      %v744 = vpop.f32.mrf.mxu0
      %v745 = vadd.f32 %v413, %v744
      %v746 = vpop.f32.mrf.mxu0
      %v747 = vadd.f32 %v413, %v746
      %748 = vmatmul.bf16.gmra.mxu0 %v560
      %v749 = vpop.f32.mrf.mxu0
      %v750 = vadd.f32 %v413, %v749
      %v751 = vpop.f32.mrf.mxu0
      %v752 = vadd.f32 %v413, %v751
      %753 = vmatmul.bf16.gmra.mxu0 %v561
      %v754 = vpop.f32.mrf.mxu0
      %v755 = vadd.f32 %v413, %v754
      %v756 = vpop.f32.mrf.mxu0
      %v757 = vadd.f32 %v413, %v756
      %758 = vmatmul.bf16.gmra.mxu0 %v562
      %v759 = vpop.f32.mrf.mxu0
      %v760 = vadd.f32 %v413, %v759
      %v761 = vpop.f32.mrf.mxu0
      %v762 = vadd.f32 %v413, %v761
      %763 = vmatmul.bf16.gmra.mxu0 %v563
      %v764 = vpop.f32.mrf.mxu0
      %v765 = vadd.f32 %v413, %v764
      %v766 = vpop.f32.mrf.mxu0
      %v767 = vadd.f32 %v413, %v766
      %768 = vmatmul.bf16.gmra.mxu0 %v564
      %v769 = vpop.f32.mrf.mxu0
      %v770 = vadd.f32 %v413, %v769
      %v771 = vpop.f32.mrf.mxu0
      %v772 = vadd.f32 %v413, %v771
      %773 = vmatmul.bf16.gmra.mxu0 %v565
      %v774 = vpop.f32.mrf.mxu0
      %v775 = vadd.f32 %v413, %v774
      %v776 = vpop.f32.mrf.mxu0
      %v777 = vadd.f32 %v413, %v776
      %778 = vmatmul.bf16.gmra.mxu0 %v566
      %v779 = vpop.f32.mrf.mxu0
      %v780 = vadd.f32 %v413, %v779
      %v781 = vpop.f32.mrf.mxu0
      %v782 = vadd.f32 %v413, %v781
      %783 = vmatmul.bf16.gmra.mxu0 %v567
      %v784 = vpop.f32.mrf.mxu0
      %v785 = vadd.f32 %v413, %v784
      %v786 = vpop.f32.mrf.mxu0
      %v787 = vadd.f32 %v413, %v786
      %788 = vmatmul.bf16.gmra.mxu0 %v568
      %v789 = vpop.f32.mrf.mxu0
      %v790 = vadd.f32 %v413, %v789
      %v791 = vpop.f32.mrf.mxu0
      %v792 = vadd.f32 %v413, %v791
      %793 = vmatmul.bf16.gmra.mxu0 %v569
      %v794 = vpop.f32.mrf.mxu0
      %v795 = vadd.f32 %v413, %v794
      %v796 = vpop.f32.mrf.mxu0
      %v797 = vadd.f32 %v413, %v796
      %798 = vmatmul.bf16.gmra.mxu0 %v570
      %v799 = vpop.f32.mrf.mxu0
      %v800 = vadd.f32 %v413, %v799
      %v801 = vpop.f32.mrf.mxu0
      %v802 = vadd.f32 %v413, %v801
      %803 = vmatmul.bf16.gmra.mxu0 %v571
      %v804 = vpop.f32.mrf.mxu0
      %v805 = vadd.f32 %v413, %v804
      %v806 = vpop.f32.mrf.mxu0
      %v807 = vadd.f32 %v413, %v806
      %808 = vmatmul.bf16.gmra.mxu0 %v572
      %v809 = vpop.f32.mrf.mxu0
      %v810 = vadd.f32 %v413, %v809
      %v811 = vpop.f32.mrf.mxu0
      %v812 = vadd.f32 %v413, %v811
      %813 = vmatmul.bf16.gmra.mxu0 %v573
      %v814 = vpop.f32.mrf.mxu0
      %v815 = vadd.f32 %v413, %v814
      %v816 = vpop.f32.mrf.mxu0
      %v817 = vadd.f32 %v413, %v816
      %818 = vmatmul.bf16.gmra.mxu0 %v574
      %v819 = vpop.f32.mrf.mxu0
      %v820 = vadd.f32 %v413, %v819
      %v821 = vpop.f32.mrf.mxu0
      %v822 = vadd.f32 %v413, %v821
      %823 = vdwg.mxu0
      %v824 = vmax.f32 %v665, 0.0
      %v825 = vmax.f32 %v667, 0.0
      %v826 = vmax.f32 %v670, 0.0
      %v827 = vmax.f32 %v672, 0.0
      %v828 = vmax.f32 %v675, 0.0
      %v829 = vmax.f32 %v677, 0.0
      %v830 = vmax.f32 %v680, 0.0
      %v831 = vmax.f32 %v682, 0.0
      %v832 = vmax.f32 %v685, 0.0
      %v833 = vmax.f32 %v687, 0.0
      %v834 = vmax.f32 %v690, 0.0
      %v835 = vmax.f32 %v692, 0.0
      %v836 = vmax.f32 %v695, 0.0
      %v837 = vmax.f32 %v697, 0.0
      %v838 = vmax.f32 %v700, 0.0
      %v839 = vmax.f32 %v702, 0.0
      %v840 = vmax.f32 %v705, 0.0
      %v841 = vmax.f32 %v707, 0.0
      %v842 = vmax.f32 %v710, 0.0
      %v843 = vmax.f32 %v712, 0.0
      %v844 = vmax.f32 %v715, 0.0
      %v845 = vmax.f32 %v717, 0.0
      %v846 = vmax.f32 %v720, 0.0
      %v847 = vmax.f32 %v722, 0.0
      %v848 = vmax.f32 %v725, 0.0
      %v849 = vmax.f32 %v727, 0.0
      %v850 = vmax.f32 %v730, 0.0
      %v851 = vmax.f32 %v732, 0.0
      %v852 = vmax.f32 %v735, 0.0
      %v853 = vmax.f32 %v737, 0.0
      %v854 = vmax.f32 %v740, 0.0
      %v855 = vmax.f32 %v742, 0.0
      %v856 = vmax.f32 %v745, 0.0
      %v857 = vmax.f32 %v747, 0.0
      %v858 = vmax.f32 %v750, 0.0
      %v859 = vmax.f32 %v752, 0.0
      %v860 = vmax.f32 %v755, 0.0
      %v861 = vmax.f32 %v757, 0.0
      %v862 = vmax.f32 %v760, 0.0
      %v863 = vmax.f32 %v762, 0.0
      %v864 = vmax.f32 %v765, 0.0
      %v865 = vmax.f32 %v767, 0.0
      %v866 = vmax.f32 %v770, 0.0
      %v867 = vmax.f32 %v772, 0.0
      %v868 = vmax.f32 %v775, 0.0
      %v869 = vmax.f32 %v777, 0.0
      %v870 = vmax.f32 %v780, 0.0
      %v871 = vmax.f32 %v782, 0.0
      %v872 = vmax.f32 %v785, 0.0
      %v873 = vmax.f32 %v787, 0.0
      %v874 = vmax.f32 %v790, 0.0
      %v875 = vmax.f32 %v792, 0.0
      %v876 = vmax.f32 %v795, 0.0
      %v877 = vmax.f32 %v797, 0.0
      %v878 = vmax.f32 %v800, 0.0
      %v879 = vmax.f32 %v802, 0.0
      %v880 = vmax.f32 %v805, 0.0
      %v881 = vmax.f32 %v807, 0.0
      %v882 = vmax.f32 %v810, 0.0
      %v883 = vmax.f32 %v812, 0.0
      %v884 = vmax.f32 %v815, 0.0
      %v885 = vmax.f32 %v817, 0.0
      %v886 = vmax.f32 %v820, 0.0
      %v887 = vmax.f32 %v822, 0.0
      %v888 = vpack.c.bf16 %v825, %v824
      %v889 = vpack.c.bf16 %v827, %v826
      %v890 = vpack.c.bf16 %v829, %v828
      %v891 = vpack.c.bf16 %v831, %v830
      %v892 = vpack.c.bf16 %v833, %v832
      %v893 = vpack.c.bf16 %v835, %v834
      %v894 = vpack.c.bf16 %v837, %v836
      %v895 = vpack.c.bf16 %v839, %v838
      %v896 = vpack.c.bf16 %v841, %v840
      %v897 = vpack.c.bf16 %v843, %v842
      %v898 = vpack.c.bf16 %v845, %v844
      %v899 = vpack.c.bf16 %v847, %v846
      %v900 = vpack.c.bf16 %v849, %v848
      %v901 = vpack.c.bf16 %v851, %v850
      %v902 = vpack.c.bf16 %v853, %v852
      %v903 = vpack.c.bf16 %v855, %v854
      %v904 = vpack.c.bf16 %v857, %v856
      %v905 = vpack.c.bf16 %v859, %v858
      %v906 = vpack.c.bf16 %v861, %v860
      %v907 = vpack.c.bf16 %v863, %v862
      %v908 = vpack.c.bf16 %v865, %v864
      %v909 = vpack.c.bf16 %v867, %v866
      %v910 = vpack.c.bf16 %v869, %v868
      %v911 = vpack.c.bf16 %v871, %v870
      %v912 = vpack.c.bf16 %v873, %v872
      %v913 = vpack.c.bf16 %v875, %v874
      %v914 = vpack.c.bf16 %v877, %v876
      %v915 = vpack.c.bf16 %v879, %v878
      %v916 = vpack.c.bf16 %v881, %v880
      %v917 = vpack.c.bf16 %v883, %v882
      %v918 = vpack.c.bf16 %v885, %v884
      %v919 = vpack.c.bf16 %v887, %v886
      %v920 = vld [vmem:[%s4] sm:$0xf]
      %v921 = vld [vmem:[%s4 + $0x4] sm:$0xf]
      %v922 = vld [vmem:[%s4 + $0x8] sm:$0xf]
      %v923 = vld [vmem:[%s4 + $0xc] sm:$0xf]
      %v924 = vld [vmem:[%s4 + $0x10] sm:$0xf]
      %v925 = vld [vmem:[%s4 + $0x14] sm:$0xf]
      %v926 = vld [vmem:[%s4 + $0x18] sm:$0xf]
      %v927 = vld [vmem:[%s4 + $0x1c] sm:$0xf]
      %v928 = vld [vmem:[%s4 + $0x20] sm:$0xf]
      %v929 = vld [vmem:[%s4 + $0x24] sm:$0xf]
      %v930 = vld [vmem:[%s4 + $0x28] sm:$0xf]
      %v931 = vld [vmem:[%s4 + $0x2c] sm:$0xf]
      %v932 = vld [vmem:[%s4 + $0x30] sm:$0xf]
      %v933 = vld [vmem:[%s4 + $0x34] sm:$0xf]
      %v934 = vld [vmem:[%s4 + $0x38] sm:$0xf]
      %v935 = vld [vmem:[%s4 + $0x3c] sm:$0xf]
      %v936 = vld [vmem:[%s5] sm:$0x1]
      %v938 = vperm.slane %v936, 0
      %v956 = vunpack.c.l.b16 %v920
      %v957 = vunpack.c.l.b16 %v921
      %v958 = vunpack.c.l.b16 %v922
      %v959 = vunpack.c.l.b16 %v923
      %v960 = vunpack.c.l.b16 %v924
      %v961 = vunpack.c.l.b16 %v925
      %v962 = vunpack.c.l.b16 %v926
      %v963 = vunpack.c.l.b16 %v927
      %v964 = vunpack.c.l.b16 %v928
      %v965 = vunpack.c.l.b16 %v929
      %v966 = vunpack.c.l.b16 %v930
      %v967 = vunpack.c.l.b16 %v931
      %v968 = vunpack.c.l.b16 %v932
      %v969 = vunpack.c.l.b16 %v933
      %v970 = vunpack.c.l.b16 %v934
      %v971 = vunpack.c.l.b16 %v935
      %v972 = vpack.c.b16 %v957, %v956
      %v973 = vpack.c.b16 %v959, %v958
      %v974 = vpack.c.b16 %v961, %v960
      %v975 = vpack.c.b16 %v963, %v962
      %v976 = vpack.c.b16 %v965, %v964
      %v977 = vpack.c.b16 %v967, %v966
      %v978 = vpack.c.b16 %v969, %v968
      %v979 = vpack.c.b16 %v971, %v970
      %988 = vmatpush.bf16.msra.mxu0 %v979
      %989 = vmatpush.bf16.msra.mxu0 %v978
      %990 = vmatpush.bf16.msra.mxu0 %v977
      %991 = vmatpush.bf16.msra.mxu0 %v976
      %992 = vmatpush.bf16.msra.mxu0 %v975
      %993 = vmatpush.bf16.msra.mxu0 %v974
      %994 = vmatpush.bf16.msra.mxu0 %v973
      %995 = vmatpush.bf16.msra.mxu0 %v972
      %996 = vmatmul.bf16.gmra.mxu0 %v888
      %v997 = vpop.f32.mrf.mxu0
      %v998 = vadd.f32 %v938, %v997
      %v999 = vpop.f32.mrf.mxu0
      %v1000 = vadd.f32 %v938, %v999
      %1001 = vmatmul.bf16.gmra.mxu0 %v889
      %v1002 = vpop.f32.mrf.mxu0
      %v1003 = vadd.f32 %v938, %v1002
      %v1004 = vpop.f32.mrf.mxu0
      %v1005 = vadd.f32 %v938, %v1004
      %1006 = vmatmul.bf16.gmra.mxu0 %v890
      %v1007 = vpop.f32.mrf.mxu0
      %v1008 = vadd.f32 %v938, %v1007
      %v1009 = vpop.f32.mrf.mxu0
      %v1010 = vadd.f32 %v938, %v1009
      %1011 = vmatmul.bf16.gmra.mxu0 %v891
      %v1012 = vpop.f32.mrf.mxu0
      %v1013 = vadd.f32 %v938, %v1012
      %v1014 = vpop.f32.mrf.mxu0
      %v1015 = vadd.f32 %v938, %v1014
      %1016 = vmatmul.bf16.gmra.mxu0 %v892
      %v1017 = vpop.f32.mrf.mxu0
      %v1018 = vadd.f32 %v938, %v1017
      %v1019 = vpop.f32.mrf.mxu0
      %v1020 = vadd.f32 %v938, %v1019
      %1021 = vmatmul.bf16.gmra.mxu0 %v893
      %v1022 = vpop.f32.mrf.mxu0
      %v1023 = vadd.f32 %v938, %v1022
      %v1024 = vpop.f32.mrf.mxu0
      %v1025 = vadd.f32 %v938, %v1024
      %1026 = vmatmul.bf16.gmra.mxu0 %v894
      %v1027 = vpop.f32.mrf.mxu0
      %v1028 = vadd.f32 %v938, %v1027
      %v1029 = vpop.f32.mrf.mxu0
      %v1030 = vadd.f32 %v938, %v1029
      %1031 = vmatmul.bf16.gmra.mxu0 %v895
      %v1032 = vpop.f32.mrf.mxu0
      %v1033 = vadd.f32 %v938, %v1032
      %v1034 = vpop.f32.mrf.mxu0
      %v1035 = vadd.f32 %v938, %v1034
      %1036 = vmatmul.bf16.gmra.mxu0 %v896
      %v1037 = vpop.f32.mrf.mxu0
      %v1038 = vadd.f32 %v938, %v1037
      %v1039 = vpop.f32.mrf.mxu0
      %v1040 = vadd.f32 %v938, %v1039
      %1041 = vmatmul.bf16.gmra.mxu0 %v897
      %v1042 = vpop.f32.mrf.mxu0
      %v1043 = vadd.f32 %v938, %v1042
      %v1044 = vpop.f32.mrf.mxu0
      %v1045 = vadd.f32 %v938, %v1044
      %1046 = vmatmul.bf16.gmra.mxu0 %v898
      %v1047 = vpop.f32.mrf.mxu0
      %v1048 = vadd.f32 %v938, %v1047
      %v1049 = vpop.f32.mrf.mxu0
      %v1050 = vadd.f32 %v938, %v1049
      %1051 = vmatmul.bf16.gmra.mxu0 %v899
      %v1052 = vpop.f32.mrf.mxu0
      %v1053 = vadd.f32 %v938, %v1052
      %v1054 = vpop.f32.mrf.mxu0
      %v1055 = vadd.f32 %v938, %v1054
      %1056 = vmatmul.bf16.gmra.mxu0 %v900
      %v1057 = vpop.f32.mrf.mxu0
      %v1058 = vadd.f32 %v938, %v1057
      %v1059 = vpop.f32.mrf.mxu0
      %v1060 = vadd.f32 %v938, %v1059
      %1061 = vmatmul.bf16.gmra.mxu0 %v901
      %v1062 = vpop.f32.mrf.mxu0
      %v1063 = vadd.f32 %v938, %v1062
      %v1064 = vpop.f32.mrf.mxu0
      %v1065 = vadd.f32 %v938, %v1064
      %1066 = vmatmul.bf16.gmra.mxu0 %v902
      %v1067 = vpop.f32.mrf.mxu0
      %v1068 = vadd.f32 %v938, %v1067
      %v1069 = vpop.f32.mrf.mxu0
      %v1070 = vadd.f32 %v938, %v1069
      %1071 = vmatmul.bf16.gmra.mxu0 %v903
      %v1072 = vpop.f32.mrf.mxu0
      %v1073 = vadd.f32 %v938, %v1072
      %v1074 = vpop.f32.mrf.mxu0
      %v1075 = vadd.f32 %v938, %v1074
      %1076 = vmatmul.bf16.gmra.mxu0 %v904
      %v1077 = vpop.f32.mrf.mxu0
      %v1078 = vadd.f32 %v938, %v1077
      %v1079 = vpop.f32.mrf.mxu0
      %v1080 = vadd.f32 %v938, %v1079
      %1081 = vmatmul.bf16.gmra.mxu0 %v905
      %v1082 = vpop.f32.mrf.mxu0
      %v1083 = vadd.f32 %v938, %v1082
      %v1084 = vpop.f32.mrf.mxu0
      %v1085 = vadd.f32 %v938, %v1084
      %1086 = vmatmul.bf16.gmra.mxu0 %v906
      %v1087 = vpop.f32.mrf.mxu0
      %v1088 = vadd.f32 %v938, %v1087
      %v1089 = vpop.f32.mrf.mxu0
      %v1090 = vadd.f32 %v938, %v1089
      %1091 = vmatmul.bf16.gmra.mxu0 %v907
      %v1092 = vpop.f32.mrf.mxu0
      %v1093 = vadd.f32 %v938, %v1092
      %v1094 = vpop.f32.mrf.mxu0
      %v1095 = vadd.f32 %v938, %v1094
      %1096 = vmatmul.bf16.gmra.mxu0 %v908
      %v1097 = vpop.f32.mrf.mxu0
      %v1098 = vadd.f32 %v938, %v1097
      %v1099 = vpop.f32.mrf.mxu0
      %v1100 = vadd.f32 %v938, %v1099
      %1101 = vmatmul.bf16.gmra.mxu0 %v909
      %v1102 = vpop.f32.mrf.mxu0
      %v1103 = vadd.f32 %v938, %v1102
      %v1104 = vpop.f32.mrf.mxu0
      %v1105 = vadd.f32 %v938, %v1104
      %1106 = vmatmul.bf16.gmra.mxu0 %v910
      %v1107 = vpop.f32.mrf.mxu0
      %v1108 = vadd.f32 %v938, %v1107
      %v1109 = vpop.f32.mrf.mxu0
      %v1110 = vadd.f32 %v938, %v1109
      %1111 = vmatmul.bf16.gmra.mxu0 %v911
      %v1112 = vpop.f32.mrf.mxu0
      %v1113 = vadd.f32 %v938, %v1112
      %v1114 = vpop.f32.mrf.mxu0
      %v1115 = vadd.f32 %v938, %v1114
      %1116 = vmatmul.bf16.gmra.mxu0 %v912
      %v1117 = vpop.f32.mrf.mxu0
      %v1118 = vadd.f32 %v938, %v1117
      %v1119 = vpop.f32.mrf.mxu0
      %v1120 = vadd.f32 %v938, %v1119
      %1121 = vmatmul.bf16.gmra.mxu0 %v913
      %v1122 = vpop.f32.mrf.mxu0
      %v1123 = vadd.f32 %v938, %v1122
      %v1124 = vpop.f32.mrf.mxu0
      %v1125 = vadd.f32 %v938, %v1124
      %1126 = vmatmul.bf16.gmra.mxu0 %v914
      %v1127 = vpop.f32.mrf.mxu0
      %v1128 = vadd.f32 %v938, %v1127
      %v1129 = vpop.f32.mrf.mxu0
      %v1130 = vadd.f32 %v938, %v1129
      %1131 = vmatmul.bf16.gmra.mxu0 %v915
      %v1132 = vpop.f32.mrf.mxu0
      %v1133 = vadd.f32 %v938, %v1132
      %v1134 = vpop.f32.mrf.mxu0
      %v1135 = vadd.f32 %v938, %v1134
      %1136 = vmatmul.bf16.gmra.mxu0 %v916
      %v1137 = vpop.f32.mrf.mxu0
      %v1138 = vadd.f32 %v938, %v1137
      %v1139 = vpop.f32.mrf.mxu0
      %v1140 = vadd.f32 %v938, %v1139
      %1141 = vmatmul.bf16.gmra.mxu0 %v917
      %v1142 = vpop.f32.mrf.mxu0
      %v1143 = vadd.f32 %v938, %v1142
      %v1144 = vpop.f32.mrf.mxu0
      %v1145 = vadd.f32 %v938, %v1144
      %1146 = vmatmul.bf16.gmra.mxu0 %v918
      %v1147 = vpop.f32.mrf.mxu0
      %v1148 = vadd.f32 %v938, %v1147
      %v1149 = vpop.f32.mrf.mxu0
      %v1150 = vadd.f32 %v938, %v1149
      %1151 = vmatmul.bf16.gmra.mxu0 %v919
      %v1152 = vpop.f32.mrf.mxu0
      %v1153 = vadd.f32 %v938, %v1152
      %v1154 = vpop.f32.mrf.mxu0
      %v1155 = vadd.f32 %v938, %v1154
      %1156 = vdwg.mxu0
      %v1157 = vmax.f32 %v998, 0.0
      %v1158 = vmax.f32 %v1000, 0.0
      %v1159 = vmax.f32 %v1003, 0.0
      %v1160 = vmax.f32 %v1005, 0.0
      %v1161 = vmax.f32 %v1008, 0.0
      %v1162 = vmax.f32 %v1010, 0.0
      %v1163 = vmax.f32 %v1013, 0.0
      %v1164 = vmax.f32 %v1015, 0.0
      %v1165 = vmax.f32 %v1018, 0.0
      %v1166 = vmax.f32 %v1020, 0.0
      %v1167 = vmax.f32 %v1023, 0.0
      %v1168 = vmax.f32 %v1025, 0.0
      %v1169 = vmax.f32 %v1028, 0.0
      %v1170 = vmax.f32 %v1030, 0.0
      %v1171 = vmax.f32 %v1033, 0.0
      %v1172 = vmax.f32 %v1035, 0.0
      %v1173 = vmax.f32 %v1038, 0.0
      %v1174 = vmax.f32 %v1040, 0.0
      %v1175 = vmax.f32 %v1043, 0.0
      %v1176 = vmax.f32 %v1045, 0.0
      %v1177 = vmax.f32 %v1048, 0.0
      %v1178 = vmax.f32 %v1050, 0.0
      %v1179 = vmax.f32 %v1053, 0.0
      %v1180 = vmax.f32 %v1055, 0.0
      %v1181 = vmax.f32 %v1058, 0.0
      %v1182 = vmax.f32 %v1060, 0.0
      %v1183 = vmax.f32 %v1063, 0.0
      %v1184 = vmax.f32 %v1065, 0.0
      %v1185 = vmax.f32 %v1068, 0.0
      %v1186 = vmax.f32 %v1070, 0.0
      %v1187 = vmax.f32 %v1073, 0.0
      %v1188 = vmax.f32 %v1075, 0.0
      %v1189 = vmax.f32 %v1078, 0.0
      %v1190 = vmax.f32 %v1080, 0.0
      %v1191 = vmax.f32 %v1083, 0.0
      %v1192 = vmax.f32 %v1085, 0.0
      %v1193 = vmax.f32 %v1088, 0.0
      %v1194 = vmax.f32 %v1090, 0.0
      %v1195 = vmax.f32 %v1093, 0.0
      %v1196 = vmax.f32 %v1095, 0.0
      %v1197 = vmax.f32 %v1098, 0.0
      %v1198 = vmax.f32 %v1100, 0.0
      %v1199 = vmax.f32 %v1103, 0.0
      %v1200 = vmax.f32 %v1105, 0.0
      %v1201 = vmax.f32 %v1108, 0.0
      %v1202 = vmax.f32 %v1110, 0.0
      %v1203 = vmax.f32 %v1113, 0.0
      %v1204 = vmax.f32 %v1115, 0.0
      %v1205 = vmax.f32 %v1118, 0.0
      %v1206 = vmax.f32 %v1120, 0.0
      %v1207 = vmax.f32 %v1123, 0.0
      %v1208 = vmax.f32 %v1125, 0.0
      %v1209 = vmax.f32 %v1128, 0.0
      %v1210 = vmax.f32 %v1130, 0.0
      %v1211 = vmax.f32 %v1133, 0.0
      %v1212 = vmax.f32 %v1135, 0.0
      %v1213 = vmax.f32 %v1138, 0.0
      %v1214 = vmax.f32 %v1140, 0.0
      %v1215 = vmax.f32 %v1143, 0.0
      %v1216 = vmax.f32 %v1145, 0.0
      %v1217 = vmax.f32 %v1148, 0.0
      %v1218 = vmax.f32 %v1150, 0.0
      %v1219 = vmax.f32 %v1153, 0.0
      %v1220 = vmax.f32 %v1155, 0.0
      %v1221 = vld [vmem:[%s6] sm:$0xf]
      %v1222 = vld [vmem:[%s6 + $0x4] sm:$0xf]
      %v1223 = vld [vmem:[%s6 + $0x8] sm:$0xf]
      %v1224 = vld [vmem:[%s6 + $0xc] sm:$0xf]
      %v1225 = vld [vmem:[%s6 + $0x10] sm:$0xf]
      %v1226 = vld [vmem:[%s6 + $0x14] sm:$0xf]
      %v1227 = vld [vmem:[%s6 + $0x18] sm:$0xf]
      %v1228 = vld [vmem:[%s6 + $0x1c] sm:$0xf]
      %v1229 = vld [vmem:[%s6 + $0x20] sm:$0xf]
      %v1230 = vld [vmem:[%s6 + $0x24] sm:$0xf]
      %v1231 = vld [vmem:[%s6 + $0x28] sm:$0xf]
      %v1232 = vld [vmem:[%s6 + $0x2c] sm:$0xf]
      %v1233 = vld [vmem:[%s6 + $0x30] sm:$0xf]
      %v1234 = vld [vmem:[%s6 + $0x34] sm:$0xf]
      %v1235 = vld [vmem:[%s6 + $0x38] sm:$0xf]
      %v1236 = vld [vmem:[%s6 + $0x3c] sm:$0xf]
      %v1253 = vunpack.c.l.b16 %v1221
      %v1254 = vunpack.c.l.b16 %v1222
      %v1255 = vunpack.c.l.b16 %v1223
      %v1256 = vunpack.c.l.b16 %v1224
      %v1257 = vunpack.c.l.b16 %v1225
      %v1258 = vunpack.c.l.b16 %v1226
      %v1259 = vunpack.c.l.b16 %v1227
      %v1260 = vunpack.c.l.b16 %v1228
      %v1261 = vunpack.c.l.b16 %v1229
      %v1262 = vunpack.c.l.b16 %v1230
      %v1263 = vunpack.c.l.b16 %v1231
      %v1264 = vunpack.c.l.b16 %v1232
      %v1265 = vunpack.c.l.b16 %v1233
      %v1266 = vunpack.c.l.b16 %v1234
      %v1267 = vunpack.c.l.b16 %v1235
      %v1268 = vunpack.c.l.b16 %v1236
      %v1269 = vpack.c.b16 %v1254, %v1253
      %v1270 = vpack.c.b16 %v1256, %v1255
      %v1271 = vpack.c.b16 %v1258, %v1257
      %v1272 = vpack.c.b16 %v1260, %v1259
      %v1273 = vpack.c.b16 %v1262, %v1261
      %v1274 = vpack.c.b16 %v1264, %v1263
      %v1275 = vpack.c.b16 %v1266, %v1265
      %v1276 = vpack.c.b16 %v1268, %v1267
      %1285 = vmatpush.bf16.msra.mxu0 %v1276
      %1286 = vmatpush.bf16.msra.mxu0 %v1275
      %1287 = vmatpush.bf16.msra.mxu0 %v1274
      %1288 = vmatpush.bf16.msra.mxu0 %v1273
      %1289 = vmatpush.bf16.msra.mxu0 %v1272
      %1290 = vmatpush.bf16.msra.mxu0 %v1271
      %1291 = vmatpush.bf16.msra.mxu0 %v1270
      %1292 = vmatpush.bf16.msra.mxu0 %v1269
      %1293 = vmatmul.bf16.gmra.mxu0 %v394
      %v1294 = vpop.f32.mrf.mxu0
      %v1295 = vadd.f32 0.0, %v1294
      %v1296 = vpop.f32.mrf.mxu0
      %1297 = vdwg.mxu0
      %v1298 = vpack.c.bf16 %v1158, %v1157
      %v1299 = vpack.c.bf16 %v1160, %v1159
      %v1300 = vpack.c.bf16 %v1162, %v1161
      %v1301 = vpack.c.bf16 %v1164, %v1163
      %v1302 = vpack.c.bf16 %v1166, %v1165
      %v1303 = vpack.c.bf16 %v1168, %v1167
      %v1304 = vpack.c.bf16 %v1170, %v1169
      %v1305 = vpack.c.bf16 %v1172, %v1171
      %v1306 = vpack.c.bf16 %v1174, %v1173
      %v1307 = vpack.c.bf16 %v1176, %v1175
      %v1308 = vpack.c.bf16 %v1178, %v1177
      %v1309 = vpack.c.bf16 %v1180, %v1179
      %v1310 = vpack.c.bf16 %v1182, %v1181
      %v1311 = vpack.c.bf16 %v1184, %v1183
      %v1312 = vpack.c.bf16 %v1186, %v1185
      %v1313 = vpack.c.bf16 %v1188, %v1187
      %v1314 = vpack.c.bf16 %v1190, %v1189
      %v1315 = vpack.c.bf16 %v1192, %v1191
      %v1316 = vpack.c.bf16 %v1194, %v1193
      %v1317 = vpack.c.bf16 %v1196, %v1195
      %v1318 = vpack.c.bf16 %v1198, %v1197
      %v1319 = vpack.c.bf16 %v1200, %v1199
      %v1320 = vpack.c.bf16 %v1202, %v1201
      %v1321 = vpack.c.bf16 %v1204, %v1203
      %v1322 = vpack.c.bf16 %v1206, %v1205
      %v1323 = vpack.c.bf16 %v1208, %v1207
      %v1324 = vpack.c.bf16 %v1210, %v1209
      %v1325 = vpack.c.bf16 %v1212, %v1211
      %v1326 = vpack.c.bf16 %v1214, %v1213
      %v1327 = vpack.c.bf16 %v1216, %v1215
      %v1328 = vpack.c.bf16 %v1218, %v1217
      %v1329 = vpack.c.bf16 %v1220, %v1219
      %v1330 = vpack.c.bf16 %v1295, %v1295
      %1331 = vmatpush.bf16.xpose.msra.mxu0 0
      %1332 = vmatpush.bf16.xpose.msra.mxu0 0
      %1333 = vmatpush.bf16.xpose.msra.mxu0 0
      %1334 = vmatpush.bf16.xpose.msra.mxu0 0
      %1335 = vmatpush.bf16.xpose.msra.mxu0 0
      %1336 = vmatpush.bf16.xpose.msra.mxu0 0
      %1337 = vmatpush.bf16.xpose.msra.mxu0 0
      %1338 = vmatpush.bf16.xpose.msra.mxu0 %v1330
      %1339 = vmatmul.bf16.gmra.mxu0 %v1298
      %v1340 = vpop.f32.mrf.mxu0
      %v1341 = vadd.f32 0.0, %v1340
      %v1342 = vpop.f32.mrf.mxu0
      %v1343 = vadd.f32 0.0, %v1342
      %1344 = vmatmul.bf16.gmra.mxu0 %v1299
      %v1345 = vpop.f32.mrf.mxu0
      %v1346 = vadd.f32 0.0, %v1345
      %v1347 = vpop.f32.mrf.mxu0
      %v1348 = vadd.f32 0.0, %v1347
      %1349 = vmatmul.bf16.gmra.mxu0 %v1300
      %v1350 = vpop.f32.mrf.mxu0
      %v1351 = vadd.f32 0.0, %v1350
      %v1352 = vpop.f32.mrf.mxu0
      %v1353 = vadd.f32 0.0, %v1352
      %1354 = vmatmul.bf16.gmra.mxu0 %v1301
      %v1355 = vpop.f32.mrf.mxu0
      %v1356 = vadd.f32 0.0, %v1355
      %v1357 = vpop.f32.mrf.mxu0
      %v1358 = vadd.f32 0.0, %v1357
      %1359 = vmatmul.bf16.gmra.mxu0 %v1302
      %v1360 = vpop.f32.mrf.mxu0
      %v1361 = vadd.f32 0.0, %v1360
      %v1362 = vpop.f32.mrf.mxu0
      %v1363 = vadd.f32 0.0, %v1362
      %1364 = vmatmul.bf16.gmra.mxu0 %v1303
      %v1365 = vpop.f32.mrf.mxu0
      %v1366 = vadd.f32 0.0, %v1365
      %v1367 = vpop.f32.mrf.mxu0
      %v1368 = vadd.f32 0.0, %v1367
      %1369 = vmatmul.bf16.gmra.mxu0 %v1304
      %v1370 = vpop.f32.mrf.mxu0
      %v1371 = vadd.f32 0.0, %v1370
      %v1372 = vpop.f32.mrf.mxu0
      %v1373 = vadd.f32 0.0, %v1372
      %1374 = vmatmul.bf16.gmra.mxu0 %v1305
      %v1375 = vpop.f32.mrf.mxu0
      %v1376 = vadd.f32 0.0, %v1375
      %v1377 = vpop.f32.mrf.mxu0
      %v1378 = vadd.f32 0.0, %v1377
      %1379 = vmatmul.bf16.gmra.mxu0 %v1306
      %v1380 = vpop.f32.mrf.mxu0
      %v1381 = vadd.f32 0.0, %v1380
      %v1382 = vpop.f32.mrf.mxu0
      %v1383 = vadd.f32 0.0, %v1382
      %1384 = vmatmul.bf16.gmra.mxu0 %v1307
      %v1385 = vpop.f32.mrf.mxu0
      %v1386 = vadd.f32 0.0, %v1385
      %v1387 = vpop.f32.mrf.mxu0
      %v1388 = vadd.f32 0.0, %v1387
      %1389 = vmatmul.bf16.gmra.mxu0 %v1308
      %v1390 = vpop.f32.mrf.mxu0
      %v1391 = vadd.f32 0.0, %v1390
      %v1392 = vpop.f32.mrf.mxu0
      %v1393 = vadd.f32 0.0, %v1392
      %1394 = vmatmul.bf16.gmra.mxu0 %v1309
      %v1395 = vpop.f32.mrf.mxu0
      %v1396 = vadd.f32 0.0, %v1395
      %v1397 = vpop.f32.mrf.mxu0
      %v1398 = vadd.f32 0.0, %v1397
      %1399 = vmatmul.bf16.gmra.mxu0 %v1310
      %v1400 = vpop.f32.mrf.mxu0
      %v1401 = vadd.f32 0.0, %v1400
      %v1402 = vpop.f32.mrf.mxu0
      %v1403 = vadd.f32 0.0, %v1402
      %1404 = vmatmul.bf16.gmra.mxu0 %v1311
      %v1405 = vpop.f32.mrf.mxu0
      %v1406 = vadd.f32 0.0, %v1405
      %v1407 = vpop.f32.mrf.mxu0
      %v1408 = vadd.f32 0.0, %v1407
      %1409 = vmatmul.bf16.gmra.mxu0 %v1312
      %v1410 = vpop.f32.mrf.mxu0
      %v1411 = vadd.f32 0.0, %v1410
      %v1412 = vpop.f32.mrf.mxu0
      %v1413 = vadd.f32 0.0, %v1412
      %1414 = vmatmul.bf16.gmra.mxu0 %v1313
      %v1415 = vpop.f32.mrf.mxu0
      %v1416 = vadd.f32 0.0, %v1415
      %v1417 = vpop.f32.mrf.mxu0
      %v1418 = vadd.f32 0.0, %v1417
      %1419 = vmatmul.bf16.gmra.mxu0 %v1314
      %v1420 = vpop.f32.mrf.mxu0
      %v1421 = vadd.f32 0.0, %v1420
      %v1422 = vpop.f32.mrf.mxu0
      %v1423 = vadd.f32 0.0, %v1422
      %1424 = vmatmul.bf16.gmra.mxu0 %v1315
      %v1425 = vpop.f32.mrf.mxu0
      %v1426 = vadd.f32 0.0, %v1425
      %v1427 = vpop.f32.mrf.mxu0
      %v1428 = vadd.f32 0.0, %v1427
      %1429 = vmatmul.bf16.gmra.mxu0 %v1316
      %v1430 = vpop.f32.mrf.mxu0
      %v1431 = vadd.f32 0.0, %v1430
      %v1432 = vpop.f32.mrf.mxu0
      %v1433 = vadd.f32 0.0, %v1432
      %1434 = vmatmul.bf16.gmra.mxu0 %v1317
      %v1435 = vpop.f32.mrf.mxu0
      %v1436 = vadd.f32 0.0, %v1435
      %v1437 = vpop.f32.mrf.mxu0
      %v1438 = vadd.f32 0.0, %v1437
      %1439 = vmatmul.bf16.gmra.mxu0 %v1318
      %v1440 = vpop.f32.mrf.mxu0
      %v1441 = vadd.f32 0.0, %v1440
      %v1442 = vpop.f32.mrf.mxu0
      %v1443 = vadd.f32 0.0, %v1442
      %1444 = vmatmul.bf16.gmra.mxu0 %v1319
      %v1445 = vpop.f32.mrf.mxu0
      %v1446 = vadd.f32 0.0, %v1445
      %v1447 = vpop.f32.mrf.mxu0
      %v1448 = vadd.f32 0.0, %v1447
      %1449 = vmatmul.bf16.gmra.mxu0 %v1320
      %v1450 = vpop.f32.mrf.mxu0
      %v1451 = vadd.f32 0.0, %v1450
      %v1452 = vpop.f32.mrf.mxu0
      %v1453 = vadd.f32 0.0, %v1452
      %1454 = vmatmul.bf16.gmra.mxu0 %v1321
      %v1455 = vpop.f32.mrf.mxu0
      %v1456 = vadd.f32 0.0, %v1455
      %v1457 = vpop.f32.mrf.mxu0
      %v1458 = vadd.f32 0.0, %v1457
      %1459 = vmatmul.bf16.gmra.mxu0 %v1322
      %v1460 = vpop.f32.mrf.mxu0
      %v1461 = vadd.f32 0.0, %v1460
      %v1462 = vpop.f32.mrf.mxu0
      %v1463 = vadd.f32 0.0, %v1462
      %1464 = vmatmul.bf16.gmra.mxu0 %v1323
      %v1465 = vpop.f32.mrf.mxu0
      %v1466 = vadd.f32 0.0, %v1465
      %v1467 = vpop.f32.mrf.mxu0
      %v1468 = vadd.f32 0.0, %v1467
      %1469 = vmatmul.bf16.gmra.mxu0 %v1324
      %v1470 = vpop.f32.mrf.mxu0
      %v1471 = vadd.f32 0.0, %v1470
      %v1472 = vpop.f32.mrf.mxu0
      %v1473 = vadd.f32 0.0, %v1472
      %1474 = vmatmul.bf16.gmra.mxu0 %v1325
      %v1475 = vpop.f32.mrf.mxu0
      %v1476 = vadd.f32 0.0, %v1475
      %v1477 = vpop.f32.mrf.mxu0
      %v1478 = vadd.f32 0.0, %v1477
      %1479 = vmatmul.bf16.gmra.mxu0 %v1326
      %v1480 = vpop.f32.mrf.mxu0
      %v1481 = vadd.f32 0.0, %v1480
      %v1482 = vpop.f32.mrf.mxu0
      %v1483 = vadd.f32 0.0, %v1482
      %1484 = vmatmul.bf16.gmra.mxu0 %v1327
      %v1485 = vpop.f32.mrf.mxu0
      %v1486 = vadd.f32 0.0, %v1485
      %v1487 = vpop.f32.mrf.mxu0
      %v1488 = vadd.f32 0.0, %v1487
      %1489 = vmatmul.bf16.gmra.mxu0 %v1328
      %v1490 = vpop.f32.mrf.mxu0
      %v1491 = vadd.f32 0.0, %v1490
      %v1492 = vpop.f32.mrf.mxu0
      %v1493 = vadd.f32 0.0, %v1492
      %1494 = vmatmul.bf16.gmra.mxu0 %v1329
      %v1495 = vpop.f32.mrf.mxu0
      %v1496 = vadd.f32 0.0, %v1495
      %v1497 = vpop.f32.mrf.mxu0
      %v1498 = vadd.f32 0.0, %v1497
      %1499 = vdwg.mxu0
      %v1500 = vld [vmem:[#allocation2] sm:$0x1]
      %vm1501 = vcmask 64512
      %v1502 = vsel %vm1501, %v1341, -inf
      %v1503 = vsel %vm1501, %v1343, -inf
      %v1504 = vsel %vm1501, %v1346, -inf
      %v1505 = vsel %vm1501, %v1348, -inf
      %v1506 = vsel %vm1501, %v1351, -inf
      %v1507 = vmax.f32 %v1502, %v1506
      %v1508 = vsel %vm1501, %v1353, -inf
      %v1509 = vmax.f32 %v1503, %v1508
      %v1510 = vsel %vm1501, %v1356, -inf
      %v1511 = vmax.f32 %v1504, %v1510
      %v1512 = vsel %vm1501, %v1358, -inf
      %v1513 = vmax.f32 %v1505, %v1512
      %v1514 = vsel %vm1501, %v1361, -inf
      %v1515 = vmax.f32 %v1507, %v1514
      %v1516 = vsel %vm1501, %v1363, -inf
      %v1517 = vmax.f32 %v1509, %v1516
      %v1518 = vsel %vm1501, %v1366, -inf
      %v1519 = vmax.f32 %v1511, %v1518
      %v1520 = vsel %vm1501, %v1368, -inf
      %v1521 = vmax.f32 %v1513, %v1520
      %v1522 = vsel %vm1501, %v1371, -inf
      %v1523 = vmax.f32 %v1515, %v1522
      %v1524 = vsel %vm1501, %v1373, -inf
      %v1525 = vmax.f32 %v1517, %v1524
      %v1526 = vsel %vm1501, %v1376, -inf
      %v1527 = vmax.f32 %v1519, %v1526
      %v1528 = vsel %vm1501, %v1378, -inf
      %v1529 = vmax.f32 %v1521, %v1528
      %v1530 = vsel %vm1501, %v1381, -inf
      %v1531 = vmax.f32 %v1523, %v1530
      %v1532 = vsel %vm1501, %v1383, -inf
      %v1533 = vmax.f32 %v1525, %v1532
      %v1534 = vsel %vm1501, %v1386, -inf
      %v1535 = vmax.f32 %v1527, %v1534
      %v1536 = vsel %vm1501, %v1388, -inf
      %v1537 = vmax.f32 %v1529, %v1536
      %v1538 = vsel %vm1501, %v1391, -inf
      %v1539 = vmax.f32 %v1531, %v1538
      %v1540 = vsel %vm1501, %v1393, -inf
      %v1541 = vmax.f32 %v1533, %v1540
      %v1542 = vsel %vm1501, %v1396, -inf
      %v1543 = vmax.f32 %v1535, %v1542
      %v1544 = vsel %vm1501, %v1398, -inf
      %v1545 = vmax.f32 %v1537, %v1544
      %v1546 = vsel %vm1501, %v1401, -inf
      %v1547 = vmax.f32 %v1539, %v1546
      %v1548 = vsel %vm1501, %v1403, -inf
      %v1549 = vmax.f32 %v1541, %v1548
      %v1550 = vsel %vm1501, %v1406, -inf
      %v1551 = vmax.f32 %v1543, %v1550
      %v1552 = vsel %vm1501, %v1408, -inf
      %v1553 = vmax.f32 %v1545, %v1552
      %v1554 = vsel %vm1501, %v1411, -inf
      %v1555 = vmax.f32 %v1547, %v1554
      %v1556 = vsel %vm1501, %v1413, -inf
      %v1557 = vmax.f32 %v1549, %v1556
      %v1558 = vsel %vm1501, %v1416, -inf
      %v1559 = vmax.f32 %v1551, %v1558
      %v1560 = vsel %vm1501, %v1418, -inf
      %v1561 = vmax.f32 %v1553, %v1560
      %v1562 = vsel %vm1501, %v1421, -inf
      %v1563 = vmax.f32 %v1555, %v1562
      %v1564 = vsel %vm1501, %v1423, -inf
      %v1565 = vmax.f32 %v1557, %v1564
      %v1566 = vsel %vm1501, %v1426, -inf
      %v1567 = vmax.f32 %v1559, %v1566
      %v1568 = vsel %vm1501, %v1428, -inf
      %v1569 = vmax.f32 %v1561, %v1568
      %v1570 = vsel %vm1501, %v1431, -inf
      %v1571 = vmax.f32 %v1563, %v1570
      %v1572 = vsel %vm1501, %v1433, -inf
      %v1573 = vmax.f32 %v1565, %v1572
      %v1574 = vsel %vm1501, %v1436, -inf
      %v1575 = vmax.f32 %v1567, %v1574
      %v1576 = vsel %vm1501, %v1438, -inf
      %v1577 = vmax.f32 %v1569, %v1576
      %v1578 = vsel %vm1501, %v1441, -inf
      %v1579 = vmax.f32 %v1571, %v1578
      %v1580 = vsel %vm1501, %v1443, -inf
      %v1581 = vmax.f32 %v1573, %v1580
      %v1582 = vsel %vm1501, %v1446, -inf
      %v1583 = vmax.f32 %v1575, %v1582
      %v1584 = vsel %vm1501, %v1448, -inf
      %v1585 = vmax.f32 %v1577, %v1584
      %v1586 = vsel %vm1501, %v1451, -inf
      %v1587 = vmax.f32 %v1579, %v1586
      %v1588 = vsel %vm1501, %v1453, -inf
      %v1589 = vmax.f32 %v1581, %v1588
      %v1590 = vsel %vm1501, %v1456, -inf
      %v1591 = vmax.f32 %v1583, %v1590
      %v1592 = vsel %vm1501, %v1458, -inf
      %v1593 = vmax.f32 %v1585, %v1592
      %v1594 = vsel %vm1501, %v1461, -inf
      %v1595 = vmax.f32 %v1587, %v1594
      %v1596 = vsel %vm1501, %v1463, -inf
      %v1597 = vmax.f32 %v1589, %v1596
      %v1598 = vsel %vm1501, %v1466, -inf
      %v1599 = vmax.f32 %v1591, %v1598
      %v1600 = vsel %vm1501, %v1468, -inf
      %v1601 = vmax.f32 %v1593, %v1600
      %v1602 = vsel %vm1501, %v1471, -inf
      %v1603 = vmax.f32 %v1595, %v1602
      %v1604 = vsel %vm1501, %v1473, -inf
      %v1605 = vmax.f32 %v1597, %v1604
      %v1606 = vsel %vm1501, %v1476, -inf
      %v1607 = vmax.f32 %v1599, %v1606
      %v1608 = vsel %vm1501, %v1478, -inf
      %v1609 = vmax.f32 %v1601, %v1608
      %v1610 = vsel %vm1501, %v1481, -inf
      %v1611 = vmax.f32 %v1603, %v1610
      %v1612 = vsel %vm1501, %v1483, -inf
      %v1613 = vmax.f32 %v1605, %v1612
      %v1614 = vsel %vm1501, %v1486, -inf
      %v1615 = vmax.f32 %v1607, %v1614
      %v1616 = vsel %vm1501, %v1488, -inf
      %v1617 = vmax.f32 %v1609, %v1616
      %v1618 = vsel %vm1501, %v1491, -inf
      %v1619 = vmax.f32 %v1611, %v1618
      %v1620 = vsel %vm1501, %v1493, -inf
      %v1621 = vmax.f32 %v1613, %v1620
      %v1622 = vsel %vm1501, %v1496, -inf
      %v1623 = vmax.f32 %v1615, %v1622
      %v1624 = vsel %vm1501, %v1498, -inf
      %v1625 = vmax.f32 %v1617, %v1624
      %v1626 = vmax.f32 %v1619, %v1621
      %v1627 = vmax.f32 %v1623, %v1625
      %v1628 = vmax.f32 %v1626, %v1627
      %v1629 = vrot.slane %v1628, 4
      %v1630 = vmax.f32 %v1628, %v1629
      %v1631 = vrot.slane %v1630, 2
      %v1632 = vmax.f32 %v1630, %v1631
      %v1633 = vrot.slane %v1632, 1
      %v1634 = vmax.f32 %v1632, %v1633
      %v1635 = vmax.f32 %v1500, %v1634
      %v1636 = vld [vmem:[#allocation3] sm:$0x1]
      %v1637 = vsub.f32 %v1500, %v1635
      %v1638 = vmul.f32 %v1637, 1.442695
      %v1639 = vpow.pop %v1638
      %v1640 = vmul.f32 %v1636, %v1639
      %v1642 = vperm.slane %v1635, 0
      %v1644 = vsub.f32 %v1341, %v1642
      %v1645 = vsub.f32 %v1343, %v1642
      %v1646 = vsub.f32 %v1346, %v1642
      %v1647 = vsub.f32 %v1348, %v1642
      %v1648 = vsub.f32 %v1351, %v1642
      %v1649 = vsub.f32 %v1353, %v1642
      %v1650 = vsub.f32 %v1356, %v1642
      %v1651 = vsub.f32 %v1358, %v1642
      %v1652 = vsub.f32 %v1361, %v1642
      %v1653 = vsub.f32 %v1363, %v1642
      %v1654 = vsub.f32 %v1366, %v1642
      %v1655 = vsub.f32 %v1368, %v1642
      %v1656 = vsub.f32 %v1371, %v1642
      %v1657 = vsub.f32 %v1373, %v1642
      %v1658 = vsub.f32 %v1376, %v1642
      %v1659 = vsub.f32 %v1378, %v1642
      %v1660 = vsub.f32 %v1381, %v1642
      %v1661 = vsub.f32 %v1383, %v1642
      %v1662 = vsub.f32 %v1386, %v1642
      %v1663 = vsub.f32 %v1388, %v1642
      %v1664 = vsub.f32 %v1391, %v1642
      %v1665 = vsub.f32 %v1393, %v1642
      %v1666 = vsub.f32 %v1396, %v1642
      %v1667 = vsub.f32 %v1398, %v1642
      %v1668 = vsub.f32 %v1401, %v1642
      %v1669 = vsub.f32 %v1403, %v1642
      %v1670 = vsub.f32 %v1406, %v1642
      %v1671 = vsub.f32 %v1408, %v1642
      %v1672 = vsub.f32 %v1411, %v1642
      %v1673 = vsub.f32 %v1413, %v1642
      %v1674 = vsub.f32 %v1416, %v1642
      %v1675 = vsub.f32 %v1418, %v1642
      %v1676 = vsub.f32 %v1421, %v1642
      %v1677 = vsub.f32 %v1423, %v1642
      %v1678 = vsub.f32 %v1426, %v1642
      %v1679 = vsub.f32 %v1428, %v1642
      %v1680 = vsub.f32 %v1431, %v1642
      %v1681 = vsub.f32 %v1433, %v1642
      %v1682 = vsub.f32 %v1436, %v1642
      %v1683 = vsub.f32 %v1438, %v1642
      %v1684 = vsub.f32 %v1441, %v1642
      %v1685 = vsub.f32 %v1443, %v1642
      %v1686 = vsub.f32 %v1446, %v1642
      %v1687 = vsub.f32 %v1448, %v1642
      %v1688 = vsub.f32 %v1451, %v1642
      %v1689 = vsub.f32 %v1453, %v1642
      %v1690 = vsub.f32 %v1456, %v1642
      %v1691 = vsub.f32 %v1458, %v1642
      %v1692 = vsub.f32 %v1461, %v1642
      %v1693 = vsub.f32 %v1463, %v1642
      %v1694 = vsub.f32 %v1466, %v1642
      %v1695 = vsub.f32 %v1468, %v1642
      %v1696 = vsub.f32 %v1471, %v1642
      %v1697 = vsub.f32 %v1473, %v1642
      %v1698 = vsub.f32 %v1476, %v1642
      %v1699 = vsub.f32 %v1478, %v1642
      %v1700 = vsub.f32 %v1481, %v1642
      %v1701 = vsub.f32 %v1483, %v1642
      %v1702 = vsub.f32 %v1486, %v1642
      %v1703 = vsub.f32 %v1488, %v1642
      %v1704 = vsub.f32 %v1491, %v1642
      %v1705 = vsub.f32 %v1493, %v1642
      %v1706 = vsub.f32 %v1496, %v1642
      %v1707 = vsub.f32 %v1498, %v1642
      %v1708 = vmul.f32 %v1644, 1.442695
      %v1709 = vpow.pop %v1708
      %v1710 = vmul.f32 %v1645, 1.442695
      %v1711 = vpow.pop %v1710
      %v1712 = vmul.f32 %v1646, 1.442695
      %v1713 = vpow.pop %v1712
      %v1714 = vmul.f32 %v1647, 1.442695
      %v1715 = vpow.pop %v1714
      %v1716 = vmul.f32 %v1648, 1.442695
      %v1717 = vpow.pop %v1716
      %v1718 = vmul.f32 %v1649, 1.442695
      %v1719 = vpow.pop %v1718
      %v1720 = vmul.f32 %v1650, 1.442695
      %v1721 = vpow.pop %v1720
      %v1722 = vmul.f32 %v1651, 1.442695
      %v1723 = vpow.pop %v1722
      %v1724 = vmul.f32 %v1652, 1.442695
      %v1725 = vpow.pop %v1724
      %v1726 = vmul.f32 %v1653, 1.442695
      %v1727 = vpow.pop %v1726
      %v1728 = vmul.f32 %v1654, 1.442695
      %v1729 = vpow.pop %v1728
      %v1730 = vmul.f32 %v1655, 1.442695
      %v1731 = vpow.pop %v1730
      %v1732 = vmul.f32 %v1656, 1.442695
      %v1733 = vpow.pop %v1732
      %v1734 = vmul.f32 %v1657, 1.442695
      %v1735 = vpow.pop %v1734
      %v1736 = vmul.f32 %v1658, 1.442695
      %v1737 = vpow.pop %v1736
      %v1738 = vmul.f32 %v1659, 1.442695
      %v1739 = vpow.pop %v1738
      %v1740 = vmul.f32 %v1660, 1.442695
      %v1741 = vpow.pop %v1740
      %v1742 = vmul.f32 %v1661, 1.442695
      %v1743 = vpow.pop %v1742
      %v1744 = vmul.f32 %v1662, 1.442695
      %v1745 = vpow.pop %v1744
      %v1746 = vmul.f32 %v1663, 1.442695
      %v1747 = vpow.pop %v1746
      %v1748 = vmul.f32 %v1664, 1.442695
      %v1749 = vpow.pop %v1748
      %v1750 = vmul.f32 %v1665, 1.442695
      %v1751 = vpow.pop %v1750
      %v1752 = vmul.f32 %v1666, 1.442695
      %v1753 = vpow.pop %v1752
      %v1754 = vmul.f32 %v1667, 1.442695
      %v1755 = vpow.pop %v1754
      %v1756 = vmul.f32 %v1668, 1.442695
      %v1757 = vpow.pop %v1756
      %v1758 = vmul.f32 %v1669, 1.442695
      %v1759 = vpow.pop %v1758
      %v1760 = vmul.f32 %v1670, 1.442695
      %v1761 = vpow.pop %v1760
      %v1762 = vmul.f32 %v1671, 1.442695
      %v1763 = vpow.pop %v1762
      %v1764 = vmul.f32 %v1672, 1.442695
      %v1765 = vpow.pop %v1764
      %v1766 = vmul.f32 %v1673, 1.442695
      %v1767 = vpow.pop %v1766
      %v1768 = vmul.f32 %v1674, 1.442695
      %v1769 = vpow.pop %v1768
      %v1770 = vmul.f32 %v1675, 1.442695
      %v1771 = vpow.pop %v1770
      %v1772 = vmul.f32 %v1676, 1.442695
      %v1773 = vpow.pop %v1772
      %v1774 = vmul.f32 %v1677, 1.442695
      %v1775 = vpow.pop %v1774
      %v1776 = vmul.f32 %v1678, 1.442695
      %v1777 = vpow.pop %v1776
      %v1778 = vmul.f32 %v1679, 1.442695
      %v1779 = vpow.pop %v1778
      %v1780 = vmul.f32 %v1680, 1.442695
      %v1781 = vpow.pop %v1780
      %v1782 = vmul.f32 %v1681, 1.442695
      %v1783 = vpow.pop %v1782
      %v1784 = vmul.f32 %v1682, 1.442695
      %v1785 = vpow.pop %v1784
      %v1786 = vmul.f32 %v1683, 1.442695
      %v1787 = vpow.pop %v1786
      %v1788 = vmul.f32 %v1684, 1.442695
      %v1789 = vpow.pop %v1788
      %v1790 = vmul.f32 %v1685, 1.442695
      %v1791 = vpow.pop %v1790
      %v1792 = vmul.f32 %v1686, 1.442695
      %v1793 = vpow.pop %v1792
      %v1794 = vmul.f32 %v1687, 1.442695
      %v1795 = vpow.pop %v1794
      %v1796 = vmul.f32 %v1688, 1.442695
      %v1797 = vpow.pop %v1796
      %v1798 = vmul.f32 %v1689, 1.442695
      %v1799 = vpow.pop %v1798
      %v1800 = vmul.f32 %v1690, 1.442695
      %v1801 = vpow.pop %v1800
      %v1802 = vmul.f32 %v1691, 1.442695
      %v1803 = vpow.pop %v1802
      %v1804 = vmul.f32 %v1692, 1.442695
      %v1805 = vpow.pop %v1804
      %v1806 = vmul.f32 %v1693, 1.442695
      %v1807 = vpow.pop %v1806
      %v1808 = vmul.f32 %v1694, 1.442695
      %v1809 = vpow.pop %v1808
      %v1810 = vmul.f32 %v1695, 1.442695
      %v1811 = vpow.pop %v1810
      %v1812 = vmul.f32 %v1696, 1.442695
      %v1813 = vpow.pop %v1812
      %v1814 = vmul.f32 %v1697, 1.442695
      %v1815 = vpow.pop %v1814
      %v1816 = vmul.f32 %v1698, 1.442695
      %v1817 = vpow.pop %v1816
      %v1818 = vmul.f32 %v1699, 1.442695
      %v1819 = vpow.pop %v1818
      %v1820 = vmul.f32 %v1700, 1.442695
      %v1821 = vpow.pop %v1820
      %v1822 = vmul.f32 %v1701, 1.442695
      %v1823 = vpow.pop %v1822
      %v1824 = vmul.f32 %v1702, 1.442695
      %v1825 = vpow.pop %v1824
      %v1826 = vmul.f32 %v1703, 1.442695
      %v1827 = vpow.pop %v1826
      %v1828 = vmul.f32 %v1704, 1.442695
      %v1829 = vpow.pop %v1828
      %v1830 = vmul.f32 %v1705, 1.442695
      %v1831 = vpow.pop %v1830
      %v1832 = vmul.f32 %v1706, 1.442695
      %v1833 = vpow.pop %v1832
      %v1834 = vmul.f32 %v1707, 1.442695
      %v1835 = vpow.pop %v1834
      %v1836 = vsel %vm1501, %v1709, 0.0
      %v1837 = vsel %vm1501, %v1711, 0.0
      %v1838 = vadd.f32 %v1836, %v1837
      %v1839 = vsel %vm1501, %v1713, 0.0
      %v1840 = vadd.f32 %v1838, %v1839
      %v1841 = vsel %vm1501, %v1715, 0.0
      %v1842 = vadd.f32 %v1840, %v1841
      %v1843 = vsel %vm1501, %v1717, 0.0
      %v1844 = vadd.f32 %v1842, %v1843
      %v1845 = vsel %vm1501, %v1719, 0.0
      %v1846 = vadd.f32 %v1844, %v1845
      %v1847 = vsel %vm1501, %v1721, 0.0
      %v1848 = vadd.f32 %v1846, %v1847
      %v1849 = vsel %vm1501, %v1723, 0.0
      %v1850 = vadd.f32 %v1848, %v1849
      %v1851 = vsel %vm1501, %v1725, 0.0
      %v1852 = vadd.f32 %v1850, %v1851
      %v1853 = vsel %vm1501, %v1727, 0.0
      %v1854 = vadd.f32 %v1852, %v1853
      %v1855 = vsel %vm1501, %v1729, 0.0
      %v1856 = vadd.f32 %v1854, %v1855
      %v1857 = vsel %vm1501, %v1731, 0.0
      %v1858 = vadd.f32 %v1856, %v1857
      %v1859 = vsel %vm1501, %v1733, 0.0
      %v1860 = vadd.f32 %v1858, %v1859
      %v1861 = vsel %vm1501, %v1735, 0.0
      %v1862 = vadd.f32 %v1860, %v1861
      %v1863 = vsel %vm1501, %v1737, 0.0
      %v1864 = vadd.f32 %v1862, %v1863
      %v1865 = vsel %vm1501, %v1739, 0.0
      %v1866 = vadd.f32 %v1864, %v1865
      %v1867 = vsel %vm1501, %v1741, 0.0
      %v1868 = vadd.f32 %v1866, %v1867
      %v1869 = vsel %vm1501, %v1743, 0.0
      %v1870 = vadd.f32 %v1868, %v1869
      %v1871 = vsel %vm1501, %v1745, 0.0
      %v1872 = vadd.f32 %v1870, %v1871
      %v1873 = vsel %vm1501, %v1747, 0.0
      %v1874 = vadd.f32 %v1872, %v1873
      %v1875 = vsel %vm1501, %v1749, 0.0
      %v1876 = vadd.f32 %v1874, %v1875
      %v1877 = vsel %vm1501, %v1751, 0.0
      %v1878 = vadd.f32 %v1876, %v1877
      %v1879 = vsel %vm1501, %v1753, 0.0
      %v1880 = vadd.f32 %v1878, %v1879
      %v1881 = vsel %vm1501, %v1755, 0.0
      %v1882 = vadd.f32 %v1880, %v1881
      %v1883 = vsel %vm1501, %v1757, 0.0
      %v1884 = vadd.f32 %v1882, %v1883
      %v1885 = vsel %vm1501, %v1759, 0.0
      %v1886 = vadd.f32 %v1884, %v1885
      %v1887 = vsel %vm1501, %v1761, 0.0
      %v1888 = vadd.f32 %v1886, %v1887
      %v1889 = vsel %vm1501, %v1763, 0.0
      %v1890 = vadd.f32 %v1888, %v1889
      %v1891 = vsel %vm1501, %v1765, 0.0
      %v1892 = vadd.f32 %v1890, %v1891
      %v1893 = vsel %vm1501, %v1767, 0.0
      %v1894 = vadd.f32 %v1892, %v1893
      %v1895 = vsel %vm1501, %v1769, 0.0
      %v1896 = vadd.f32 %v1894, %v1895
      %v1897 = vsel %vm1501, %v1771, 0.0
      %v1898 = vadd.f32 %v1896, %v1897
      %v1899 = vsel %vm1501, %v1773, 0.0
      %v1900 = vadd.f32 %v1898, %v1899
      %v1901 = vsel %vm1501, %v1775, 0.0
      %v1902 = vadd.f32 %v1900, %v1901
      %v1903 = vsel %vm1501, %v1777, 0.0
      %v1904 = vadd.f32 %v1902, %v1903
      %v1905 = vsel %vm1501, %v1779, 0.0
      %v1906 = vadd.f32 %v1904, %v1905
      %v1907 = vsel %vm1501, %v1781, 0.0
      %v1908 = vadd.f32 %v1906, %v1907
      %v1909 = vsel %vm1501, %v1783, 0.0
      %v1910 = vadd.f32 %v1908, %v1909
      %v1911 = vsel %vm1501, %v1785, 0.0
      %v1912 = vadd.f32 %v1910, %v1911
      %v1913 = vsel %vm1501, %v1787, 0.0
      %v1914 = vadd.f32 %v1912, %v1913
      %v1915 = vsel %vm1501, %v1789, 0.0
      %v1916 = vadd.f32 %v1914, %v1915
      %v1917 = vsel %vm1501, %v1791, 0.0
      %v1918 = vadd.f32 %v1916, %v1917
      %v1919 = vsel %vm1501, %v1793, 0.0
      %v1920 = vadd.f32 %v1918, %v1919
      %v1921 = vsel %vm1501, %v1795, 0.0
      %v1922 = vadd.f32 %v1920, %v1921
      %v1923 = vsel %vm1501, %v1797, 0.0
      %v1924 = vadd.f32 %v1922, %v1923
      %v1925 = vsel %vm1501, %v1799, 0.0
      %v1926 = vadd.f32 %v1924, %v1925
      %v1927 = vsel %vm1501, %v1801, 0.0
      %v1928 = vadd.f32 %v1926, %v1927
      %v1929 = vsel %vm1501, %v1803, 0.0
      %v1930 = vadd.f32 %v1928, %v1929
      %v1931 = vsel %vm1501, %v1805, 0.0
      %v1932 = vadd.f32 %v1930, %v1931
      %v1933 = vsel %vm1501, %v1807, 0.0
      %v1934 = vadd.f32 %v1932, %v1933
      %v1935 = vsel %vm1501, %v1809, 0.0
      %v1936 = vadd.f32 %v1934, %v1935
      %v1937 = vsel %vm1501, %v1811, 0.0
      %v1938 = vadd.f32 %v1936, %v1937
      %v1939 = vsel %vm1501, %v1813, 0.0
      %v1940 = vadd.f32 %v1938, %v1939
      %v1941 = vsel %vm1501, %v1815, 0.0
      %v1942 = vadd.f32 %v1940, %v1941
      %v1943 = vsel %vm1501, %v1817, 0.0
      %v1944 = vadd.f32 %v1942, %v1943
      %v1945 = vsel %vm1501, %v1819, 0.0
      %v1946 = vadd.f32 %v1944, %v1945
      %v1947 = vsel %vm1501, %v1821, 0.0
      %v1948 = vadd.f32 %v1946, %v1947
      %v1949 = vsel %vm1501, %v1823, 0.0
      %v1950 = vadd.f32 %v1948, %v1949
      %v1951 = vsel %vm1501, %v1825, 0.0
      %v1952 = vadd.f32 %v1950, %v1951
      %v1953 = vsel %vm1501, %v1827, 0.0
      %v1954 = vadd.f32 %v1952, %v1953
      %v1955 = vsel %vm1501, %v1829, 0.0
      %v1956 = vadd.f32 %v1954, %v1955
      %v1957 = vsel %vm1501, %v1831, 0.0
      %v1958 = vadd.f32 %v1956, %v1957
      %v1959 = vsel %vm1501, %v1833, 0.0
      %v1960 = vadd.f32 %v1958, %v1959
      %v1961 = vsel %vm1501, %v1835, 0.0
      %v1962 = vadd.f32 %v1960, %v1961
      %v1963 = vrot.slane %v1962, 4
      %v1964 = vadd.f32 %v1962, %v1963
      %v1965 = vrot.slane %v1964, 2
      %v1966 = vadd.f32 %v1964, %v1965
      %v1967 = vrot.slane %v1966, 1
      %v1968 = vadd.f32 %v1966, %v1967
      %v1969 = vadd.f32 %v1640, %v1968
      %vm1970 = vcmask 57344
      %1971 = vst.msk [vmem:[#allocation3] sm:$0x1] %vm1970, %v1969
      %1972 = vst.msk [vmem:[#allocation2] sm:$0x1] %vm1970, %v1635
      %p1973 = scmp.eq.s32.totalorder %s23, 1
      // Predicated region
      $region53: #{spatial_ocr_pallas.2} parent=47 // pred_check
        %p1974 = pneg %p1973
      $region54: #{spatial_ocr_pallas.2} parent=47 // pred_check_branch
        %1976 = sbr.rel (%p1974) target = $region56
      $region55: #{spatial_ocr_pallas.2} parent=47 // pred_region
        %v1977 = vld [vmem:[#allocation2] sm:$0x1]
        %v1978 = vld [vmem:[#allocation3] sm:$0x1]
        %v1980 = vperm.slane %v1978, 0
        %vm1982 = vcmask 1040384
        %v1983 = vsel %vm1982, %v1977, %v1980
        %vm1984 = vcmask 58368
        %1985 = vst.msk [vmem:[%s321] sm:$0x3] %vm1984, %v1983
      $region56: #{spatial_ocr_pallas.2} parent=47 // pred_fallthru
        _
      %p1986 = scmp.lt.s32.totalorder %s22, 1
      %s1987 = scalar_select %p1986, %s22, 1
      %s1988 = smul.addr %s1987, 2
      %s1989 = scalar_lea.vmem %s7, %s1988
      // Predicated region
      $region57: #{spatial_ocr_pallas.2} parent=47 // pred_check
        %p1990 = pneg %p207
      $region58: #{spatial_ocr_pallas.2} parent=47 // pred_check_branch
        %1992 = sbr.rel (%p1990) target = $region60
      $region59: #{spatial_ocr_pallas.2} parent=47 // pred_region
        _
      $region60: #{spatial_ocr_pallas.2} parent=47 // pred_fallthru
        _
    $region48: #{spatial_ocr_pallas.2} parent=5 // pred_fallthru
      _
    %p1993 = scmp.le.s32.totalorder 2, %s13
    // Predicated region
    $region61: #{spatial_ocr_pallas.2} parent=5 // pred_check
      %p1994 = pneg %p1993
    $region62: #{spatial_ocr_pallas.2} parent=5 // pred_check_branch
      %1996 = sbr.rel (%p1994) target = $region64
    $region63: #{spatial_ocr_pallas.2} parent=5 // pred_region
      %s1997 = ssub.s32 %s13, 2
      // Predicated region
      $region65: #{spatial_ocr_pallas.2} parent=63 // pred_check
        %p1998 = pneg %p213
      $region66: #{spatial_ocr_pallas.2} parent=63 // pred_check_branch
        %2000 = sbr.rel (%p1998) target = $region68
      $region67: #{spatial_ocr_pallas.2} parent=63 // pred_region
        %p2001 = scmp.lt.s32.totalorder %s24, 1
        %s2002 = scalar_select %p2001, %s24, 1
        %s2003 = smul.addr %s2002, 2
        %s2004 = scalar_lea.vmem %s7, %s2003
      $region68: #{spatial_ocr_pallas.2} parent=63 // pred_fallthru
        _
    $region64: #{spatial_ocr_pallas.2} parent=5 // pred_fallthru
      _
  $region6: #{spatial_ocr_pallas.2} parent=0 // loop_footer
    %s17 = sadd.s32 1, %s13
  $region7: #{spatial_ocr_pallas.2} parent=0 // loop_footer_branch
    %12 = sbr.rel target = $region3
  $region8: #{spatial_ocr_pallas.2} parent=0 // loop_exit
    _

// kernel: spatial_ocr_pallas.3
$region0: #{spatial_ocr_pallas.3}
  #allocation0 [shape = 'u32[]', space=smem, size = 0x4, offset = 0x4, fixed_abs, tag = 'smem constant byte address 0x4 - core index']
  #allocation1 [shape = 'u32[72,128]{1,0:T(1,128)}', space=vmem, size = 0x9000, scoped, tag = 'internal scratch']
  %s0 = inlined_call_operand.vmem [shape: f32[2,1,8], index: 0, kind: input, shape index: {}]
  %s1 = inlined_call_operand.vmem [shape: f32[2,8,1], index: 1, kind: input, shape index: {}]
  %s2 = inlined_call_operand.vmem [shape: bf16[2,1024,128], index: 2, kind: input, shape index: {}]
  %s3 = inlined_call_operand.vmem [shape: bf16[2,8,128], index: 3, kind: input, shape index: {}]
  %s4 = inlined_call_operand.vmem [shape: bf16[128,128], index: 4, kind: input, shape index: {}]
  %s5 = inlined_call_operand.vmem [shape: f32[1,128], index: 5, kind: input, shape index: {}]
  %s6 = inlined_call_operand.vmem [shape: bf16[128,128], index: 6, kind: input, shape index: {}]
  %s7 = inlined_call_operand.vmem [shape: f32[1,128], index: 7, kind: input, shape index: {}]
  %s8 = inlined_call_operand.vmem [shape: bf16[128,128], index: 8, kind: input, shape index: {}]
  %s9 = inlined_call_operand.vmem [shape: bf16[128,128], index: 9, kind: input, shape index: {}]
  %s10 = inlined_call_operand.vmem [shape: bf16[128,128], index: 10, kind: input, shape index: {}]
  %s11 = inlined_call_operand.vmem [shape: f32[1,128], index: 11, kind: input, shape index: {}]
  %s12 = inlined_call_operand.vmem [shape: bf16[128,128], index: 12, kind: input, shape index: {}]
  %s13 = inlined_call_operand.vmem [shape: bf16[128,128], index: 13, kind: input, shape index: {}]
  %s14 = inlined_call_operand.vmem [shape: f32[1,128], index: 14, kind: input, shape index: {}]
  %s15 = inlined_call_operand.hbm [shape: f32[2,1024,128], index: 15, kind: output, shape index: {}]
  %s16 = sld [smem:[#allocation0]]
  $region93: #{spatial_ocr_pallas.3} parent=0
    _
  %s18 = ssub.s32 1, %s16
  %s19 = scalar_select 0, %s18, %s16
  $region1: #{spatial_ocr_pallas.3} parent=0
    #allocation2 [shape = 'u8[524288]{0}', space=vmem, size = 0x80000, scoped, tag = 'output window, operand 0']
    #allocation3 [shape = 's32[2]{0}', space=sflag, size = 0x8, scoped, tag = 'scoped memory for spatial_ocr_pallas.3']
    %20 = vsyncpa [#allocation3], 0
    %s21 = scalar_lea.sflag [#allocation3], 1
    %22 = vsyncpa %s21, 0
    loop: start=0, step=1, limit=6
    $region2: #{spatial_ocr_pallas.3} parent=1 // loop_pre_header
      _
    $region3: #{spatial_ocr_pallas.3} parent=1 // loop_header
      %s24 = sphi 0, %s28
      %p25 = scmp.ge.s32.totalorder %s24, 6
      %s31 = sphi 0, %s43
      %s32 = sphi 0, %s39
      %s33 = sphi 0, %s31
      %s34 = sphi 0, %s32
      %s35 = sphi 0, %s33
      %s36 = sphi 0, %s34
      %s46 = sphi 0, %s48
      %s49 = sphi 0, %s46
      %s50 = sphi 0, %s49
      %s66 = sphi 0, %s50
      %s72 = sphi 0, %s74
      %s75 = sphi 0, %s72
      %s76 = sphi 0, %s75
      %s92 = sphi 0, %s76
      %s100 = sphi 0, %s102
      %s103 = sphi 0, %s100
      %s104 = sphi 0, %s103
      %s120 = sphi 0, %s104
      %s126 = sphi 0, %s128
      %s129 = sphi 0, %s126
      %s130 = sphi 0, %s129
      %s146 = sphi 0, %s130
      %s150 = sphi 0, %s150
      %s152 = sphi 0, %s150
      %s153 = sphi 0, %s152
      %s167 = sphi 0, %s153
      %s171 = sphi 0, %s171
      %s173 = sphi 0, %s171
      %s174 = sphi 0, %s173
      %s188 = sphi 0, %s174
      %s192 = sphi 0, %s192
      %s194 = sphi 0, %s192
      %s195 = sphi 0, %s194
      %s209 = sphi 0, %s195
      %s213 = sphi 0, %s213
      %s215 = sphi 0, %s213
      %s216 = sphi 0, %s215
      %s230 = sphi 0, %s216
      %s234 = sphi 0, %s234
      %s236 = sphi 0, %s234
      %s237 = sphi 0, %s236
      %s251 = sphi 0, %s237
      %s255 = sphi 0, %s255
      %s257 = sphi 0, %s255
      %s258 = sphi 0, %s257
      %s272 = sphi 0, %s258
      %s276 = sphi 0, %s276
      %s278 = sphi 0, %s276
      %s279 = sphi 0, %s278
      %s293 = sphi 0, %s279
      %s297 = sphi 0, %s297
      %s299 = sphi 0, %s297
      %s300 = sphi 0, %s299
      %s314 = sphi 0, %s300
      %s318 = sphi 0, %s318
      %s320 = sphi 0, %s318
      %s321 = sphi 0, %s320
      %s335 = sphi 0, %s321
      %s339 = sphi 0, %s339
      %s341 = sphi 0, %s339
      %s342 = sphi 0, %s341
      %s356 = sphi 0, %s342
      %s360 = sphi 0, %s360
      %s362 = sphi 0, %s360
      %s363 = sphi 0, %s362
      %s377 = sphi 0, %s363
      %s385 = sphi 0, %s387
      %s388 = sphi 0, %s385
      %s389 = sphi 0, %s388
      %s405 = sphi 0, %s389
    $region4: #{spatial_ocr_pallas.3} parent=1 // loop_header_branch
      %27 = sbr.rel (%p25) target = $region8
    $region5: #{spatial_ocr_pallas.3} parent=1 // loop_body
      %s29 = ssub.s32 %s24, 1
      %s30 = ssub.s32 %s24, 2
      %s37 = sadd.s32 1, %s32
      %p38 = scmp.ge.s32.totalorder %s37, 2
      %s39 = scalar_select %p38, 0, %s37
      %s40 = sadd.s32 1, %s31
      %s41 = scalar_select %p38, %s40, %s31
      %p42 = scmp.ge.s32.totalorder %s41, 2
      %s43 = scalar_select %p42, 0, %s41
      %s44 = ssub.s32 %s31, %s43
      %p45 = scmp.eq.s32.totalorder %s44, 0
      %s47 = sadd.s32 %s46, 1
      %s48 = scalar_select %p45, %s46, %s47
      %p51 = pneg %p45
      %p52 = scmp.eq.s32.totalorder %s24, 3
      %p53 = por %p51, %p52
      %p54 = scmp.ne.s32.totalorder %s46, %s49
      %p55 = scmp.eq.s32.totalorder %s24, 0
      %p56 = por %p54, %p55
      %p57 = scmp.ne.s32.totalorder %s46, %s49
      %p58 = scmp.eq.s32.totalorder %s29, 3
      %p59 = por %p57, %p58
      %p60 = scmp.ne.s32.totalorder %s49, %s50
      %p61 = scmp.eq.s32.totalorder %s29, 0
      %p62 = por %p60, %p61
      %p63 = scmp.ne.s32.totalorder %s49, %s50
      %p64 = scmp.eq.s32.totalorder %s30, 3
      %p65 = por %p63, %p64
      %p67 = scmp.ne.s32.totalorder %s50, %s66
      %p68 = scmp.eq.s32.totalorder %s30, 0
      %p69 = por %p67, %p68
      %s70 = ssub.s32 %s31, %s43
      %p71 = scmp.eq.s32.totalorder %s70, 0
      %s73 = sadd.s32 %s72, 1
      %s74 = scalar_select %p71, %s72, %s73
      %p77 = pneg %p71
      %p78 = scmp.eq.s32.totalorder %s24, 3
      %p79 = por %p77, %p78
      %p80 = scmp.ne.s32.totalorder %s72, %s75
      %p81 = scmp.eq.s32.totalorder %s24, 0
      %p82 = por %p80, %p81
      %p83 = scmp.ne.s32.totalorder %s72, %s75
      %p84 = scmp.eq.s32.totalorder %s29, 3
      %p85 = por %p83, %p84
      %p86 = scmp.ne.s32.totalorder %s75, %s76
      %p87 = scmp.eq.s32.totalorder %s29, 0
      %p88 = por %p86, %p87
      %p89 = scmp.ne.s32.totalorder %s75, %s76
      %p90 = scmp.eq.s32.totalorder %s30, 3
      %p91 = por %p89, %p90
      %p93 = scmp.ne.s32.totalorder %s76, %s92
      %p94 = scmp.eq.s32.totalorder %s30, 0
      %p95 = por %p93, %p94
      %s96 = ssub.s32 %s31, %s43
      %s97 = ssub.s32 %s32, %s39
      %s98 = sor.u32 %s96, %s97
      %p99 = scmp.eq.s32.totalorder %s98, 0
      %s101 = sadd.s32 %s100, 1
      %s102 = scalar_select %p99, %s100, %s101
      %p105 = pneg %p99
      %p106 = scmp.eq.s32.totalorder %s24, 3
      %p107 = por %p105, %p106
      %p108 = scmp.ne.s32.totalorder %s100, %s103
      %p109 = scmp.eq.s32.totalorder %s24, 0
      %p110 = por %p108, %p109
      %p111 = scmp.ne.s32.totalorder %s100, %s103
      %p112 = scmp.eq.s32.totalorder %s29, 3
      %p113 = por %p111, %p112
      %p114 = scmp.ne.s32.totalorder %s103, %s104
      %p115 = scmp.eq.s32.totalorder %s29, 0
      %p116 = por %p114, %p115
      %p117 = scmp.ne.s32.totalorder %s103, %s104
      %p118 = scmp.eq.s32.totalorder %s30, 3
      %p119 = por %p117, %p118
      %p121 = scmp.ne.s32.totalorder %s104, %s120
      %p122 = scmp.eq.s32.totalorder %s30, 0
      %p123 = por %p121, %p122
      %s124 = ssub.s32 %s31, %s43
      %p125 = scmp.eq.s32.totalorder %s124, 0
      %s127 = sadd.s32 %s126, 1
      %s128 = scalar_select %p125, %s126, %s127
      %p131 = pneg %p125
      %p132 = scmp.eq.s32.totalorder %s24, 3
      %p133 = por %p131, %p132
      %p134 = scmp.ne.s32.totalorder %s126, %s129
      %p135 = scmp.eq.s32.totalorder %s24, 0
      %p136 = por %p134, %p135
      %p137 = scmp.ne.s32.totalorder %s126, %s129
      %p138 = scmp.eq.s32.totalorder %s29, 3
      %p139 = por %p137, %p138
      %p140 = scmp.ne.s32.totalorder %s129, %s130
      %p141 = scmp.eq.s32.totalorder %s29, 0
      %p142 = por %p140, %p141
      %p143 = scmp.ne.s32.totalorder %s129, %s130
      %p144 = scmp.eq.s32.totalorder %s30, 3
      %p145 = por %p143, %p144
      %p147 = scmp.ne.s32.totalorder %s130, %s146
      %p148 = scmp.eq.s32.totalorder %s30, 0
      %p149 = por %p147, %p148
      %s151 = sadd.s32 %s150, 1
      %p154 = scmp.eq.s32.totalorder %s24, 3
      %p155 = scmp.ne.s32.totalorder %s150, %s152
      %p156 = scmp.eq.s32.totalorder %s24, 0
      %p157 = por %p155, %p156
      %p158 = scmp.ne.s32.totalorder %s150, %s152
      %p159 = scmp.eq.s32.totalorder %s29, 3
      %p160 = por %p158, %p159
      %p161 = scmp.ne.s32.totalorder %s152, %s153
      %p162 = scmp.eq.s32.totalorder %s29, 0
      %p163 = por %p161, %p162
      %p164 = scmp.ne.s32.totalorder %s152, %s153
      %p165 = scmp.eq.s32.totalorder %s30, 3
      %p166 = por %p164, %p165
      %p168 = scmp.ne.s32.totalorder %s153, %s167
      %p169 = scmp.eq.s32.totalorder %s30, 0
      %p170 = por %p168, %p169
      %s172 = sadd.s32 %s171, 1
      %p175 = scmp.eq.s32.totalorder %s24, 3
      %p176 = scmp.ne.s32.totalorder %s171, %s173
      %p177 = scmp.eq.s32.totalorder %s24, 0
      %p178 = por %p176, %p177
      %p179 = scmp.ne.s32.totalorder %s171, %s173
      %p180 = scmp.eq.s32.totalorder %s29, 3
      %p181 = por %p179, %p180
      %p182 = scmp.ne.s32.totalorder %s173, %s174
      %p183 = scmp.eq.s32.totalorder %s29, 0
      %p184 = por %p182, %p183
      %p185 = scmp.ne.s32.totalorder %s173, %s174
      %p186 = scmp.eq.s32.totalorder %s30, 3
      %p187 = por %p185, %p186
      %p189 = scmp.ne.s32.totalorder %s174, %s188
      %p190 = scmp.eq.s32.totalorder %s30, 0
      %p191 = por %p189, %p190
      %s193 = sadd.s32 %s192, 1
      %p196 = scmp.eq.s32.totalorder %s24, 3
      %p197 = scmp.ne.s32.totalorder %s192, %s194
      %p198 = scmp.eq.s32.totalorder %s24, 0
      %p199 = por %p197, %p198
      %p200 = scmp.ne.s32.totalorder %s192, %s194
      %p201 = scmp.eq.s32.totalorder %s29, 3
      %p202 = por %p200, %p201
      %p203 = scmp.ne.s32.totalorder %s194, %s195
      %p204 = scmp.eq.s32.totalorder %s29, 0
      %p205 = por %p203, %p204
      %p206 = scmp.ne.s32.totalorder %s194, %s195
      %p207 = scmp.eq.s32.totalorder %s30, 3
      %p208 = por %p206, %p207
      %p210 = scmp.ne.s32.totalorder %s195, %s209
      %p211 = scmp.eq.s32.totalorder %s30, 0
      %p212 = por %p210, %p211
      %s214 = sadd.s32 %s213, 1
      %p217 = scmp.eq.s32.totalorder %s24, 3
      %p218 = scmp.ne.s32.totalorder %s213, %s215
      %p219 = scmp.eq.s32.totalorder %s24, 0
      %p220 = por %p218, %p219
      %p221 = scmp.ne.s32.totalorder %s213, %s215
      %p222 = scmp.eq.s32.totalorder %s29, 3
      %p223 = por %p221, %p222
      %p224 = scmp.ne.s32.totalorder %s215, %s216
      %p225 = scmp.eq.s32.totalorder %s29, 0
      %p226 = por %p224, %p225
      %p227 = scmp.ne.s32.totalorder %s215, %s216
      %p228 = scmp.eq.s32.totalorder %s30, 3
      %p229 = por %p227, %p228
      %p231 = scmp.ne.s32.totalorder %s216, %s230
      %p232 = scmp.eq.s32.totalorder %s30, 0
      %p233 = por %p231, %p232
      %s235 = sadd.s32 %s234, 1
      %p238 = scmp.eq.s32.totalorder %s24, 3
      %p239 = scmp.ne.s32.totalorder %s234, %s236
      %p240 = scmp.eq.s32.totalorder %s24, 0
      %p241 = por %p239, %p240
      %p242 = scmp.ne.s32.totalorder %s234, %s236
      %p243 = scmp.eq.s32.totalorder %s29, 3
      %p244 = por %p242, %p243
      %p245 = scmp.ne.s32.totalorder %s236, %s237
      %p246 = scmp.eq.s32.totalorder %s29, 0
      %p247 = por %p245, %p246
      %p248 = scmp.ne.s32.totalorder %s236, %s237
      %p249 = scmp.eq.s32.totalorder %s30, 3
      %p250 = por %p248, %p249
      %p252 = scmp.ne.s32.totalorder %s237, %s251
      %p253 = scmp.eq.s32.totalorder %s30, 0
      %p254 = por %p252, %p253
      %s256 = sadd.s32 %s255, 1
      %p259 = scmp.eq.s32.totalorder %s24, 3
      %p260 = scmp.ne.s32.totalorder %s255, %s257
      %p261 = scmp.eq.s32.totalorder %s24, 0
      %p262 = por %p260, %p261
      %p263 = scmp.ne.s32.totalorder %s255, %s257
      %p264 = scmp.eq.s32.totalorder %s29, 3
      %p265 = por %p263, %p264
      %p266 = scmp.ne.s32.totalorder %s257, %s258
      %p267 = scmp.eq.s32.totalorder %s29, 0
      %p268 = por %p266, %p267
      %p269 = scmp.ne.s32.totalorder %s257, %s258
      %p270 = scmp.eq.s32.totalorder %s30, 3
      %p271 = por %p269, %p270
      %p273 = scmp.ne.s32.totalorder %s258, %s272
      %p274 = scmp.eq.s32.totalorder %s30, 0
      %p275 = por %p273, %p274
      %s277 = sadd.s32 %s276, 1
      %p280 = scmp.eq.s32.totalorder %s24, 3
      %p281 = scmp.ne.s32.totalorder %s276, %s278
      %p282 = scmp.eq.s32.totalorder %s24, 0
      %p283 = por %p281, %p282
      %p284 = scmp.ne.s32.totalorder %s276, %s278
      %p285 = scmp.eq.s32.totalorder %s29, 3
      %p286 = por %p284, %p285
      %p287 = scmp.ne.s32.totalorder %s278, %s279
      %p288 = scmp.eq.s32.totalorder %s29, 0
      %p289 = por %p287, %p288
      %p290 = scmp.ne.s32.totalorder %s278, %s279
      %p291 = scmp.eq.s32.totalorder %s30, 3
      %p292 = por %p290, %p291
      %p294 = scmp.ne.s32.totalorder %s279, %s293
      %p295 = scmp.eq.s32.totalorder %s30, 0
      %p296 = por %p294, %p295
      %s298 = sadd.s32 %s297, 1
      %p301 = scmp.eq.s32.totalorder %s24, 3
      %p302 = scmp.ne.s32.totalorder %s297, %s299
      %p303 = scmp.eq.s32.totalorder %s24, 0
      %p304 = por %p302, %p303
      %p305 = scmp.ne.s32.totalorder %s297, %s299
      %p306 = scmp.eq.s32.totalorder %s29, 3
      %p307 = por %p305, %p306
      %p308 = scmp.ne.s32.totalorder %s299, %s300
      %p309 = scmp.eq.s32.totalorder %s29, 0
      %p310 = por %p308, %p309
      %p311 = scmp.ne.s32.totalorder %s299, %s300
      %p312 = scmp.eq.s32.totalorder %s30, 3
      %p313 = por %p311, %p312
      %p315 = scmp.ne.s32.totalorder %s300, %s314
      %p316 = scmp.eq.s32.totalorder %s30, 0
      %p317 = por %p315, %p316
      %s319 = sadd.s32 %s318, 1
      %p322 = scmp.eq.s32.totalorder %s24, 3
      %p323 = scmp.ne.s32.totalorder %s318, %s320
      %p324 = scmp.eq.s32.totalorder %s24, 0
      %p325 = por %p323, %p324
      %p326 = scmp.ne.s32.totalorder %s318, %s320
      %p327 = scmp.eq.s32.totalorder %s29, 3
      %p328 = por %p326, %p327
      %p329 = scmp.ne.s32.totalorder %s320, %s321
      %p330 = scmp.eq.s32.totalorder %s29, 0
      %p331 = por %p329, %p330
      %p332 = scmp.ne.s32.totalorder %s320, %s321
      %p333 = scmp.eq.s32.totalorder %s30, 3
      %p334 = por %p332, %p333
      %p336 = scmp.ne.s32.totalorder %s321, %s335
      %p337 = scmp.eq.s32.totalorder %s30, 0
      %p338 = por %p336, %p337
      %s340 = sadd.s32 %s339, 1
      %p343 = scmp.eq.s32.totalorder %s24, 3
      %p344 = scmp.ne.s32.totalorder %s339, %s341
      %p345 = scmp.eq.s32.totalorder %s24, 0
      %p346 = por %p344, %p345
      %p347 = scmp.ne.s32.totalorder %s339, %s341
      %p348 = scmp.eq.s32.totalorder %s29, 3
      %p349 = por %p347, %p348
      %p350 = scmp.ne.s32.totalorder %s341, %s342
      %p351 = scmp.eq.s32.totalorder %s29, 0
      %p352 = por %p350, %p351
      %p353 = scmp.ne.s32.totalorder %s341, %s342
      %p354 = scmp.eq.s32.totalorder %s30, 3
      %p355 = por %p353, %p354
      %p357 = scmp.ne.s32.totalorder %s342, %s356
      %p358 = scmp.eq.s32.totalorder %s30, 0
      %p359 = por %p357, %p358
      %s361 = sadd.s32 %s360, 1
      %p364 = scmp.eq.s32.totalorder %s24, 3
      %p365 = scmp.ne.s32.totalorder %s360, %s362
      %p366 = scmp.eq.s32.totalorder %s24, 0
      %p367 = por %p365, %p366
      %p368 = scmp.ne.s32.totalorder %s360, %s362
      %p369 = scmp.eq.s32.totalorder %s29, 3
      %p370 = por %p368, %p369
      %p371 = scmp.ne.s32.totalorder %s362, %s363
      %p372 = scmp.eq.s32.totalorder %s29, 0
      %p373 = por %p371, %p372
      %p374 = scmp.ne.s32.totalorder %s362, %s363
      %p375 = scmp.eq.s32.totalorder %s30, 3
      %p376 = por %p374, %p375
      %p378 = scmp.ne.s32.totalorder %s363, %s377
      %p379 = scmp.eq.s32.totalorder %s30, 0
      %p380 = por %p378, %p379
      %s381 = ssub.s32 %s31, %s43
      %s382 = ssub.s32 %s32, %s39
      %s383 = sor.u32 %s381, %s382
      %p384 = scmp.eq.s32.totalorder %s383, 0
      %s386 = sadd.s32 %s385, 1
      %s387 = scalar_select %p384, %s385, %s386
      %p390 = pneg %p384
      %p391 = scmp.eq.s32.totalorder %s24, 3
      %p392 = por %p390, %p391
      %p393 = scmp.ne.s32.totalorder %s385, %s388
      %p394 = scmp.eq.s32.totalorder %s24, 0
      %p395 = por %p393, %p394
      %p396 = scmp.ne.s32.totalorder %s385, %s388
      %p397 = scmp.eq.s32.totalorder %s29, 3
      %p398 = por %p396, %p397
      %p399 = scmp.ne.s32.totalorder %s388, %s389
      %p400 = scmp.eq.s32.totalorder %s29, 0
      %p401 = por %p399, %p400
      %p402 = scmp.ne.s32.totalorder %s388, %s389
      %p403 = scmp.eq.s32.totalorder %s30, 3
      %p404 = por %p402, %p403
      %p406 = scmp.ne.s32.totalorder %s389, %s405
      %p407 = scmp.eq.s32.totalorder %s30, 0
      %p408 = por %p406, %p407
      %p409 = scmp.le.s32.totalorder 1, %s24
      %p410 = scmp.lt.s32.totalorder %s24, 5
      %p411 = pnand %p409, %p410
      %p412 = pneg %p411
      // Predicated region
      $region9: #{spatial_ocr_pallas.3} parent=5 // pred_check
        _
      $region10: #{spatial_ocr_pallas.3} parent=5 // pred_check_branch
        %414 = sbr.rel (%p411) target = $region12
      $region11: #{spatial_ocr_pallas.3} parent=5 // pred_region
        %s415 = ssub.s32 %s24, 1
        // Predicated region
        $region13: #{spatial_ocr_pallas.3} parent=11 // pred_check
          %p416 = pneg %p163
        $region14: #{spatial_ocr_pallas.3} parent=11 // pred_check_branch
          %418 = sbr.rel (%p416) target = $region16
        $region15: #{spatial_ocr_pallas.3} parent=11 // pred_region
          _
        $region16: #{spatial_ocr_pallas.3} parent=11 // pred_fallthru
          _
        // Predicated region
        $region17: #{spatial_ocr_pallas.3} parent=11 // pred_check
          %p419 = pneg %p184
        $region18: #{spatial_ocr_pallas.3} parent=11 // pred_check_branch
          %421 = sbr.rel (%p419) target = $region20
        $region19: #{spatial_ocr_pallas.3} parent=11 // pred_region
          _
        $region20: #{spatial_ocr_pallas.3} parent=11 // pred_fallthru
          _
        // Predicated region
        $region21: #{spatial_ocr_pallas.3} parent=11 // pred_check
          %p422 = pneg %p205
        $region22: #{spatial_ocr_pallas.3} parent=11 // pred_check_branch
          %424 = sbr.rel (%p422) target = $region24
        $region23: #{spatial_ocr_pallas.3} parent=11 // pred_region
          _
        $region24: #{spatial_ocr_pallas.3} parent=11 // pred_fallthru
          _
        // Predicated region
        $region25: #{spatial_ocr_pallas.3} parent=11 // pred_check
          %p425 = pneg %p226
        $region26: #{spatial_ocr_pallas.3} parent=11 // pred_check_branch
          %427 = sbr.rel (%p425) target = $region28
        $region27: #{spatial_ocr_pallas.3} parent=11 // pred_region
          _
        $region28: #{spatial_ocr_pallas.3} parent=11 // pred_fallthru
          _
        // Predicated region
        $region29: #{spatial_ocr_pallas.3} parent=11 // pred_check
          %p428 = pneg %p247
        $region30: #{spatial_ocr_pallas.3} parent=11 // pred_check_branch
          %430 = sbr.rel (%p428) target = $region32
        $region31: #{spatial_ocr_pallas.3} parent=11 // pred_region
          _
        $region32: #{spatial_ocr_pallas.3} parent=11 // pred_fallthru
          _
        // Predicated region
        $region33: #{spatial_ocr_pallas.3} parent=11 // pred_check
          %p431 = pneg %p268
        $region34: #{spatial_ocr_pallas.3} parent=11 // pred_check_branch
          %433 = sbr.rel (%p431) target = $region36
        $region35: #{spatial_ocr_pallas.3} parent=11 // pred_region
          _
        $region36: #{spatial_ocr_pallas.3} parent=11 // pred_fallthru
          _
        // Predicated region
        $region37: #{spatial_ocr_pallas.3} parent=11 // pred_check
          %p434 = pneg %p289
        $region38: #{spatial_ocr_pallas.3} parent=11 // pred_check_branch
          %436 = sbr.rel (%p434) target = $region40
        $region39: #{spatial_ocr_pallas.3} parent=11 // pred_region
          _
        $region40: #{spatial_ocr_pallas.3} parent=11 // pred_fallthru
          _
        // Predicated region
        $region41: #{spatial_ocr_pallas.3} parent=11 // pred_check
          %p437 = pneg %p310
        $region42: #{spatial_ocr_pallas.3} parent=11 // pred_check_branch
          %439 = sbr.rel (%p437) target = $region44
        $region43: #{spatial_ocr_pallas.3} parent=11 // pred_region
          _
        $region44: #{spatial_ocr_pallas.3} parent=11 // pred_fallthru
          _
        // Predicated region
        $region45: #{spatial_ocr_pallas.3} parent=11 // pred_check
          %p440 = pneg %p331
        $region46: #{spatial_ocr_pallas.3} parent=11 // pred_check_branch
          %442 = sbr.rel (%p440) target = $region48
        $region47: #{spatial_ocr_pallas.3} parent=11 // pred_region
          _
        $region48: #{spatial_ocr_pallas.3} parent=11 // pred_fallthru
          _
        // Predicated region
        $region49: #{spatial_ocr_pallas.3} parent=11 // pred_check
          %p443 = pneg %p352
        $region50: #{spatial_ocr_pallas.3} parent=11 // pred_check_branch
          %445 = sbr.rel (%p443) target = $region52
        $region51: #{spatial_ocr_pallas.3} parent=11 // pred_region
          _
        $region52: #{spatial_ocr_pallas.3} parent=11 // pred_fallthru
          _
        // Predicated region
        $region53: #{spatial_ocr_pallas.3} parent=11 // pred_check
          %p446 = pneg %p373
        $region54: #{spatial_ocr_pallas.3} parent=11 // pred_check_branch
          %448 = sbr.rel (%p446) target = $region56
        $region55: #{spatial_ocr_pallas.3} parent=11 // pred_region
          _
        $region56: #{spatial_ocr_pallas.3} parent=11 // pred_fallthru
          _
      $region12: #{spatial_ocr_pallas.3} parent=5 // pred_fallthru
        _
      %p449 = scmp.lt.s32.totalorder %s24, 4
      // Predicated region
      $region57: #{spatial_ocr_pallas.3} parent=5 // pred_check
        %p450 = pneg %p449
      $region58: #{spatial_ocr_pallas.3} parent=5 // pred_check_branch
        %452 = sbr.rel (%p450) target = $region60
      $region59: #{spatial_ocr_pallas.3} parent=5 // pred_region
        // Predicated region
        $region61: #{spatial_ocr_pallas.3} parent=59 // pred_check
          %p453 = pneg %p56
        $region62: #{spatial_ocr_pallas.3} parent=59 // pred_check_branch
          %455 = sbr.rel (%p453) target = $region64
        $region63: #{spatial_ocr_pallas.3} parent=59 // pred_region
          %p456 = scmp.lt.s32.totalorder %s31, 1
          %s457 = scalar_select %p456, %s31, 1
          %s458 = scalar_lea.vmem %s0, %s457
        $region64: #{spatial_ocr_pallas.3} parent=59 // pred_fallthru
          _
        // Predicated region
        $region65: #{spatial_ocr_pallas.3} parent=59 // pred_check
          %p459 = pneg %p82
        $region66: #{spatial_ocr_pallas.3} parent=59 // pred_check_branch
          %461 = sbr.rel (%p459) target = $region68
        $region67: #{spatial_ocr_pallas.3} parent=59 // pred_region
          %p462 = scmp.lt.s32.totalorder %s31, 1
          %s463 = scalar_select %p462, %s31, 1
          %s464 = smul.addr %s463, 8
          %s465 = scalar_lea.vmem %s1, %s464
        $region68: #{spatial_ocr_pallas.3} parent=59 // pred_fallthru
          _
        // Predicated region
        $region69: #{spatial_ocr_pallas.3} parent=59 // pred_check
          %p466 = pneg %p110
        $region70: #{spatial_ocr_pallas.3} parent=59 // pred_check_branch
          %468 = sbr.rel (%p466) target = $region72
        $region71: #{spatial_ocr_pallas.3} parent=59 // pred_region
          %s469 = smul.u32 64, %s32
          %p470 = scmp.lt.s32.totalorder %s31, 1
          %s471 = scalar_select %p470, %s31, 1
          %p472 = scmp.lt.s32.totalorder %s469, 127
          %s473 = scalar_select %p472, %s469, 127
          %s474 = smul.addr %s471, 128
          %s475 = sadd.s32 %s473, %s474
          %s476 = smul.addr %s475, 4
          %s477 = scalar_lea.vmem %s2, %s476
          %s478 = smul.u32 64, %s32
        $region72: #{spatial_ocr_pallas.3} parent=59 // pred_fallthru
          _
        // Predicated region
        $region73: #{spatial_ocr_pallas.3} parent=59 // pred_check
          %p479 = pneg %p136
        $region74: #{spatial_ocr_pallas.3} parent=59 // pred_check_branch
          %481 = sbr.rel (%p479) target = $region76
        $region75: #{spatial_ocr_pallas.3} parent=59 // pred_region
          %p482 = scmp.lt.s32.totalorder %s31, 1
          %s483 = scalar_select %p482, %s31, 1
          %s484 = smul.addr %s483, 4
          %s485 = scalar_lea.vmem %s3, %s484
        $region76: #{spatial_ocr_pallas.3} parent=59 // pred_fallthru
          _
      $region60: #{spatial_ocr_pallas.3} parent=5 // pred_fallthru
        _
      %p486 = scmp.le.s32.totalorder 1, %s24
      %p487 = scmp.lt.s32.totalorder %s24, 5
      %p488 = pnand %p486, %p487
      %p489 = pneg %p488
      // Predicated region
      $region77: #{spatial_ocr_pallas.3} parent=5 // pred_check
        _
      $region78: #{spatial_ocr_pallas.3} parent=5 // pred_check_branch
        %491 = sbr.rel (%p488) target = $region80
      $region79: #{spatial_ocr_pallas.3} parent=5 // pred_region
        %s492 = ssub.s32 %s24, 1
        %p493 = scmp.lt.s32.totalorder %s33, 1
        %s494 = scalar_select %p493, %s33, 1
        %s495 = scalar_lea.vmem %s0, %s494
        %p496 = pneg %p62
        %p497 = pneg %p59
        %p498 = scmp.lt.s32.totalorder %s33, 1
        %s499 = scalar_select %p498, %s33, 1
        %s500 = smul.addr %s499, 8
        %s501 = scalar_lea.vmem %s1, %s500
        %p502 = pneg %p88
        %p503 = pneg %p85
        %s504 = smul.u32 64, %s34
        %p505 = scmp.lt.s32.totalorder %s33, 1
        %s506 = scalar_select %p505, %s33, 1
        %p507 = scmp.lt.s32.totalorder %s504, 127
        %s508 = scalar_select %p507, %s504, 127
        %s509 = smul.addr %s506, 128
        %s510 = sadd.s32 %s508, %s509
        %s511 = smul.addr %s510, 4
        %s512 = scalar_lea.vmem %s2, %s511
        %p513 = pneg %p116
        %p514 = pneg %p113
        %p515 = scmp.lt.s32.totalorder %s33, 1
        %s516 = scalar_select %p515, %s33, 1
        %s517 = smul.addr %s516, 4
        %s518 = scalar_lea.vmem %s3, %s517
        %p519 = pneg %p142
        %p520 = pneg %p139
        %p521 = pneg %p163
        %p522 = pneg %p160
        %p523 = pneg %p184
        %p524 = pneg %p181
        %p525 = pneg %p205
        %p526 = pneg %p202
        %p527 = pneg %p226
        %p528 = pneg %p223
        %p529 = pneg %p247
        %p530 = pneg %p244
        %p531 = pneg %p268
        %p532 = pneg %p265
        %p533 = pneg %p289
        %p534 = pneg %p286
        %p535 = pneg %p310
        %p536 = pneg %p307
        %p537 = pneg %p331
        %p538 = pneg %p328
        %p539 = pneg %p352
        %p540 = pneg %p349
        %p541 = pneg %p373
        %p542 = pneg %p370
        %p543 = pneg %p401
        %p544 = pneg %p398
        %s545 = sand.u32 %s388, 1
        %s546 = scalar_lea.sflag [#allocation3], %s545
        %s547 = sand.u32 %s388, 1
        %s548 = smul.addr %s547, 512
        %s549 = scalar_lea.vmem [#allocation2], %s548
        %p550 = scmp.lt.s32.totalorder %s33, 1
        %s551 = scalar_select %p550, %s33, 1
        %s552 = scalar_lea.vmem %s0, %s551
        %p553 = scmp.lt.s32.totalorder %s33, 1
        %s554 = scalar_select %p553, %s33, 1
        %s555 = smul.addr %s554, 8
        %s556 = scalar_lea.vmem %s1, %s555
        %s557 = smul.u32 64, %s34
        %p558 = scmp.lt.s32.totalorder %s33, 1
        %s559 = scalar_select %p558, %s33, 1
        %p560 = scmp.lt.s32.totalorder %s557, 127
        %s561 = scalar_select %p560, %s557, 127
        %s562 = smul.addr %s559, 128
        %s563 = sadd.s32 %s561, %s562
        %s564 = smul.addr %s563, 4
        %s565 = scalar_lea.vmem %s2, %s564
        %s566 = smul.u32 64, %s34
        %p567 = scmp.lt.s32.totalorder %s33, 1
        %s568 = scalar_select %p567, %s33, 1
        %s569 = smul.addr %s568, 4
        %s570 = scalar_lea.vmem %s3, %s569
        %s571 = smul.u32 64, %s34
        %v573 = vld [vmem:[%s565] sm:$0xf]
        %v574 = vld [vmem:[%s565 + $0x4] sm:$0xf]
        %v575 = vld [vmem:[%s565 + $0x8] sm:$0xf]
        %v576 = vld [vmem:[%s565 + $0xc] sm:$0xf]
        %v577 = vld [vmem:[%s565 + $0x10] sm:$0xf]
        %v578 = vld [vmem:[%s565 + $0x14] sm:$0xf]
        %v579 = vld [vmem:[%s565 + $0x18] sm:$0xf]
        %v580 = vld [vmem:[%s565 + $0x1c] sm:$0xf]
        %v581 = vld [vmem:[%s565 + $0x20] sm:$0xf]
        %v582 = vld [vmem:[%s565 + $0x24] sm:$0xf]
        %v583 = vld [vmem:[%s565 + $0x28] sm:$0xf]
        %v584 = vld [vmem:[%s565 + $0x2c] sm:$0xf]
        %v585 = vld [vmem:[%s565 + $0x30] sm:$0xf]
        %v586 = vld [vmem:[%s565 + $0x34] sm:$0xf]
        %v587 = vld [vmem:[%s565 + $0x38] sm:$0xf]
        %v588 = vld [vmem:[%s565 + $0x3c] sm:$0xf]
        %v589 = vld [vmem:[%s565 + $0x40] sm:$0xf]
        %v590 = vld [vmem:[%s565 + $0x44] sm:$0xf]
        %v591 = vld [vmem:[%s565 + $0x48] sm:$0xf]
        %v592 = vld [vmem:[%s565 + $0x4c] sm:$0xf]
        %v593 = vld [vmem:[%s565 + $0x50] sm:$0xf]
        %v594 = vld [vmem:[%s565 + $0x54] sm:$0xf]
        %v595 = vld [vmem:[%s565 + $0x58] sm:$0xf]
        %v596 = vld [vmem:[%s565 + $0x5c] sm:$0xf]
        %v597 = vld [vmem:[%s565 + $0x60] sm:$0xf]
        %v598 = vld [vmem:[%s565 + $0x64] sm:$0xf]
        %v599 = vld [vmem:[%s565 + $0x68] sm:$0xf]
        %v600 = vld [vmem:[%s565 + $0x6c] sm:$0xf]
        %v601 = vld [vmem:[%s565 + $0x70] sm:$0xf]
        %v602 = vld [vmem:[%s565 + $0x74] sm:$0xf]
        %v603 = vld [vmem:[%s565 + $0x78] sm:$0xf]
        %v604 = vld [vmem:[%s565 + $0x7c] sm:$0xf]
        %v605 = vld [vmem:[%s565 + $0x80] sm:$0xf]
        %v606 = vld [vmem:[%s565 + $0x84] sm:$0xf]
        %v607 = vld [vmem:[%s565 + $0x88] sm:$0xf]
        %v608 = vld [vmem:[%s565 + $0x8c] sm:$0xf]
        %v609 = vld [vmem:[%s565 + $0x90] sm:$0xf]
        %v610 = vld [vmem:[%s565 + $0x94] sm:$0xf]
        %v611 = vld [vmem:[%s565 + $0x98] sm:$0xf]
        %v612 = vld [vmem:[%s565 + $0x9c] sm:$0xf]
        %v613 = vld [vmem:[%s565 + $0xa0] sm:$0xf]
        %v614 = vld [vmem:[%s565 + $0xa4] sm:$0xf]
        %v615 = vld [vmem:[%s565 + $0xa8] sm:$0xf]
        %v616 = vld [vmem:[%s565 + $0xac] sm:$0xf]
        %v617 = vld [vmem:[%s565 + $0xb0] sm:$0xf]
        %v618 = vld [vmem:[%s565 + $0xb4] sm:$0xf]
        %v619 = vld [vmem:[%s565 + $0xb8] sm:$0xf]
        %v620 = vld [vmem:[%s565 + $0xbc] sm:$0xf]
        %v621 = vld [vmem:[%s565 + $0xc0] sm:$0xf]
        %v622 = vld [vmem:[%s565 + $0xc4] sm:$0xf]
        %v623 = vld [vmem:[%s565 + $0xc8] sm:$0xf]
        %v624 = vld [vmem:[%s565 + $0xcc] sm:$0xf]
        %v625 = vld [vmem:[%s565 + $0xd0] sm:$0xf]
        %v626 = vld [vmem:[%s565 + $0xd4] sm:$0xf]
        %v627 = vld [vmem:[%s565 + $0xd8] sm:$0xf]
        %v628 = vld [vmem:[%s565 + $0xdc] sm:$0xf]
        %v629 = vld [vmem:[%s565 + $0xe0] sm:$0xf]
        %v630 = vld [vmem:[%s565 + $0xe4] sm:$0xf]
        %v631 = vld [vmem:[%s565 + $0xe8] sm:$0xf]
        %v632 = vld [vmem:[%s565 + $0xec] sm:$0xf]
        %v633 = vld [vmem:[%s565 + $0xf0] sm:$0xf]
        %v634 = vld [vmem:[%s565 + $0xf4] sm:$0xf]
        %v635 = vld [vmem:[%s565 + $0xf8] sm:$0xf]
        %v636 = vld [vmem:[%s565 + $0xfc] sm:$0xf]
        %v637 = vld [vmem:[%s570] sm:$0xf]
        %v638 = vld [vmem:[%s4] sm:$0xf]
        %v639 = vld [vmem:[%s4 + $0x4] sm:$0xf]
        %v640 = vld [vmem:[%s4 + $0x8] sm:$0xf]
        %v641 = vld [vmem:[%s4 + $0xc] sm:$0xf]
        %v642 = vld [vmem:[%s4 + $0x10] sm:$0xf]
        %v643 = vld [vmem:[%s4 + $0x14] sm:$0xf]
        %v644 = vld [vmem:[%s4 + $0x18] sm:$0xf]
        %v645 = vld [vmem:[%s4 + $0x1c] sm:$0xf]
        %v646 = vld [vmem:[%s4 + $0x20] sm:$0xf]
        %v647 = vld [vmem:[%s4 + $0x24] sm:$0xf]
        %v648 = vld [vmem:[%s4 + $0x28] sm:$0xf]
        %v649 = vld [vmem:[%s4 + $0x2c] sm:$0xf]
        %v650 = vld [vmem:[%s4 + $0x30] sm:$0xf]
        %v651 = vld [vmem:[%s4 + $0x34] sm:$0xf]
        %v652 = vld [vmem:[%s4 + $0x38] sm:$0xf]
        %v653 = vld [vmem:[%s4 + $0x3c] sm:$0xf]
        %v654 = vld [vmem:[%s5] sm:$0x1]
        %v656 = vperm.slane %v654, 0
        %v722 = vunpack.c.l.b16 %v573
        %v723 = vunpack.c.l.b16 %v574
        %v724 = vunpack.c.l.b16 %v575
        %v725 = vunpack.c.l.b16 %v576
        %v726 = vunpack.c.l.b16 %v577
        %v727 = vunpack.c.l.b16 %v578
        %v728 = vunpack.c.l.b16 %v579
        %v729 = vunpack.c.l.b16 %v580
        %v730 = vunpack.c.l.b16 %v581
        %v731 = vunpack.c.l.b16 %v582
        %v732 = vunpack.c.l.b16 %v583
        %v733 = vunpack.c.l.b16 %v584
        %v734 = vunpack.c.l.b16 %v585
        %v735 = vunpack.c.l.b16 %v586
        %v736 = vunpack.c.l.b16 %v587
        %v737 = vunpack.c.l.b16 %v588
        %v738 = vunpack.c.l.b16 %v589
        %v739 = vunpack.c.l.b16 %v590
        %v740 = vunpack.c.l.b16 %v591
        %v741 = vunpack.c.l.b16 %v592
        %v742 = vunpack.c.l.b16 %v593
        %v743 = vunpack.c.l.b16 %v594
        %v744 = vunpack.c.l.b16 %v595
        %v745 = vunpack.c.l.b16 %v596
        %v746 = vunpack.c.l.b16 %v597
        %v747 = vunpack.c.l.b16 %v598
        %v748 = vunpack.c.l.b16 %v599
        %v749 = vunpack.c.l.b16 %v600
        %v750 = vunpack.c.l.b16 %v601
        %v751 = vunpack.c.l.b16 %v602
        %v752 = vunpack.c.l.b16 %v603
        %v753 = vunpack.c.l.b16 %v604
        %v754 = vunpack.c.l.b16 %v605
        %v755 = vunpack.c.l.b16 %v606
        %v756 = vunpack.c.l.b16 %v607
        %v757 = vunpack.c.l.b16 %v608
        %v758 = vunpack.c.l.b16 %v609
        %v759 = vunpack.c.l.b16 %v610
        %v760 = vunpack.c.l.b16 %v611
        %v761 = vunpack.c.l.b16 %v612
        %v762 = vunpack.c.l.b16 %v613
        %v763 = vunpack.c.l.b16 %v614
        %v764 = vunpack.c.l.b16 %v615
        %v765 = vunpack.c.l.b16 %v616
        %v766 = vunpack.c.l.b16 %v617
        %v767 = vunpack.c.l.b16 %v618
        %v768 = vunpack.c.l.b16 %v619
        %v769 = vunpack.c.l.b16 %v620
        %v770 = vunpack.c.l.b16 %v621
        %v771 = vunpack.c.l.b16 %v622
        %v772 = vunpack.c.l.b16 %v623
        %v773 = vunpack.c.l.b16 %v624
        %v774 = vunpack.c.l.b16 %v625
        %v775 = vunpack.c.l.b16 %v626
        %v776 = vunpack.c.l.b16 %v627
        %v777 = vunpack.c.l.b16 %v628
        %v778 = vunpack.c.l.b16 %v629
        %v779 = vunpack.c.l.b16 %v630
        %v780 = vunpack.c.l.b16 %v631
        %v781 = vunpack.c.l.b16 %v632
        %v782 = vunpack.c.l.b16 %v633
        %v783 = vunpack.c.l.b16 %v634
        %v784 = vunpack.c.l.b16 %v635
        %v785 = vunpack.c.l.b16 %v636
        %v786 = vpack.c.b16 %v723, %v722
        %v787 = vpack.c.b16 %v725, %v724
        %v788 = vpack.c.b16 %v727, %v726
        %v789 = vpack.c.b16 %v729, %v728
        %v790 = vpack.c.b16 %v731, %v730
        %v791 = vpack.c.b16 %v733, %v732
        %v792 = vpack.c.b16 %v735, %v734
        %v793 = vpack.c.b16 %v737, %v736
        %v794 = vpack.c.b16 %v739, %v738
        %v795 = vpack.c.b16 %v741, %v740
        %v796 = vpack.c.b16 %v743, %v742
        %v797 = vpack.c.b16 %v745, %v744
        %v798 = vpack.c.b16 %v747, %v746
        %v799 = vpack.c.b16 %v749, %v748
        %v800 = vpack.c.b16 %v751, %v750
        %v801 = vpack.c.b16 %v753, %v752
        %v802 = vpack.c.b16 %v755, %v754
        %v803 = vpack.c.b16 %v757, %v756
        %v804 = vpack.c.b16 %v759, %v758
        %v805 = vpack.c.b16 %v761, %v760
        %v806 = vpack.c.b16 %v763, %v762
        %v807 = vpack.c.b16 %v765, %v764
        %v808 = vpack.c.b16 %v767, %v766
        %v809 = vpack.c.b16 %v769, %v768
        %v810 = vpack.c.b16 %v771, %v770
        %v811 = vpack.c.b16 %v773, %v772
        %v812 = vpack.c.b16 %v775, %v774
        %v813 = vpack.c.b16 %v777, %v776
        %v814 = vpack.c.b16 %v779, %v778
        %v815 = vpack.c.b16 %v781, %v780
        %v816 = vpack.c.b16 %v783, %v782
        %v817 = vpack.c.b16 %v785, %v784
        %v866 = vunpack.c.l.b16 %v638
        %v867 = vunpack.c.l.b16 %v639
        %v868 = vunpack.c.l.b16 %v640
        %v869 = vunpack.c.l.b16 %v641
        %v870 = vunpack.c.l.b16 %v642
        %v871 = vunpack.c.l.b16 %v643
        %v872 = vunpack.c.l.b16 %v644
        %v873 = vunpack.c.l.b16 %v645
        %v874 = vunpack.c.l.b16 %v646
        %v875 = vunpack.c.l.b16 %v647
        %v876 = vunpack.c.l.b16 %v648
        %v877 = vunpack.c.l.b16 %v649
        %v878 = vunpack.c.l.b16 %v650
        %v879 = vunpack.c.l.b16 %v651
        %v880 = vunpack.c.l.b16 %v652
        %v881 = vunpack.c.l.b16 %v653
        %v882 = vpack.c.b16 %v867, %v866
        %v883 = vpack.c.b16 %v869, %v868
        %v884 = vpack.c.b16 %v871, %v870
        %v885 = vpack.c.b16 %v873, %v872
        %v886 = vpack.c.b16 %v875, %v874
        %v887 = vpack.c.b16 %v877, %v876
        %v888 = vpack.c.b16 %v879, %v878
        %v889 = vpack.c.b16 %v881, %v880
        %898 = vmatpush.bf16.msra.mxu0 %v889
        %899 = vmatpush.bf16.msra.mxu0 %v888
        %900 = vmatpush.bf16.msra.mxu0 %v887
        %901 = vmatpush.bf16.msra.mxu0 %v886
        %902 = vmatpush.bf16.msra.mxu0 %v885
        %903 = vmatpush.bf16.msra.mxu0 %v884
        %904 = vmatpush.bf16.msra.mxu0 %v883
        %905 = vmatpush.bf16.msra.mxu0 %v882
        %906 = vmatmul.bf16.gmra.mxu0 %v786
        %v907 = vpop.f32.mrf.mxu0
        %v908 = vadd.f32 %v656, %v907
        %v909 = vpop.f32.mrf.mxu0
        %v910 = vadd.f32 %v656, %v909
        %911 = vmatmul.bf16.gmra.mxu0 %v787
        %v912 = vpop.f32.mrf.mxu0
        %v913 = vadd.f32 %v656, %v912
        %v914 = vpop.f32.mrf.mxu0
        %v915 = vadd.f32 %v656, %v914
        %916 = vmatmul.bf16.gmra.mxu0 %v788
        %v917 = vpop.f32.mrf.mxu0
        %v918 = vadd.f32 %v656, %v917
        %v919 = vpop.f32.mrf.mxu0
        %v920 = vadd.f32 %v656, %v919
        %921 = vmatmul.bf16.gmra.mxu0 %v789
        %v922 = vpop.f32.mrf.mxu0
        %v923 = vadd.f32 %v656, %v922
        %v924 = vpop.f32.mrf.mxu0
        %v925 = vadd.f32 %v656, %v924
        %926 = vmatmul.bf16.gmra.mxu0 %v790
        %v927 = vpop.f32.mrf.mxu0
        %v928 = vadd.f32 %v656, %v927
        %v929 = vpop.f32.mrf.mxu0
        %v930 = vadd.f32 %v656, %v929
        %931 = vmatmul.bf16.gmra.mxu0 %v791
        %v932 = vpop.f32.mrf.mxu0
        %v933 = vadd.f32 %v656, %v932
        %v934 = vpop.f32.mrf.mxu0
        %v935 = vadd.f32 %v656, %v934
        %936 = vmatmul.bf16.gmra.mxu0 %v792
        %v937 = vpop.f32.mrf.mxu0
        %v938 = vadd.f32 %v656, %v937
        %v939 = vpop.f32.mrf.mxu0
        %v940 = vadd.f32 %v656, %v939
        %941 = vmatmul.bf16.gmra.mxu0 %v793
        %v942 = vpop.f32.mrf.mxu0
        %v943 = vadd.f32 %v656, %v942
        %v944 = vpop.f32.mrf.mxu0
        %v945 = vadd.f32 %v656, %v944
        %946 = vmatmul.bf16.gmra.mxu0 %v794
        %v947 = vpop.f32.mrf.mxu0
        %v948 = vadd.f32 %v656, %v947
        %v949 = vpop.f32.mrf.mxu0
        %v950 = vadd.f32 %v656, %v949
        %951 = vmatmul.bf16.gmra.mxu0 %v795
        %v952 = vpop.f32.mrf.mxu0
        %v953 = vadd.f32 %v656, %v952
        %v954 = vpop.f32.mrf.mxu0
        %v955 = vadd.f32 %v656, %v954
        %956 = vmatmul.bf16.gmra.mxu0 %v796
        %v957 = vpop.f32.mrf.mxu0
        %v958 = vadd.f32 %v656, %v957
        %v959 = vpop.f32.mrf.mxu0
        %v960 = vadd.f32 %v656, %v959
        %961 = vmatmul.bf16.gmra.mxu0 %v797
        %v962 = vpop.f32.mrf.mxu0
        %v963 = vadd.f32 %v656, %v962
        %v964 = vpop.f32.mrf.mxu0
        %v965 = vadd.f32 %v656, %v964
        %966 = vmatmul.bf16.gmra.mxu0 %v798
        %v967 = vpop.f32.mrf.mxu0
        %v968 = vadd.f32 %v656, %v967
        %v969 = vpop.f32.mrf.mxu0
        %v970 = vadd.f32 %v656, %v969
        %971 = vmatmul.bf16.gmra.mxu0 %v799
        %v972 = vpop.f32.mrf.mxu0
        %v973 = vadd.f32 %v656, %v972
        %v974 = vpop.f32.mrf.mxu0
        %v975 = vadd.f32 %v656, %v974
        %976 = vmatmul.bf16.gmra.mxu0 %v800
        %v977 = vpop.f32.mrf.mxu0
        %v978 = vadd.f32 %v656, %v977
        %v979 = vpop.f32.mrf.mxu0
        %v980 = vadd.f32 %v656, %v979
        %981 = vmatmul.bf16.gmra.mxu0 %v801
        %v982 = vpop.f32.mrf.mxu0
        %v983 = vadd.f32 %v656, %v982
        %v984 = vpop.f32.mrf.mxu0
        %v985 = vadd.f32 %v656, %v984
        %986 = vmatmul.bf16.gmra.mxu0 %v802
        %v987 = vpop.f32.mrf.mxu0
        %v988 = vadd.f32 %v656, %v987
        %v989 = vpop.f32.mrf.mxu0
        %v990 = vadd.f32 %v656, %v989
        %991 = vmatmul.bf16.gmra.mxu0 %v803
        %v992 = vpop.f32.mrf.mxu0
        %v993 = vadd.f32 %v656, %v992
        %v994 = vpop.f32.mrf.mxu0
        %v995 = vadd.f32 %v656, %v994
        %996 = vmatmul.bf16.gmra.mxu0 %v804
        %v997 = vpop.f32.mrf.mxu0
        %v998 = vadd.f32 %v656, %v997
        %v999 = vpop.f32.mrf.mxu0
        %v1000 = vadd.f32 %v656, %v999
        %1001 = vmatmul.bf16.gmra.mxu0 %v805
        %v1002 = vpop.f32.mrf.mxu0
        %v1003 = vadd.f32 %v656, %v1002
        %v1004 = vpop.f32.mrf.mxu0
        %v1005 = vadd.f32 %v656, %v1004
        %1006 = vmatmul.bf16.gmra.mxu0 %v806
        %v1007 = vpop.f32.mrf.mxu0
        %v1008 = vadd.f32 %v656, %v1007
        %v1009 = vpop.f32.mrf.mxu0
        %v1010 = vadd.f32 %v656, %v1009
        %1011 = vmatmul.bf16.gmra.mxu0 %v807
        %v1012 = vpop.f32.mrf.mxu0
        %v1013 = vadd.f32 %v656, %v1012
        %v1014 = vpop.f32.mrf.mxu0
        %v1015 = vadd.f32 %v656, %v1014
        %1016 = vmatmul.bf16.gmra.mxu0 %v808
        %v1017 = vpop.f32.mrf.mxu0
        %v1018 = vadd.f32 %v656, %v1017
        %v1019 = vpop.f32.mrf.mxu0
        %v1020 = vadd.f32 %v656, %v1019
        %1021 = vmatmul.bf16.gmra.mxu0 %v809
        %v1022 = vpop.f32.mrf.mxu0
        %v1023 = vadd.f32 %v656, %v1022
        %v1024 = vpop.f32.mrf.mxu0
        %v1025 = vadd.f32 %v656, %v1024
        %1026 = vmatmul.bf16.gmra.mxu0 %v810
        %v1027 = vpop.f32.mrf.mxu0
        %v1028 = vadd.f32 %v656, %v1027
        %v1029 = vpop.f32.mrf.mxu0
        %v1030 = vadd.f32 %v656, %v1029
        %1031 = vmatmul.bf16.gmra.mxu0 %v811
        %v1032 = vpop.f32.mrf.mxu0
        %v1033 = vadd.f32 %v656, %v1032
        %v1034 = vpop.f32.mrf.mxu0
        %v1035 = vadd.f32 %v656, %v1034
        %1036 = vmatmul.bf16.gmra.mxu0 %v812
        %v1037 = vpop.f32.mrf.mxu0
        %v1038 = vadd.f32 %v656, %v1037
        %v1039 = vpop.f32.mrf.mxu0
        %v1040 = vadd.f32 %v656, %v1039
        %1041 = vmatmul.bf16.gmra.mxu0 %v813
        %v1042 = vpop.f32.mrf.mxu0
        %v1043 = vadd.f32 %v656, %v1042
        %v1044 = vpop.f32.mrf.mxu0
        %v1045 = vadd.f32 %v656, %v1044
        %1046 = vmatmul.bf16.gmra.mxu0 %v814
        %v1047 = vpop.f32.mrf.mxu0
        %v1048 = vadd.f32 %v656, %v1047
        %v1049 = vpop.f32.mrf.mxu0
        %v1050 = vadd.f32 %v656, %v1049
        %1051 = vmatmul.bf16.gmra.mxu0 %v815
        %v1052 = vpop.f32.mrf.mxu0
        %v1053 = vadd.f32 %v656, %v1052
        %v1054 = vpop.f32.mrf.mxu0
        %v1055 = vadd.f32 %v656, %v1054
        %1056 = vmatmul.bf16.gmra.mxu0 %v816
        %v1057 = vpop.f32.mrf.mxu0
        %v1058 = vadd.f32 %v656, %v1057
        %v1059 = vpop.f32.mrf.mxu0
        %v1060 = vadd.f32 %v656, %v1059
        %1061 = vmatmul.bf16.gmra.mxu0 %v817
        %v1062 = vpop.f32.mrf.mxu0
        %v1063 = vadd.f32 %v656, %v1062
        %v1064 = vpop.f32.mrf.mxu0
        %v1065 = vadd.f32 %v656, %v1064
        %1066 = vdwg.mxu0
        %v1067 = vmax.f32 %v908, 0.0
        %v1068 = vmax.f32 %v910, 0.0
        %v1069 = vmax.f32 %v913, 0.0
        %v1070 = vmax.f32 %v915, 0.0
        %v1071 = vmax.f32 %v918, 0.0
        %v1072 = vmax.f32 %v920, 0.0
        %v1073 = vmax.f32 %v923, 0.0
        %v1074 = vmax.f32 %v925, 0.0
        %v1075 = vmax.f32 %v928, 0.0
        %v1076 = vmax.f32 %v930, 0.0
        %v1077 = vmax.f32 %v933, 0.0
        %v1078 = vmax.f32 %v935, 0.0
        %v1079 = vmax.f32 %v938, 0.0
        %v1080 = vmax.f32 %v940, 0.0
        %v1081 = vmax.f32 %v943, 0.0
        %v1082 = vmax.f32 %v945, 0.0
        %v1083 = vmax.f32 %v948, 0.0
        %v1084 = vmax.f32 %v950, 0.0
        %v1085 = vmax.f32 %v953, 0.0
        %v1086 = vmax.f32 %v955, 0.0
        %v1087 = vmax.f32 %v958, 0.0
        %v1088 = vmax.f32 %v960, 0.0
        %v1089 = vmax.f32 %v963, 0.0
        %v1090 = vmax.f32 %v965, 0.0
        %v1091 = vmax.f32 %v968, 0.0
        %v1092 = vmax.f32 %v970, 0.0
        %v1093 = vmax.f32 %v973, 0.0
        %v1094 = vmax.f32 %v975, 0.0
        %v1095 = vmax.f32 %v978, 0.0
        %v1096 = vmax.f32 %v980, 0.0
        %v1097 = vmax.f32 %v983, 0.0
        %v1098 = vmax.f32 %v985, 0.0
        %v1099 = vmax.f32 %v988, 0.0
        %v1100 = vmax.f32 %v990, 0.0
        %v1101 = vmax.f32 %v993, 0.0
        %v1102 = vmax.f32 %v995, 0.0
        %v1103 = vmax.f32 %v998, 0.0
        %v1104 = vmax.f32 %v1000, 0.0
        %v1105 = vmax.f32 %v1003, 0.0
        %v1106 = vmax.f32 %v1005, 0.0
        %v1107 = vmax.f32 %v1008, 0.0
        %v1108 = vmax.f32 %v1010, 0.0
        %v1109 = vmax.f32 %v1013, 0.0
        %v1110 = vmax.f32 %v1015, 0.0
        %v1111 = vmax.f32 %v1018, 0.0
        %v1112 = vmax.f32 %v1020, 0.0
        %v1113 = vmax.f32 %v1023, 0.0
        %v1114 = vmax.f32 %v1025, 0.0
        %v1115 = vmax.f32 %v1028, 0.0
        %v1116 = vmax.f32 %v1030, 0.0
        %v1117 = vmax.f32 %v1033, 0.0
        %v1118 = vmax.f32 %v1035, 0.0
        %v1119 = vmax.f32 %v1038, 0.0
        %v1120 = vmax.f32 %v1040, 0.0
        %v1121 = vmax.f32 %v1043, 0.0
        %v1122 = vmax.f32 %v1045, 0.0
        %v1123 = vmax.f32 %v1048, 0.0
        %v1124 = vmax.f32 %v1050, 0.0
        %v1125 = vmax.f32 %v1053, 0.0
        %v1126 = vmax.f32 %v1055, 0.0
        %v1127 = vmax.f32 %v1058, 0.0
        %v1128 = vmax.f32 %v1060, 0.0
        %v1129 = vmax.f32 %v1063, 0.0
        %v1130 = vmax.f32 %v1065, 0.0
        %v1131 = vpack.c.bf16 %v1068, %v1067
        %v1132 = vpack.c.bf16 %v1070, %v1069
        %v1133 = vpack.c.bf16 %v1072, %v1071
        %v1134 = vpack.c.bf16 %v1074, %v1073
        %v1135 = vpack.c.bf16 %v1076, %v1075
        %v1136 = vpack.c.bf16 %v1078, %v1077
        %v1137 = vpack.c.bf16 %v1080, %v1079
        %v1138 = vpack.c.bf16 %v1082, %v1081
        %v1139 = vpack.c.bf16 %v1084, %v1083
        %v1140 = vpack.c.bf16 %v1086, %v1085
        %v1141 = vpack.c.bf16 %v1088, %v1087
        %v1142 = vpack.c.bf16 %v1090, %v1089
        %v1143 = vpack.c.bf16 %v1092, %v1091
        %v1144 = vpack.c.bf16 %v1094, %v1093
        %v1145 = vpack.c.bf16 %v1096, %v1095
        %v1146 = vpack.c.bf16 %v1098, %v1097
        %v1147 = vpack.c.bf16 %v1100, %v1099
        %v1148 = vpack.c.bf16 %v1102, %v1101
        %v1149 = vpack.c.bf16 %v1104, %v1103
        %v1150 = vpack.c.bf16 %v1106, %v1105
        %v1151 = vpack.c.bf16 %v1108, %v1107
        %v1152 = vpack.c.bf16 %v1110, %v1109
        %v1153 = vpack.c.bf16 %v1112, %v1111
        %v1154 = vpack.c.bf16 %v1114, %v1113
        %v1155 = vpack.c.bf16 %v1116, %v1115
        %v1156 = vpack.c.bf16 %v1118, %v1117
        %v1157 = vpack.c.bf16 %v1120, %v1119
        %v1158 = vpack.c.bf16 %v1122, %v1121
        %v1159 = vpack.c.bf16 %v1124, %v1123
        %v1160 = vpack.c.bf16 %v1126, %v1125
        %v1161 = vpack.c.bf16 %v1128, %v1127
        %v1162 = vpack.c.bf16 %v1130, %v1129
        %v1163 = vld [vmem:[%s6] sm:$0xf]
        %v1164 = vld [vmem:[%s6 + $0x4] sm:$0xf]
        %v1165 = vld [vmem:[%s6 + $0x8] sm:$0xf]
        %v1166 = vld [vmem:[%s6 + $0xc] sm:$0xf]
        %v1167 = vld [vmem:[%s6 + $0x10] sm:$0xf]
        %v1168 = vld [vmem:[%s6 + $0x14] sm:$0xf]
        %v1169 = vld [vmem:[%s6 + $0x18] sm:$0xf]
        %v1170 = vld [vmem:[%s6 + $0x1c] sm:$0xf]
        %v1171 = vld [vmem:[%s6 + $0x20] sm:$0xf]
        %v1172 = vld [vmem:[%s6 + $0x24] sm:$0xf]
        %v1173 = vld [vmem:[%s6 + $0x28] sm:$0xf]
        %v1174 = vld [vmem:[%s6 + $0x2c] sm:$0xf]
        %v1175 = vld [vmem:[%s6 + $0x30] sm:$0xf]
        %v1176 = vld [vmem:[%s6 + $0x34] sm:$0xf]
        %v1177 = vld [vmem:[%s6 + $0x38] sm:$0xf]
        %v1178 = vld [vmem:[%s6 + $0x3c] sm:$0xf]
        %v1179 = vld [vmem:[%s7] sm:$0x1]
        %v1181 = vperm.slane %v1179, 0
        %v1199 = vunpack.c.l.b16 %v1163
        %v1200 = vunpack.c.l.b16 %v1164
        %v1201 = vunpack.c.l.b16 %v1165
        %v1202 = vunpack.c.l.b16 %v1166
        %v1203 = vunpack.c.l.b16 %v1167
        %v1204 = vunpack.c.l.b16 %v1168
        %v1205 = vunpack.c.l.b16 %v1169
        %v1206 = vunpack.c.l.b16 %v1170
        %v1207 = vunpack.c.l.b16 %v1171
        %v1208 = vunpack.c.l.b16 %v1172
        %v1209 = vunpack.c.l.b16 %v1173
        %v1210 = vunpack.c.l.b16 %v1174
        %v1211 = vunpack.c.l.b16 %v1175
        %v1212 = vunpack.c.l.b16 %v1176
        %v1213 = vunpack.c.l.b16 %v1177
        %v1214 = vunpack.c.l.b16 %v1178
        %v1215 = vpack.c.b16 %v1200, %v1199
        %v1216 = vpack.c.b16 %v1202, %v1201
        %v1217 = vpack.c.b16 %v1204, %v1203
        %v1218 = vpack.c.b16 %v1206, %v1205
        %v1219 = vpack.c.b16 %v1208, %v1207
        %v1220 = vpack.c.b16 %v1210, %v1209
        %v1221 = vpack.c.b16 %v1212, %v1211
        %v1222 = vpack.c.b16 %v1214, %v1213
        %1231 = vmatpush.bf16.msra.mxu0 %v1222
        %1232 = vmatpush.bf16.msra.mxu0 %v1221
        %1233 = vmatpush.bf16.msra.mxu0 %v1220
        %1234 = vmatpush.bf16.msra.mxu0 %v1219
        %1235 = vmatpush.bf16.msra.mxu0 %v1218
        %1236 = vmatpush.bf16.msra.mxu0 %v1217
        %1237 = vmatpush.bf16.msra.mxu0 %v1216
        %1238 = vmatpush.bf16.msra.mxu0 %v1215
        %1239 = vmatmul.bf16.gmra.mxu0 %v1131
        %v1240 = vpop.f32.mrf.mxu0
        %v1241 = vadd.f32 %v1181, %v1240
        %v1242 = vpop.f32.mrf.mxu0
        %v1243 = vadd.f32 %v1181, %v1242
        %1244 = vmatmul.bf16.gmra.mxu0 %v1132
        %v1245 = vpop.f32.mrf.mxu0
        %v1246 = vadd.f32 %v1181, %v1245
        %v1247 = vpop.f32.mrf.mxu0
        %v1248 = vadd.f32 %v1181, %v1247
        %1249 = vmatmul.bf16.gmra.mxu0 %v1133
        %v1250 = vpop.f32.mrf.mxu0
        %v1251 = vadd.f32 %v1181, %v1250
        %v1252 = vpop.f32.mrf.mxu0
        %v1253 = vadd.f32 %v1181, %v1252
        %1254 = vmatmul.bf16.gmra.mxu0 %v1134
        %v1255 = vpop.f32.mrf.mxu0
        %v1256 = vadd.f32 %v1181, %v1255
        %v1257 = vpop.f32.mrf.mxu0
        %v1258 = vadd.f32 %v1181, %v1257
        %1259 = vmatmul.bf16.gmra.mxu0 %v1135
        %v1260 = vpop.f32.mrf.mxu0
        %v1261 = vadd.f32 %v1181, %v1260
        %v1262 = vpop.f32.mrf.mxu0
        %v1263 = vadd.f32 %v1181, %v1262
        %1264 = vmatmul.bf16.gmra.mxu0 %v1136
        %v1265 = vpop.f32.mrf.mxu0
        %v1266 = vadd.f32 %v1181, %v1265
        %v1267 = vpop.f32.mrf.mxu0
        %v1268 = vadd.f32 %v1181, %v1267
        %1269 = vmatmul.bf16.gmra.mxu0 %v1137
        %v1270 = vpop.f32.mrf.mxu0
        %v1271 = vadd.f32 %v1181, %v1270
        %v1272 = vpop.f32.mrf.mxu0
        %v1273 = vadd.f32 %v1181, %v1272
        %1274 = vmatmul.bf16.gmra.mxu0 %v1138
        %v1275 = vpop.f32.mrf.mxu0
        %v1276 = vadd.f32 %v1181, %v1275
        %v1277 = vpop.f32.mrf.mxu0
        %v1278 = vadd.f32 %v1181, %v1277
        %1279 = vmatmul.bf16.gmra.mxu0 %v1139
        %v1280 = vpop.f32.mrf.mxu0
        %v1281 = vadd.f32 %v1181, %v1280
        %v1282 = vpop.f32.mrf.mxu0
        %v1283 = vadd.f32 %v1181, %v1282
        %1284 = vmatmul.bf16.gmra.mxu0 %v1140
        %v1285 = vpop.f32.mrf.mxu0
        %v1286 = vadd.f32 %v1181, %v1285
        %v1287 = vpop.f32.mrf.mxu0
        %v1288 = vadd.f32 %v1181, %v1287
        %1289 = vmatmul.bf16.gmra.mxu0 %v1141
        %v1290 = vpop.f32.mrf.mxu0
        %v1291 = vadd.f32 %v1181, %v1290
        %v1292 = vpop.f32.mrf.mxu0
        %v1293 = vadd.f32 %v1181, %v1292
        %1294 = vmatmul.bf16.gmra.mxu0 %v1142
        %v1295 = vpop.f32.mrf.mxu0
        %v1296 = vadd.f32 %v1181, %v1295
        %v1297 = vpop.f32.mrf.mxu0
        %v1298 = vadd.f32 %v1181, %v1297
        %1299 = vmatmul.bf16.gmra.mxu0 %v1143
        %v1300 = vpop.f32.mrf.mxu0
        %v1301 = vadd.f32 %v1181, %v1300
        %v1302 = vpop.f32.mrf.mxu0
        %v1303 = vadd.f32 %v1181, %v1302
        %1304 = vmatmul.bf16.gmra.mxu0 %v1144
        %v1305 = vpop.f32.mrf.mxu0
        %v1306 = vadd.f32 %v1181, %v1305
        %v1307 = vpop.f32.mrf.mxu0
        %v1308 = vadd.f32 %v1181, %v1307
        %1309 = vmatmul.bf16.gmra.mxu0 %v1145
        %v1310 = vpop.f32.mrf.mxu0
        %v1311 = vadd.f32 %v1181, %v1310
        %v1312 = vpop.f32.mrf.mxu0
        %v1313 = vadd.f32 %v1181, %v1312
        %1314 = vmatmul.bf16.gmra.mxu0 %v1146
        %v1315 = vpop.f32.mrf.mxu0
        %v1316 = vadd.f32 %v1181, %v1315
        %v1317 = vpop.f32.mrf.mxu0
        %v1318 = vadd.f32 %v1181, %v1317
        %1319 = vmatmul.bf16.gmra.mxu0 %v1147
        %v1320 = vpop.f32.mrf.mxu0
        %v1321 = vadd.f32 %v1181, %v1320
        %v1322 = vpop.f32.mrf.mxu0
        %v1323 = vadd.f32 %v1181, %v1322
        %1324 = vmatmul.bf16.gmra.mxu0 %v1148
        %v1325 = vpop.f32.mrf.mxu0
        %v1326 = vadd.f32 %v1181, %v1325
        %v1327 = vpop.f32.mrf.mxu0
        %v1328 = vadd.f32 %v1181, %v1327
        %1329 = vmatmul.bf16.gmra.mxu0 %v1149
        %v1330 = vpop.f32.mrf.mxu0
        %v1331 = vadd.f32 %v1181, %v1330
        %v1332 = vpop.f32.mrf.mxu0
        %v1333 = vadd.f32 %v1181, %v1332
        %1334 = vmatmul.bf16.gmra.mxu0 %v1150
        %v1335 = vpop.f32.mrf.mxu0
        %v1336 = vadd.f32 %v1181, %v1335
        %v1337 = vpop.f32.mrf.mxu0
        %v1338 = vadd.f32 %v1181, %v1337
        %1339 = vmatmul.bf16.gmra.mxu0 %v1151
        %v1340 = vpop.f32.mrf.mxu0
        %v1341 = vadd.f32 %v1181, %v1340
        %v1342 = vpop.f32.mrf.mxu0
        %v1343 = vadd.f32 %v1181, %v1342
        %1344 = vmatmul.bf16.gmra.mxu0 %v1152
        %v1345 = vpop.f32.mrf.mxu0
        %v1346 = vadd.f32 %v1181, %v1345
        %v1347 = vpop.f32.mrf.mxu0
        %v1348 = vadd.f32 %v1181, %v1347
        %1349 = vmatmul.bf16.gmra.mxu0 %v1153
        %v1350 = vpop.f32.mrf.mxu0
        %v1351 = vadd.f32 %v1181, %v1350
        %v1352 = vpop.f32.mrf.mxu0
        %v1353 = vadd.f32 %v1181, %v1352
        %1354 = vmatmul.bf16.gmra.mxu0 %v1154
        %v1355 = vpop.f32.mrf.mxu0
        %v1356 = vadd.f32 %v1181, %v1355
        %v1357 = vpop.f32.mrf.mxu0
        %v1358 = vadd.f32 %v1181, %v1357
        %1359 = vmatmul.bf16.gmra.mxu0 %v1155
        %v1360 = vpop.f32.mrf.mxu0
        %v1361 = vadd.f32 %v1181, %v1360
        %v1362 = vpop.f32.mrf.mxu0
        %v1363 = vadd.f32 %v1181, %v1362
        %1364 = vmatmul.bf16.gmra.mxu0 %v1156
        %v1365 = vpop.f32.mrf.mxu0
        %v1366 = vadd.f32 %v1181, %v1365
        %v1367 = vpop.f32.mrf.mxu0
        %v1368 = vadd.f32 %v1181, %v1367
        %1369 = vmatmul.bf16.gmra.mxu0 %v1157
        %v1370 = vpop.f32.mrf.mxu0
        %v1371 = vadd.f32 %v1181, %v1370
        %v1372 = vpop.f32.mrf.mxu0
        %v1373 = vadd.f32 %v1181, %v1372
        %1374 = vmatmul.bf16.gmra.mxu0 %v1158
        %v1375 = vpop.f32.mrf.mxu0
        %v1376 = vadd.f32 %v1181, %v1375
        %v1377 = vpop.f32.mrf.mxu0
        %v1378 = vadd.f32 %v1181, %v1377
        %1379 = vmatmul.bf16.gmra.mxu0 %v1159
        %v1380 = vpop.f32.mrf.mxu0
        %v1381 = vadd.f32 %v1181, %v1380
        %v1382 = vpop.f32.mrf.mxu0
        %v1383 = vadd.f32 %v1181, %v1382
        %1384 = vmatmul.bf16.gmra.mxu0 %v1160
        %v1385 = vpop.f32.mrf.mxu0
        %v1386 = vadd.f32 %v1181, %v1385
        %v1387 = vpop.f32.mrf.mxu0
        %v1388 = vadd.f32 %v1181, %v1387
        %1389 = vmatmul.bf16.gmra.mxu0 %v1161
        %v1390 = vpop.f32.mrf.mxu0
        %v1391 = vadd.f32 %v1181, %v1390
        %v1392 = vpop.f32.mrf.mxu0
        %v1393 = vadd.f32 %v1181, %v1392
        %1394 = vmatmul.bf16.gmra.mxu0 %v1162
        %v1395 = vpop.f32.mrf.mxu0
        %v1396 = vadd.f32 %v1181, %v1395
        %v1397 = vpop.f32.mrf.mxu0
        %v1398 = vadd.f32 %v1181, %v1397
        %1399 = vdwg.mxu0
        %v1400 = vmax.f32 %v1241, 0.0
        %v1401 = vmax.f32 %v1243, 0.0
        %v1402 = vmax.f32 %v1246, 0.0
        %v1403 = vmax.f32 %v1248, 0.0
        %v1404 = vmax.f32 %v1251, 0.0
        %v1405 = vmax.f32 %v1253, 0.0
        %v1406 = vmax.f32 %v1256, 0.0
        %v1407 = vmax.f32 %v1258, 0.0
        %v1408 = vmax.f32 %v1261, 0.0
        %v1409 = vmax.f32 %v1263, 0.0
        %v1410 = vmax.f32 %v1266, 0.0
        %v1411 = vmax.f32 %v1268, 0.0
        %v1412 = vmax.f32 %v1271, 0.0
        %v1413 = vmax.f32 %v1273, 0.0
        %v1414 = vmax.f32 %v1276, 0.0
        %v1415 = vmax.f32 %v1278, 0.0
        %v1416 = vmax.f32 %v1281, 0.0
        %v1417 = vmax.f32 %v1283, 0.0
        %v1418 = vmax.f32 %v1286, 0.0
        %v1419 = vmax.f32 %v1288, 0.0
        %v1420 = vmax.f32 %v1291, 0.0
        %v1421 = vmax.f32 %v1293, 0.0
        %v1422 = vmax.f32 %v1296, 0.0
        %v1423 = vmax.f32 %v1298, 0.0
        %v1424 = vmax.f32 %v1301, 0.0
        %v1425 = vmax.f32 %v1303, 0.0
        %v1426 = vmax.f32 %v1306, 0.0
        %v1427 = vmax.f32 %v1308, 0.0
        %v1428 = vmax.f32 %v1311, 0.0
        %v1429 = vmax.f32 %v1313, 0.0
        %v1430 = vmax.f32 %v1316, 0.0
        %v1431 = vmax.f32 %v1318, 0.0
        %v1432 = vmax.f32 %v1321, 0.0
        %v1433 = vmax.f32 %v1323, 0.0
        %v1434 = vmax.f32 %v1326, 0.0
        %v1435 = vmax.f32 %v1328, 0.0
        %v1436 = vmax.f32 %v1331, 0.0
        %v1437 = vmax.f32 %v1333, 0.0
        %v1438 = vmax.f32 %v1336, 0.0
        %v1439 = vmax.f32 %v1338, 0.0
        %v1440 = vmax.f32 %v1341, 0.0
        %v1441 = vmax.f32 %v1343, 0.0
        %v1442 = vmax.f32 %v1346, 0.0
        %v1443 = vmax.f32 %v1348, 0.0
        %v1444 = vmax.f32 %v1351, 0.0
        %v1445 = vmax.f32 %v1353, 0.0
        %v1446 = vmax.f32 %v1356, 0.0
        %v1447 = vmax.f32 %v1358, 0.0
        %v1448 = vmax.f32 %v1361, 0.0
        %v1449 = vmax.f32 %v1363, 0.0
        %v1450 = vmax.f32 %v1366, 0.0
        %v1451 = vmax.f32 %v1368, 0.0
        %v1452 = vmax.f32 %v1371, 0.0
        %v1453 = vmax.f32 %v1373, 0.0
        %v1454 = vmax.f32 %v1376, 0.0
        %v1455 = vmax.f32 %v1378, 0.0
        %v1456 = vmax.f32 %v1381, 0.0
        %v1457 = vmax.f32 %v1383, 0.0
        %v1458 = vmax.f32 %v1386, 0.0
        %v1459 = vmax.f32 %v1388, 0.0
        %v1460 = vmax.f32 %v1391, 0.0
        %v1461 = vmax.f32 %v1393, 0.0
        %v1462 = vmax.f32 %v1396, 0.0
        %v1463 = vmax.f32 %v1398, 0.0
        %v1464 = vld [vmem:[%s8] sm:$0xf]
        %v1465 = vld [vmem:[%s8 + $0x4] sm:$0xf]
        %v1466 = vld [vmem:[%s8 + $0x8] sm:$0xf]
        %v1467 = vld [vmem:[%s8 + $0xc] sm:$0xf]
        %v1468 = vld [vmem:[%s8 + $0x10] sm:$0xf]
        %v1469 = vld [vmem:[%s8 + $0x14] sm:$0xf]
        %v1470 = vld [vmem:[%s8 + $0x18] sm:$0xf]
        %v1471 = vld [vmem:[%s8 + $0x1c] sm:$0xf]
        %v1472 = vld [vmem:[%s8 + $0x20] sm:$0xf]
        %v1473 = vld [vmem:[%s8 + $0x24] sm:$0xf]
        %v1474 = vld [vmem:[%s8 + $0x28] sm:$0xf]
        %v1475 = vld [vmem:[%s8 + $0x2c] sm:$0xf]
        %v1476 = vld [vmem:[%s8 + $0x30] sm:$0xf]
        %v1477 = vld [vmem:[%s8 + $0x34] sm:$0xf]
        %v1478 = vld [vmem:[%s8 + $0x38] sm:$0xf]
        %v1479 = vld [vmem:[%s8 + $0x3c] sm:$0xf]
        %v1496 = vunpack.c.l.b16 %v1464
        %v1497 = vunpack.c.l.b16 %v1465
        %v1498 = vunpack.c.l.b16 %v1466
        %v1499 = vunpack.c.l.b16 %v1467
        %v1500 = vunpack.c.l.b16 %v1468
        %v1501 = vunpack.c.l.b16 %v1469
        %v1502 = vunpack.c.l.b16 %v1470
        %v1503 = vunpack.c.l.b16 %v1471
        %v1504 = vunpack.c.l.b16 %v1472
        %v1505 = vunpack.c.l.b16 %v1473
        %v1506 = vunpack.c.l.b16 %v1474
        %v1507 = vunpack.c.l.b16 %v1475
        %v1508 = vunpack.c.l.b16 %v1476
        %v1509 = vunpack.c.l.b16 %v1477
        %v1510 = vunpack.c.l.b16 %v1478
        %v1511 = vunpack.c.l.b16 %v1479
        %v1512 = vpack.c.b16 %v1497, %v1496
        %v1513 = vpack.c.b16 %v1499, %v1498
        %v1514 = vpack.c.b16 %v1501, %v1500
        %v1515 = vpack.c.b16 %v1503, %v1502
        %v1516 = vpack.c.b16 %v1505, %v1504
        %v1517 = vpack.c.b16 %v1507, %v1506
        %v1518 = vpack.c.b16 %v1509, %v1508
        %v1519 = vpack.c.b16 %v1511, %v1510
        %1528 = vmatpush.bf16.msra.mxu0 %v1519
        %1529 = vmatpush.bf16.msra.mxu0 %v1518
        %1530 = vmatpush.bf16.msra.mxu0 %v1517
        %1531 = vmatpush.bf16.msra.mxu0 %v1516
        %1532 = vmatpush.bf16.msra.mxu0 %v1515
        %1533 = vmatpush.bf16.msra.mxu0 %v1514
        %1534 = vmatpush.bf16.msra.mxu0 %v1513
        %1535 = vmatpush.bf16.msra.mxu0 %v1512
        %1536 = vmatmul.bf16.gmra.mxu0 %v637
        %v1537 = vpop.f32.mrf.mxu0
        %v1538 = vadd.f32 0.0, %v1537
        %v1539 = vpop.f32.mrf.mxu0
        %1540 = vdwg.mxu0
        %v1541 = vpack.c.bf16 %v1401, %v1400
        %v1542 = vpack.c.bf16 %v1403, %v1402
        %v1543 = vpack.c.bf16 %v1405, %v1404
        %v1544 = vpack.c.bf16 %v1407, %v1406
        %v1545 = vpack.c.bf16 %v1409, %v1408
        %v1546 = vpack.c.bf16 %v1411, %v1410
        %v1547 = vpack.c.bf16 %v1413, %v1412
        %v1548 = vpack.c.bf16 %v1415, %v1414
        %v1549 = vpack.c.bf16 %v1417, %v1416
        %v1550 = vpack.c.bf16 %v1419, %v1418
        %v1551 = vpack.c.bf16 %v1421, %v1420
        %v1552 = vpack.c.bf16 %v1423, %v1422
        %v1553 = vpack.c.bf16 %v1425, %v1424
        %v1554 = vpack.c.bf16 %v1427, %v1426
        %v1555 = vpack.c.bf16 %v1429, %v1428
        %v1556 = vpack.c.bf16 %v1431, %v1430
        %v1557 = vpack.c.bf16 %v1433, %v1432
        %v1558 = vpack.c.bf16 %v1435, %v1434
        %v1559 = vpack.c.bf16 %v1437, %v1436
        %v1560 = vpack.c.bf16 %v1439, %v1438
        %v1561 = vpack.c.bf16 %v1441, %v1440
        %v1562 = vpack.c.bf16 %v1443, %v1442
        %v1563 = vpack.c.bf16 %v1445, %v1444
        %v1564 = vpack.c.bf16 %v1447, %v1446
        %v1565 = vpack.c.bf16 %v1449, %v1448
        %v1566 = vpack.c.bf16 %v1451, %v1450
        %v1567 = vpack.c.bf16 %v1453, %v1452
        %v1568 = vpack.c.bf16 %v1455, %v1454
        %v1569 = vpack.c.bf16 %v1457, %v1456
        %v1570 = vpack.c.bf16 %v1459, %v1458
        %v1571 = vpack.c.bf16 %v1461, %v1460
        %v1572 = vpack.c.bf16 %v1463, %v1462
        %v1573 = vpack.c.bf16 %v1538, %v1538
        %1574 = vmatpush.bf16.xpose.msra.mxu0 0
        %1575 = vmatpush.bf16.xpose.msra.mxu0 0
        %1576 = vmatpush.bf16.xpose.msra.mxu0 0
        %1577 = vmatpush.bf16.xpose.msra.mxu0 0
        %1578 = vmatpush.bf16.xpose.msra.mxu0 0
        %1579 = vmatpush.bf16.xpose.msra.mxu0 0
        %1580 = vmatpush.bf16.xpose.msra.mxu0 0
        %1581 = vmatpush.bf16.xpose.msra.mxu0 %v1573
        %1582 = vmatmul.bf16.gmra.mxu0 %v1541
        %v1583 = vpop.f32.mrf.mxu0
        %v1584 = vadd.f32 0.0, %v1583
        %v1585 = vpop.f32.mrf.mxu0
        %v1586 = vadd.f32 0.0, %v1585
        %1587 = vmatmul.bf16.gmra.mxu0 %v1542
        %v1588 = vpop.f32.mrf.mxu0
        %v1589 = vadd.f32 0.0, %v1588
        %v1590 = vpop.f32.mrf.mxu0
        %v1591 = vadd.f32 0.0, %v1590
        %1592 = vmatmul.bf16.gmra.mxu0 %v1543
        %v1593 = vpop.f32.mrf.mxu0
        %v1594 = vadd.f32 0.0, %v1593
        %v1595 = vpop.f32.mrf.mxu0
        %v1596 = vadd.f32 0.0, %v1595
        %1597 = vmatmul.bf16.gmra.mxu0 %v1544
        %v1598 = vpop.f32.mrf.mxu0
        %v1599 = vadd.f32 0.0, %v1598
        %v1600 = vpop.f32.mrf.mxu0
        %v1601 = vadd.f32 0.0, %v1600
        %1602 = vmatmul.bf16.gmra.mxu0 %v1545
        %v1603 = vpop.f32.mrf.mxu0
        %v1604 = vadd.f32 0.0, %v1603
        %v1605 = vpop.f32.mrf.mxu0
        %v1606 = vadd.f32 0.0, %v1605
        %1607 = vmatmul.bf16.gmra.mxu0 %v1546
        %v1608 = vpop.f32.mrf.mxu0
        %v1609 = vadd.f32 0.0, %v1608
        %v1610 = vpop.f32.mrf.mxu0
        %v1611 = vadd.f32 0.0, %v1610
        %1612 = vmatmul.bf16.gmra.mxu0 %v1547
        %v1613 = vpop.f32.mrf.mxu0
        %v1614 = vadd.f32 0.0, %v1613
        %v1615 = vpop.f32.mrf.mxu0
        %v1616 = vadd.f32 0.0, %v1615
        %1617 = vmatmul.bf16.gmra.mxu0 %v1548
        %v1618 = vpop.f32.mrf.mxu0
        %v1619 = vadd.f32 0.0, %v1618
        %v1620 = vpop.f32.mrf.mxu0
        %v1621 = vadd.f32 0.0, %v1620
        %1622 = vmatmul.bf16.gmra.mxu0 %v1549
        %v1623 = vpop.f32.mrf.mxu0
        %v1624 = vadd.f32 0.0, %v1623
        %v1625 = vpop.f32.mrf.mxu0
        %v1626 = vadd.f32 0.0, %v1625
        %1627 = vmatmul.bf16.gmra.mxu0 %v1550
        %v1628 = vpop.f32.mrf.mxu0
        %v1629 = vadd.f32 0.0, %v1628
        %v1630 = vpop.f32.mrf.mxu0
        %v1631 = vadd.f32 0.0, %v1630
        %1632 = vmatmul.bf16.gmra.mxu0 %v1551
        %v1633 = vpop.f32.mrf.mxu0
        %v1634 = vadd.f32 0.0, %v1633
        %v1635 = vpop.f32.mrf.mxu0
        %v1636 = vadd.f32 0.0, %v1635
        %1637 = vmatmul.bf16.gmra.mxu0 %v1552
        %v1638 = vpop.f32.mrf.mxu0
        %v1639 = vadd.f32 0.0, %v1638
        %v1640 = vpop.f32.mrf.mxu0
        %v1641 = vadd.f32 0.0, %v1640
        %1642 = vmatmul.bf16.gmra.mxu0 %v1553
        %v1643 = vpop.f32.mrf.mxu0
        %v1644 = vadd.f32 0.0, %v1643
        %v1645 = vpop.f32.mrf.mxu0
        %v1646 = vadd.f32 0.0, %v1645
        %1647 = vmatmul.bf16.gmra.mxu0 %v1554
        %v1648 = vpop.f32.mrf.mxu0
        %v1649 = vadd.f32 0.0, %v1648
        %v1650 = vpop.f32.mrf.mxu0
        %v1651 = vadd.f32 0.0, %v1650
        %1652 = vmatmul.bf16.gmra.mxu0 %v1555
        %v1653 = vpop.f32.mrf.mxu0
        %v1654 = vadd.f32 0.0, %v1653
        %v1655 = vpop.f32.mrf.mxu0
        %v1656 = vadd.f32 0.0, %v1655
        %1657 = vmatmul.bf16.gmra.mxu0 %v1556
        %v1658 = vpop.f32.mrf.mxu0
        %v1659 = vadd.f32 0.0, %v1658
        %v1660 = vpop.f32.mrf.mxu0
        %v1661 = vadd.f32 0.0, %v1660
        %1662 = vmatmul.bf16.gmra.mxu0 %v1557
        %v1663 = vpop.f32.mrf.mxu0
        %v1664 = vadd.f32 0.0, %v1663
        %v1665 = vpop.f32.mrf.mxu0
        %v1666 = vadd.f32 0.0, %v1665
        %1667 = vmatmul.bf16.gmra.mxu0 %v1558
        %v1668 = vpop.f32.mrf.mxu0
        %v1669 = vadd.f32 0.0, %v1668
        %v1670 = vpop.f32.mrf.mxu0
        %v1671 = vadd.f32 0.0, %v1670
        %1672 = vmatmul.bf16.gmra.mxu0 %v1559
        %v1673 = vpop.f32.mrf.mxu0
        %v1674 = vadd.f32 0.0, %v1673
        %v1675 = vpop.f32.mrf.mxu0
        %v1676 = vadd.f32 0.0, %v1675
        %1677 = vmatmul.bf16.gmra.mxu0 %v1560
        %v1678 = vpop.f32.mrf.mxu0
        %v1679 = vadd.f32 0.0, %v1678
        %v1680 = vpop.f32.mrf.mxu0
        %v1681 = vadd.f32 0.0, %v1680
        %1682 = vmatmul.bf16.gmra.mxu0 %v1561
        %v1683 = vpop.f32.mrf.mxu0
        %v1684 = vadd.f32 0.0, %v1683
        %v1685 = vpop.f32.mrf.mxu0
        %v1686 = vadd.f32 0.0, %v1685
        %1687 = vmatmul.bf16.gmra.mxu0 %v1562
        %v1688 = vpop.f32.mrf.mxu0
        %v1689 = vadd.f32 0.0, %v1688
        %v1690 = vpop.f32.mrf.mxu0
        %v1691 = vadd.f32 0.0, %v1690
        %1692 = vmatmul.bf16.gmra.mxu0 %v1563
        %v1693 = vpop.f32.mrf.mxu0
        %v1694 = vadd.f32 0.0, %v1693
        %v1695 = vpop.f32.mrf.mxu0
        %v1696 = vadd.f32 0.0, %v1695
        %1697 = vmatmul.bf16.gmra.mxu0 %v1564
        %v1698 = vpop.f32.mrf.mxu0
        %v1699 = vadd.f32 0.0, %v1698
        %v1700 = vpop.f32.mrf.mxu0
        %v1701 = vadd.f32 0.0, %v1700
        %1702 = vmatmul.bf16.gmra.mxu0 %v1565
        %v1703 = vpop.f32.mrf.mxu0
        %v1704 = vadd.f32 0.0, %v1703
        %v1705 = vpop.f32.mrf.mxu0
        %v1706 = vadd.f32 0.0, %v1705
        %1707 = vmatmul.bf16.gmra.mxu0 %v1566
        %v1708 = vpop.f32.mrf.mxu0
        %v1709 = vadd.f32 0.0, %v1708
        %v1710 = vpop.f32.mrf.mxu0
        %v1711 = vadd.f32 0.0, %v1710
        %1712 = vmatmul.bf16.gmra.mxu0 %v1567
        %v1713 = vpop.f32.mrf.mxu0
        %v1714 = vadd.f32 0.0, %v1713
        %v1715 = vpop.f32.mrf.mxu0
        %v1716 = vadd.f32 0.0, %v1715
        %1717 = vmatmul.bf16.gmra.mxu0 %v1568
        %v1718 = vpop.f32.mrf.mxu0
        %v1719 = vadd.f32 0.0, %v1718
        %v1720 = vpop.f32.mrf.mxu0
        %v1721 = vadd.f32 0.0, %v1720
        %1722 = vmatmul.bf16.gmra.mxu0 %v1569
        %v1723 = vpop.f32.mrf.mxu0
        %v1724 = vadd.f32 0.0, %v1723
        %v1725 = vpop.f32.mrf.mxu0
        %v1726 = vadd.f32 0.0, %v1725
        %1727 = vmatmul.bf16.gmra.mxu0 %v1570
        %v1728 = vpop.f32.mrf.mxu0
        %v1729 = vadd.f32 0.0, %v1728
        %v1730 = vpop.f32.mrf.mxu0
        %v1731 = vadd.f32 0.0, %v1730
        %1732 = vmatmul.bf16.gmra.mxu0 %v1571
        %v1733 = vpop.f32.mrf.mxu0
        %v1734 = vadd.f32 0.0, %v1733
        %v1735 = vpop.f32.mrf.mxu0
        %v1736 = vadd.f32 0.0, %v1735
        %1737 = vmatmul.bf16.gmra.mxu0 %v1572
        %v1738 = vpop.f32.mrf.mxu0
        %v1739 = vadd.f32 0.0, %v1738
        %v1740 = vpop.f32.mrf.mxu0
        %v1741 = vadd.f32 0.0, %v1740
        %1742 = vdwg.mxu0
        %v1743 = vld [vmem:[%s552] sm:$0x1]
        %v1745 = vperm.slane %v1743, 0
        %v1747 = vsub.f32 %v1584, %v1745
        %v1748 = vsub.f32 %v1586, %v1745
        %v1749 = vsub.f32 %v1589, %v1745
        %v1750 = vsub.f32 %v1591, %v1745
        %v1751 = vsub.f32 %v1594, %v1745
        %v1752 = vsub.f32 %v1596, %v1745
        %v1753 = vsub.f32 %v1599, %v1745
        %v1754 = vsub.f32 %v1601, %v1745
        %v1755 = vsub.f32 %v1604, %v1745
        %v1756 = vsub.f32 %v1606, %v1745
        %v1757 = vsub.f32 %v1609, %v1745
        %v1758 = vsub.f32 %v1611, %v1745
        %v1759 = vsub.f32 %v1614, %v1745
        %v1760 = vsub.f32 %v1616, %v1745
        %v1761 = vsub.f32 %v1619, %v1745
        %v1762 = vsub.f32 %v1621, %v1745
        %v1763 = vsub.f32 %v1624, %v1745
        %v1764 = vsub.f32 %v1626, %v1745
        %v1765 = vsub.f32 %v1629, %v1745
        %v1766 = vsub.f32 %v1631, %v1745
        %v1767 = vsub.f32 %v1634, %v1745
        %v1768 = vsub.f32 %v1636, %v1745
        %v1769 = vsub.f32 %v1639, %v1745
        %v1770 = vsub.f32 %v1641, %v1745
        %v1771 = vsub.f32 %v1644, %v1745
        %v1772 = vsub.f32 %v1646, %v1745
        %v1773 = vsub.f32 %v1649, %v1745
        %v1774 = vsub.f32 %v1651, %v1745
        %v1775 = vsub.f32 %v1654, %v1745
        %v1776 = vsub.f32 %v1656, %v1745
        %v1777 = vsub.f32 %v1659, %v1745
        %v1778 = vsub.f32 %v1661, %v1745
        %v1779 = vsub.f32 %v1664, %v1745
        %v1780 = vsub.f32 %v1666, %v1745
        %v1781 = vsub.f32 %v1669, %v1745
        %v1782 = vsub.f32 %v1671, %v1745
        %v1783 = vsub.f32 %v1674, %v1745
        %v1784 = vsub.f32 %v1676, %v1745
        %v1785 = vsub.f32 %v1679, %v1745
        %v1786 = vsub.f32 %v1681, %v1745
        %v1787 = vsub.f32 %v1684, %v1745
        %v1788 = vsub.f32 %v1686, %v1745
        %v1789 = vsub.f32 %v1689, %v1745
        %v1790 = vsub.f32 %v1691, %v1745
        %v1791 = vsub.f32 %v1694, %v1745
        %v1792 = vsub.f32 %v1696, %v1745
        %v1793 = vsub.f32 %v1699, %v1745
        %v1794 = vsub.f32 %v1701, %v1745
        %v1795 = vsub.f32 %v1704, %v1745
        %v1796 = vsub.f32 %v1706, %v1745
        %v1797 = vsub.f32 %v1709, %v1745
        %v1798 = vsub.f32 %v1711, %v1745
        %v1799 = vsub.f32 %v1714, %v1745
        %v1800 = vsub.f32 %v1716, %v1745
        %v1801 = vsub.f32 %v1719, %v1745
        %v1802 = vsub.f32 %v1721, %v1745
        %v1803 = vsub.f32 %v1724, %v1745
        %v1804 = vsub.f32 %v1726, %v1745
        %v1805 = vsub.f32 %v1729, %v1745
        %v1806 = vsub.f32 %v1731, %v1745
        %v1807 = vsub.f32 %v1734, %v1745
        %v1808 = vsub.f32 %v1736, %v1745
        %v1809 = vsub.f32 %v1739, %v1745
        %v1810 = vsub.f32 %v1741, %v1745
        %v1811 = vmul.f32 %v1747, 1.442695
        %v1812 = vpow.pop %v1811
        %v1813 = vmul.f32 %v1748, 1.442695
        %v1814 = vpow.pop %v1813
        %v1815 = vmul.f32 %v1749, 1.442695
        %v1816 = vpow.pop %v1815
        %v1817 = vmul.f32 %v1750, 1.442695
        %v1818 = vpow.pop %v1817
        %v1819 = vmul.f32 %v1751, 1.442695
        %v1820 = vpow.pop %v1819
        %v1821 = vmul.f32 %v1752, 1.442695
        %v1822 = vpow.pop %v1821
        %v1823 = vmul.f32 %v1753, 1.442695
        %v1824 = vpow.pop %v1823
        %v1825 = vmul.f32 %v1754, 1.442695
        %v1826 = vpow.pop %v1825
        %v1827 = vmul.f32 %v1755, 1.442695
        %v1828 = vpow.pop %v1827
        %v1829 = vmul.f32 %v1756, 1.442695
        %v1830 = vpow.pop %v1829
        %v1831 = vmul.f32 %v1757, 1.442695
        %v1832 = vpow.pop %v1831
        %v1833 = vmul.f32 %v1758, 1.442695
        %v1834 = vpow.pop %v1833
        %v1835 = vmul.f32 %v1759, 1.442695
        %v1836 = vpow.pop %v1835
        %v1837 = vmul.f32 %v1760, 1.442695
        %v1838 = vpow.pop %v1837
        %v1839 = vmul.f32 %v1761, 1.442695
        %v1840 = vpow.pop %v1839
        %v1841 = vmul.f32 %v1762, 1.442695
        %v1842 = vpow.pop %v1841
        %v1843 = vmul.f32 %v1763, 1.442695
        %v1844 = vpow.pop %v1843
        %v1845 = vmul.f32 %v1764, 1.442695
        %v1846 = vpow.pop %v1845
        %v1847 = vmul.f32 %v1765, 1.442695
        %v1848 = vpow.pop %v1847
        %v1849 = vmul.f32 %v1766, 1.442695
        %v1850 = vpow.pop %v1849
        %v1851 = vmul.f32 %v1767, 1.442695
        %v1852 = vpow.pop %v1851
        %v1853 = vmul.f32 %v1768, 1.442695
        %v1854 = vpow.pop %v1853
        %v1855 = vmul.f32 %v1769, 1.442695
        %v1856 = vpow.pop %v1855
        %v1857 = vmul.f32 %v1770, 1.442695
        %v1858 = vpow.pop %v1857
        %v1859 = vmul.f32 %v1771, 1.442695
        %v1860 = vpow.pop %v1859
        %v1861 = vmul.f32 %v1772, 1.442695
        %v1862 = vpow.pop %v1861
        %v1863 = vmul.f32 %v1773, 1.442695
        %v1864 = vpow.pop %v1863
        %v1865 = vmul.f32 %v1774, 1.442695
        %v1866 = vpow.pop %v1865
        %v1867 = vmul.f32 %v1775, 1.442695
        %v1868 = vpow.pop %v1867
        %v1869 = vmul.f32 %v1776, 1.442695
        %v1870 = vpow.pop %v1869
        %v1871 = vmul.f32 %v1777, 1.442695
        %v1872 = vpow.pop %v1871
        %v1873 = vmul.f32 %v1778, 1.442695
        %v1874 = vpow.pop %v1873
        %v1875 = vmul.f32 %v1779, 1.442695
        %v1876 = vpow.pop %v1875
        %v1877 = vmul.f32 %v1780, 1.442695
        %v1878 = vpow.pop %v1877
        %v1879 = vmul.f32 %v1781, 1.442695
        %v1880 = vpow.pop %v1879
        %v1881 = vmul.f32 %v1782, 1.442695
        %v1882 = vpow.pop %v1881
        %v1883 = vmul.f32 %v1783, 1.442695
        %v1884 = vpow.pop %v1883
        %v1885 = vmul.f32 %v1784, 1.442695
        %v1886 = vpow.pop %v1885
        %v1887 = vmul.f32 %v1785, 1.442695
        %v1888 = vpow.pop %v1887
        %v1889 = vmul.f32 %v1786, 1.442695
        %v1890 = vpow.pop %v1889
        %v1891 = vmul.f32 %v1787, 1.442695
        %v1892 = vpow.pop %v1891
        %v1893 = vmul.f32 %v1788, 1.442695
        %v1894 = vpow.pop %v1893
        %v1895 = vmul.f32 %v1789, 1.442695
        %v1896 = vpow.pop %v1895
        %v1897 = vmul.f32 %v1790, 1.442695
        %v1898 = vpow.pop %v1897
        %v1899 = vmul.f32 %v1791, 1.442695
        %v1900 = vpow.pop %v1899
        %v1901 = vmul.f32 %v1792, 1.442695
        %v1902 = vpow.pop %v1901
        %v1903 = vmul.f32 %v1793, 1.442695
        %v1904 = vpow.pop %v1903
        %v1905 = vmul.f32 %v1794, 1.442695
        %v1906 = vpow.pop %v1905
        %v1907 = vmul.f32 %v1795, 1.442695
        %v1908 = vpow.pop %v1907
        %v1909 = vmul.f32 %v1796, 1.442695
        %v1910 = vpow.pop %v1909
        %v1911 = vmul.f32 %v1797, 1.442695
        %v1912 = vpow.pop %v1911
        %v1913 = vmul.f32 %v1798, 1.442695
        %v1914 = vpow.pop %v1913
        %v1915 = vmul.f32 %v1799, 1.442695
        %v1916 = vpow.pop %v1915
        %v1917 = vmul.f32 %v1800, 1.442695
        %v1918 = vpow.pop %v1917
        %v1919 = vmul.f32 %v1801, 1.442695
        %v1920 = vpow.pop %v1919
        %v1921 = vmul.f32 %v1802, 1.442695
        %v1922 = vpow.pop %v1921
        %v1923 = vmul.f32 %v1803, 1.442695
        %v1924 = vpow.pop %v1923
        %v1925 = vmul.f32 %v1804, 1.442695
        %v1926 = vpow.pop %v1925
        %v1927 = vmul.f32 %v1805, 1.442695
        %v1928 = vpow.pop %v1927
        %v1929 = vmul.f32 %v1806, 1.442695
        %v1930 = vpow.pop %v1929
        %v1931 = vmul.f32 %v1807, 1.442695
        %v1932 = vpow.pop %v1931
        %v1933 = vmul.f32 %v1808, 1.442695
        %v1934 = vpow.pop %v1933
        %v1935 = vmul.f32 %v1809, 1.442695
        %v1936 = vpow.pop %v1935
        %v1937 = vmul.f32 %v1810, 1.442695
        %v1938 = vpow.pop %v1937
        %v1939 = vld [vmem:[%s556] sm:$0xff]
        %v1940 = vrcp.pop %v1939
        %v1941 = vld [vmem:[%s9] sm:$0xf]
        %v1942 = vld [vmem:[%s9 + $0x4] sm:$0xf]
        %v1943 = vld [vmem:[%s9 + $0x8] sm:$0xf]
        %v1944 = vld [vmem:[%s9 + $0xc] sm:$0xf]
        %v1945 = vld [vmem:[%s9 + $0x10] sm:$0xf]
        %v1946 = vld [vmem:[%s9 + $0x14] sm:$0xf]
        %v1947 = vld [vmem:[%s9 + $0x18] sm:$0xf]
        %v1948 = vld [vmem:[%s9 + $0x1c] sm:$0xf]
        %v1949 = vld [vmem:[%s9 + $0x20] sm:$0xf]
        %v1950 = vld [vmem:[%s9 + $0x24] sm:$0xf]
        %v1951 = vld [vmem:[%s9 + $0x28] sm:$0xf]
        %v1952 = vld [vmem:[%s9 + $0x2c] sm:$0xf]
        %v1953 = vld [vmem:[%s9 + $0x30] sm:$0xf]
        %v1954 = vld [vmem:[%s9 + $0x34] sm:$0xf]
        %v1955 = vld [vmem:[%s9 + $0x38] sm:$0xf]
        %v1956 = vld [vmem:[%s9 + $0x3c] sm:$0xf]
        %v1973 = vunpack.c.l.b16 %v1941
        %v1974 = vunpack.c.l.b16 %v1942
        %v1975 = vunpack.c.l.b16 %v1943
        %v1976 = vunpack.c.l.b16 %v1944
        %v1977 = vunpack.c.l.b16 %v1945
        %v1978 = vunpack.c.l.b16 %v1946
        %v1979 = vunpack.c.l.b16 %v1947
        %v1980 = vunpack.c.l.b16 %v1948
        %v1981 = vunpack.c.l.b16 %v1949
        %v1982 = vunpack.c.l.b16 %v1950
        %v1983 = vunpack.c.l.b16 %v1951
        %v1984 = vunpack.c.l.b16 %v1952
        %v1985 = vunpack.c.l.b16 %v1953
        %v1986 = vunpack.c.l.b16 %v1954
        %v1987 = vunpack.c.l.b16 %v1955
        %v1988 = vunpack.c.l.b16 %v1956
        %v1989 = vpack.c.b16 %v1974, %v1973
        %v1990 = vpack.c.b16 %v1976, %v1975
        %v1991 = vpack.c.b16 %v1978, %v1977
        %v1992 = vpack.c.b16 %v1980, %v1979
        %v1993 = vpack.c.b16 %v1982, %v1981
        %v1994 = vpack.c.b16 %v1984, %v1983
        %v1995 = vpack.c.b16 %v1986, %v1985
        %v1996 = vpack.c.b16 %v1988, %v1987
        %2005 = vmatpush.bf16.msra.mxu0 %v1996
        %2006 = vmatpush.bf16.msra.mxu0 %v1995
        %2007 = vmatpush.bf16.msra.mxu0 %v1994
        %2008 = vmatpush.bf16.msra.mxu0 %v1993
        %2009 = vmatpush.bf16.msra.mxu0 %v1992
        %2010 = vmatpush.bf16.msra.mxu0 %v1991
        %2011 = vmatpush.bf16.msra.mxu0 %v1990
        %2012 = vmatpush.bf16.msra.mxu0 %v1989
        %2013 = vmatmul.bf16.gmra.mxu0 %v637
        %v2014 = vpop.f32.mrf.mxu0
        %v2015 = vadd.f32 0.0, %v2014
        %v2016 = vpop.f32.mrf.mxu0
        %2017 = vdwg.mxu0
        %2019 = vset.pattern.permute.xlu0 0
        %2020 = vperm.xlu0 %2019, %v1940
        %v2021 = vpop.permute.xlu0 %2020
        %v2023 = vmul.f32 %v2015, %v2021
        %v2024 = vpack.c.bf16 %v1814, %v1812
        %v2025 = vpack.c.bf16 %v1818, %v1816
        %v2026 = vpack.c.bf16 %v1822, %v1820
        %v2027 = vpack.c.bf16 %v1826, %v1824
        %v2028 = vpack.c.bf16 %v1830, %v1828
        %v2029 = vpack.c.bf16 %v1834, %v1832
        %v2030 = vpack.c.bf16 %v1838, %v1836
        %v2031 = vpack.c.bf16 %v1842, %v1840
        %v2032 = vpack.c.bf16 %v1846, %v1844
        %v2033 = vpack.c.bf16 %v1850, %v1848
        %v2034 = vpack.c.bf16 %v1854, %v1852
        %v2035 = vpack.c.bf16 %v1858, %v1856
        %v2036 = vpack.c.bf16 %v1862, %v1860
        %v2037 = vpack.c.bf16 %v1866, %v1864
        %v2038 = vpack.c.bf16 %v1870, %v1868
        %v2039 = vpack.c.bf16 %v1874, %v1872
        %v2040 = vpack.c.bf16 %v1878, %v1876
        %v2041 = vpack.c.bf16 %v1882, %v1880
        %v2042 = vpack.c.bf16 %v1886, %v1884
        %v2043 = vpack.c.bf16 %v1890, %v1888
        %v2044 = vpack.c.bf16 %v1894, %v1892
        %v2045 = vpack.c.bf16 %v1898, %v1896
        %v2046 = vpack.c.bf16 %v1902, %v1900
        %v2047 = vpack.c.bf16 %v1906, %v1904
        %v2048 = vpack.c.bf16 %v1910, %v1908
        %v2049 = vpack.c.bf16 %v1914, %v1912
        %v2050 = vpack.c.bf16 %v1918, %v1916
        %v2051 = vpack.c.bf16 %v1922, %v1920
        %v2052 = vpack.c.bf16 %v1926, %v1924
        %v2053 = vpack.c.bf16 %v1930, %v1928
        %v2054 = vpack.c.bf16 %v1934, %v1932
        %v2055 = vpack.c.bf16 %v1938, %v1936
        %v2056 = vpack.c.bf16 %v2023, %v2023
        %vm2057 = vcmask 64512
        %v2059 = vsel %vm2057, %v2024, 0
        %v2062 = vsel %vm2057, %v2025, 0
        %v2065 = vsel %vm2057, %v2026, 0
        %v2068 = vsel %vm2057, %v2027, 0
        %v2071 = vsel %vm2057, %v2028, 0
        %v2074 = vsel %vm2057, %v2029, 0
        %v2077 = vsel %vm2057, %v2030, 0
        %v2080 = vsel %vm2057, %v2031, 0
        %v2083 = vsel %vm2057, %v2032, 0
        %v2086 = vsel %vm2057, %v2033, 0
        %v2089 = vsel %vm2057, %v2034, 0
        %v2092 = vsel %vm2057, %v2035, 0
        %v2095 = vsel %vm2057, %v2036, 0
        %v2098 = vsel %vm2057, %v2037, 0
        %v2101 = vsel %vm2057, %v2038, 0
        %v2104 = vsel %vm2057, %v2039, 0
        %v2107 = vsel %vm2057, %v2040, 0
        %v2110 = vsel %vm2057, %v2041, 0
        %v2113 = vsel %vm2057, %v2042, 0
        %v2116 = vsel %vm2057, %v2043, 0
        %v2119 = vsel %vm2057, %v2044, 0
        %v2122 = vsel %vm2057, %v2045, 0
        %v2125 = vsel %vm2057, %v2046, 0
        %v2128 = vsel %vm2057, %v2047, 0
        %v2131 = vsel %vm2057, %v2048, 0
        %v2134 = vsel %vm2057, %v2049, 0
        %v2137 = vsel %vm2057, %v2050, 0
        %v2140 = vsel %vm2057, %v2051, 0
        %v2143 = vsel %vm2057, %v2052, 0
        %v2146 = vsel %vm2057, %v2053, 0
        %v2149 = vsel %vm2057, %v2054, 0
        %v2152 = vsel %vm2057, %v2055, 0
        %vm2154 = vcmask 1043456
        %v2156 = vsel %vm2154, %v2056, 0
        %2158 = vmatpush.bf16.msra.mxu0 0
        %2159 = vmatpush.bf16.msra.mxu0 0
        %2160 = vmatpush.bf16.msra.mxu0 0
        %2161 = vmatpush.bf16.msra.mxu0 0
        %2162 = vmatpush.bf16.msra.mxu0 0
        %2163 = vmatpush.bf16.msra.mxu0 0
        %2164 = vmatpush.bf16.msra.mxu0 0
        %2165 = vmatpush.bf16.msra.mxu0 %v2156
        %2166 = vmatmul.bf16.gmra.mxu0 %v2059
        %v2167 = vpop.f32.mrf.mxu0
        %v2168 = vadd.f32 0.0, %v2167
        %v2169 = vpop.f32.mrf.mxu0
        %v2170 = vadd.f32 0.0, %v2169
        %2171 = vmatmul.bf16.gmra.mxu0 %v2062
        %v2172 = vpop.f32.mrf.mxu0
        %v2173 = vadd.f32 0.0, %v2172
        %v2174 = vpop.f32.mrf.mxu0
        %v2175 = vadd.f32 0.0, %v2174
        %2176 = vmatmul.bf16.gmra.mxu0 %v2065
        %v2177 = vpop.f32.mrf.mxu0
        %v2178 = vadd.f32 0.0, %v2177
        %v2179 = vpop.f32.mrf.mxu0
        %v2180 = vadd.f32 0.0, %v2179
        %2181 = vmatmul.bf16.gmra.mxu0 %v2068
        %v2182 = vpop.f32.mrf.mxu0
        %v2183 = vadd.f32 0.0, %v2182
        %v2184 = vpop.f32.mrf.mxu0
        %v2185 = vadd.f32 0.0, %v2184
        %2186 = vmatmul.bf16.gmra.mxu0 %v2071
        %v2187 = vpop.f32.mrf.mxu0
        %v2188 = vadd.f32 0.0, %v2187
        %v2189 = vpop.f32.mrf.mxu0
        %v2190 = vadd.f32 0.0, %v2189
        %2191 = vmatmul.bf16.gmra.mxu0 %v2074
        %v2192 = vpop.f32.mrf.mxu0
        %v2193 = vadd.f32 0.0, %v2192
        %v2194 = vpop.f32.mrf.mxu0
        %v2195 = vadd.f32 0.0, %v2194
        %2196 = vmatmul.bf16.gmra.mxu0 %v2077
        %v2197 = vpop.f32.mrf.mxu0
        %v2198 = vadd.f32 0.0, %v2197
        %v2199 = vpop.f32.mrf.mxu0
        %v2200 = vadd.f32 0.0, %v2199
        %2201 = vmatmul.bf16.gmra.mxu0 %v2080
        %v2202 = vpop.f32.mrf.mxu0
        %v2203 = vadd.f32 0.0, %v2202
        %v2204 = vpop.f32.mrf.mxu0
        %v2205 = vadd.f32 0.0, %v2204
        %2206 = vmatmul.bf16.gmra.mxu0 %v2083
        %v2207 = vpop.f32.mrf.mxu0
        %v2208 = vadd.f32 0.0, %v2207
        %v2209 = vpop.f32.mrf.mxu0
        %v2210 = vadd.f32 0.0, %v2209
        %2211 = vmatmul.bf16.gmra.mxu0 %v2086
        %v2212 = vpop.f32.mrf.mxu0
        %v2213 = vadd.f32 0.0, %v2212
        %v2214 = vpop.f32.mrf.mxu0
        %v2215 = vadd.f32 0.0, %v2214
        %2216 = vmatmul.bf16.gmra.mxu0 %v2089
        %v2217 = vpop.f32.mrf.mxu0
        %v2218 = vadd.f32 0.0, %v2217
        %v2219 = vpop.f32.mrf.mxu0
        %v2220 = vadd.f32 0.0, %v2219
        %2221 = vmatmul.bf16.gmra.mxu0 %v2092
        %v2222 = vpop.f32.mrf.mxu0
        %v2223 = vadd.f32 0.0, %v2222
        %v2224 = vpop.f32.mrf.mxu0
        %v2225 = vadd.f32 0.0, %v2224
        %2226 = vmatmul.bf16.gmra.mxu0 %v2095
        %v2227 = vpop.f32.mrf.mxu0
        %v2228 = vadd.f32 0.0, %v2227
        %v2229 = vpop.f32.mrf.mxu0
        %v2230 = vadd.f32 0.0, %v2229
        %2231 = vmatmul.bf16.gmra.mxu0 %v2098
        %v2232 = vpop.f32.mrf.mxu0
        %v2233 = vadd.f32 0.0, %v2232
        %v2234 = vpop.f32.mrf.mxu0
        %v2235 = vadd.f32 0.0, %v2234
        %2236 = vmatmul.bf16.gmra.mxu0 %v2101
        %v2237 = vpop.f32.mrf.mxu0
        %v2238 = vadd.f32 0.0, %v2237
        %v2239 = vpop.f32.mrf.mxu0
        %v2240 = vadd.f32 0.0, %v2239
        %2241 = vmatmul.bf16.gmra.mxu0 %v2104
        %v2242 = vpop.f32.mrf.mxu0
        %v2243 = vadd.f32 0.0, %v2242
        %v2244 = vpop.f32.mrf.mxu0
        %v2245 = vadd.f32 0.0, %v2244
        %2246 = vmatmul.bf16.gmra.mxu0 %v2107
        %v2247 = vpop.f32.mrf.mxu0
        %v2248 = vadd.f32 0.0, %v2247
        %v2249 = vpop.f32.mrf.mxu0
        %v2250 = vadd.f32 0.0, %v2249
        %2251 = vmatmul.bf16.gmra.mxu0 %v2110
        %v2252 = vpop.f32.mrf.mxu0
        %v2253 = vadd.f32 0.0, %v2252
        %v2254 = vpop.f32.mrf.mxu0
        %v2255 = vadd.f32 0.0, %v2254
        %2256 = vmatmul.bf16.gmra.mxu0 %v2113
        %v2257 = vpop.f32.mrf.mxu0
        %v2258 = vadd.f32 0.0, %v2257
        %v2259 = vpop.f32.mrf.mxu0
        %v2260 = vadd.f32 0.0, %v2259
        %2261 = vmatmul.bf16.gmra.mxu0 %v2116
        %v2262 = vpop.f32.mrf.mxu0
        %v2263 = vadd.f32 0.0, %v2262
        %v2264 = vpop.f32.mrf.mxu0
        %v2265 = vadd.f32 0.0, %v2264
        %2266 = vmatmul.bf16.gmra.mxu0 %v2119
        %v2267 = vpop.f32.mrf.mxu0
        %v2268 = vadd.f32 0.0, %v2267
        %v2269 = vpop.f32.mrf.mxu0
        %v2270 = vadd.f32 0.0, %v2269
        %2271 = vmatmul.bf16.gmra.mxu0 %v2122
        %v2272 = vpop.f32.mrf.mxu0
        %v2273 = vadd.f32 0.0, %v2272
        %v2274 = vpop.f32.mrf.mxu0
        %v2275 = vadd.f32 0.0, %v2274
        %2276 = vmatmul.bf16.gmra.mxu0 %v2125
        %v2277 = vpop.f32.mrf.mxu0
        %v2278 = vadd.f32 0.0, %v2277
        %v2279 = vpop.f32.mrf.mxu0
        %v2280 = vadd.f32 0.0, %v2279
        %2281 = vmatmul.bf16.gmra.mxu0 %v2128
        %v2282 = vpop.f32.mrf.mxu0
        %v2283 = vadd.f32 0.0, %v2282
        %v2284 = vpop.f32.mrf.mxu0
        %v2285 = vadd.f32 0.0, %v2284
        %2286 = vmatmul.bf16.gmra.mxu0 %v2131
        %v2287 = vpop.f32.mrf.mxu0
        %v2288 = vadd.f32 0.0, %v2287
        %v2289 = vpop.f32.mrf.mxu0
        %v2290 = vadd.f32 0.0, %v2289
        %2291 = vmatmul.bf16.gmra.mxu0 %v2134
        %v2292 = vpop.f32.mrf.mxu0
        %v2293 = vadd.f32 0.0, %v2292
        %v2294 = vpop.f32.mrf.mxu0
        %v2295 = vadd.f32 0.0, %v2294
        %2296 = vmatmul.bf16.gmra.mxu0 %v2137
        %v2297 = vpop.f32.mrf.mxu0
        %v2298 = vadd.f32 0.0, %v2297
        %v2299 = vpop.f32.mrf.mxu0
        %v2300 = vadd.f32 0.0, %v2299
        %2301 = vmatmul.bf16.gmra.mxu0 %v2140
        %v2302 = vpop.f32.mrf.mxu0
        %v2303 = vadd.f32 0.0, %v2302
        %v2304 = vpop.f32.mrf.mxu0
        %v2305 = vadd.f32 0.0, %v2304
        %2306 = vmatmul.bf16.gmra.mxu0 %v2143
        %v2307 = vpop.f32.mrf.mxu0
        %v2308 = vadd.f32 0.0, %v2307
        %v2309 = vpop.f32.mrf.mxu0
        %v2310 = vadd.f32 0.0, %v2309
        %2311 = vmatmul.bf16.gmra.mxu0 %v2146
        %v2312 = vpop.f32.mrf.mxu0
        %v2313 = vadd.f32 0.0, %v2312
        %v2314 = vpop.f32.mrf.mxu0
        %v2315 = vadd.f32 0.0, %v2314
        %2316 = vmatmul.bf16.gmra.mxu0 %v2149
        %v2317 = vpop.f32.mrf.mxu0
        %v2318 = vadd.f32 0.0, %v2317
        %v2319 = vpop.f32.mrf.mxu0
        %v2320 = vadd.f32 0.0, %v2319
        %2321 = vmatmul.bf16.gmra.mxu0 %v2152
        %v2322 = vpop.f32.mrf.mxu0
        %v2323 = vadd.f32 0.0, %v2322
        %v2324 = vpop.f32.mrf.mxu0
        %v2325 = vadd.f32 0.0, %v2324
        %2326 = vdwg.mxu0
        %v2327 = vpack.c.bf16 %v2170, %v2168
        %v2328 = vpack.c.bf16 %v2175, %v2173
        %v2329 = vpack.c.bf16 %v2180, %v2178
        %v2330 = vpack.c.bf16 %v2185, %v2183
        %v2331 = vpack.c.bf16 %v2190, %v2188
        %v2332 = vpack.c.bf16 %v2195, %v2193
        %v2333 = vpack.c.bf16 %v2200, %v2198
        %v2334 = vpack.c.bf16 %v2205, %v2203
        %v2335 = vpack.c.bf16 %v2210, %v2208
        %v2336 = vpack.c.bf16 %v2215, %v2213
        %v2337 = vpack.c.bf16 %v2220, %v2218
        %v2338 = vpack.c.bf16 %v2225, %v2223
        %v2339 = vpack.c.bf16 %v2230, %v2228
        %v2340 = vpack.c.bf16 %v2235, %v2233
        %v2341 = vpack.c.bf16 %v2240, %v2238
        %v2342 = vpack.c.bf16 %v2245, %v2243
        %v2343 = vpack.c.bf16 %v2250, %v2248
        %v2344 = vpack.c.bf16 %v2255, %v2253
        %v2345 = vpack.c.bf16 %v2260, %v2258
        %v2346 = vpack.c.bf16 %v2265, %v2263
        %v2347 = vpack.c.bf16 %v2270, %v2268
        %v2348 = vpack.c.bf16 %v2275, %v2273
        %v2349 = vpack.c.bf16 %v2280, %v2278
        %v2350 = vpack.c.bf16 %v2285, %v2283
        %v2351 = vpack.c.bf16 %v2290, %v2288
        %v2352 = vpack.c.bf16 %v2295, %v2293
        %v2353 = vpack.c.bf16 %v2300, %v2298
        %v2354 = vpack.c.bf16 %v2305, %v2303
        %v2355 = vpack.c.bf16 %v2310, %v2308
        %v2356 = vpack.c.bf16 %v2315, %v2313
        %v2357 = vpack.c.bf16 %v2320, %v2318
        %v2358 = vpack.c.bf16 %v2325, %v2323
        %v2359 = vld [vmem:[%s10] sm:$0xf]
        %v2360 = vld [vmem:[%s10 + $0x4] sm:$0xf]
        %v2361 = vld [vmem:[%s10 + $0x8] sm:$0xf]
        %v2362 = vld [vmem:[%s10 + $0xc] sm:$0xf]
        %v2363 = vld [vmem:[%s10 + $0x10] sm:$0xf]
        %v2364 = vld [vmem:[%s10 + $0x14] sm:$0xf]
        %v2365 = vld [vmem:[%s10 + $0x18] sm:$0xf]
        %v2366 = vld [vmem:[%s10 + $0x1c] sm:$0xf]
        %v2367 = vld [vmem:[%s10 + $0x20] sm:$0xf]
        %v2368 = vld [vmem:[%s10 + $0x24] sm:$0xf]
        %v2369 = vld [vmem:[%s10 + $0x28] sm:$0xf]
        %v2370 = vld [vmem:[%s10 + $0x2c] sm:$0xf]
        %v2371 = vld [vmem:[%s10 + $0x30] sm:$0xf]
        %v2372 = vld [vmem:[%s10 + $0x34] sm:$0xf]
        %v2373 = vld [vmem:[%s10 + $0x38] sm:$0xf]
        %v2374 = vld [vmem:[%s10 + $0x3c] sm:$0xf]
        %v2375 = vld [vmem:[%s11] sm:$0x1]
        %v2377 = vperm.slane %v2375, 0
        %v2395 = vunpack.c.l.b16 %v2359
        %v2396 = vunpack.c.l.b16 %v2360
        %v2397 = vunpack.c.l.b16 %v2361
        %v2398 = vunpack.c.l.b16 %v2362
        %v2399 = vunpack.c.l.b16 %v2363
        %v2400 = vunpack.c.l.b16 %v2364
        %v2401 = vunpack.c.l.b16 %v2365
        %v2402 = vunpack.c.l.b16 %v2366
        %v2403 = vunpack.c.l.b16 %v2367
        %v2404 = vunpack.c.l.b16 %v2368
        %v2405 = vunpack.c.l.b16 %v2369
        %v2406 = vunpack.c.l.b16 %v2370
        %v2407 = vunpack.c.l.b16 %v2371
        %v2408 = vunpack.c.l.b16 %v2372
        %v2409 = vunpack.c.l.b16 %v2373
        %v2410 = vunpack.c.l.b16 %v2374
        %v2411 = vpack.c.b16 %v2396, %v2395
        %v2412 = vpack.c.b16 %v2398, %v2397
        %v2413 = vpack.c.b16 %v2400, %v2399
        %v2414 = vpack.c.b16 %v2402, %v2401
        %v2415 = vpack.c.b16 %v2404, %v2403
        %v2416 = vpack.c.b16 %v2406, %v2405
        %v2417 = vpack.c.b16 %v2408, %v2407
        %v2418 = vpack.c.b16 %v2410, %v2409
        %2427 = vmatpush.bf16.msra.mxu0 %v2418
        %2428 = vmatpush.bf16.msra.mxu0 %v2417
        %2429 = vmatpush.bf16.msra.mxu0 %v2416
        %2430 = vmatpush.bf16.msra.mxu0 %v2415
        %2431 = vmatpush.bf16.msra.mxu0 %v2414
        %2432 = vmatpush.bf16.msra.mxu0 %v2413
        %2433 = vmatpush.bf16.msra.mxu0 %v2412
        %2434 = vmatpush.bf16.msra.mxu0 %v2411
        %2435 = vmatmul.bf16.gmra.mxu0 %v2327
        %v2436 = vpop.f32.mrf.mxu0
        %v2437 = vadd.f32 %v2377, %v2436
        %v2438 = vpop.f32.mrf.mxu0
        %v2439 = vadd.f32 %v2377, %v2438
        %2440 = vmatmul.bf16.gmra.mxu0 %v2328
        %v2441 = vpop.f32.mrf.mxu0
        %v2442 = vadd.f32 %v2377, %v2441
        %v2443 = vpop.f32.mrf.mxu0
        %v2444 = vadd.f32 %v2377, %v2443
        %2445 = vmatmul.bf16.gmra.mxu0 %v2329
        %v2446 = vpop.f32.mrf.mxu0
        %v2447 = vadd.f32 %v2377, %v2446
        %v2448 = vpop.f32.mrf.mxu0
        %v2449 = vadd.f32 %v2377, %v2448
        %2450 = vmatmul.bf16.gmra.mxu0 %v2330
        %v2451 = vpop.f32.mrf.mxu0
        %v2452 = vadd.f32 %v2377, %v2451
        %v2453 = vpop.f32.mrf.mxu0
        %v2454 = vadd.f32 %v2377, %v2453
        %2455 = vmatmul.bf16.gmra.mxu0 %v2331
        %v2456 = vpop.f32.mrf.mxu0
        %v2457 = vadd.f32 %v2377, %v2456
        %v2458 = vpop.f32.mrf.mxu0
        %v2459 = vadd.f32 %v2377, %v2458
        %2460 = vmatmul.bf16.gmra.mxu0 %v2332
        %v2461 = vpop.f32.mrf.mxu0
        %v2462 = vadd.f32 %v2377, %v2461
        %v2463 = vpop.f32.mrf.mxu0
        %v2464 = vadd.f32 %v2377, %v2463
        %2465 = vmatmul.bf16.gmra.mxu0 %v2333
        %v2466 = vpop.f32.mrf.mxu0
        %v2467 = vadd.f32 %v2377, %v2466
        %v2468 = vpop.f32.mrf.mxu0
        %v2469 = vadd.f32 %v2377, %v2468
        %2470 = vmatmul.bf16.gmra.mxu0 %v2334
        %v2471 = vpop.f32.mrf.mxu0
        %v2472 = vadd.f32 %v2377, %v2471
        %v2473 = vpop.f32.mrf.mxu0
        %v2474 = vadd.f32 %v2377, %v2473
        %2475 = vmatmul.bf16.gmra.mxu0 %v2335
        %v2476 = vpop.f32.mrf.mxu0
        %v2477 = vadd.f32 %v2377, %v2476
        %v2478 = vpop.f32.mrf.mxu0
        %v2479 = vadd.f32 %v2377, %v2478
        %2480 = vmatmul.bf16.gmra.mxu0 %v2336
        %v2481 = vpop.f32.mrf.mxu0
        %v2482 = vadd.f32 %v2377, %v2481
        %v2483 = vpop.f32.mrf.mxu0
        %v2484 = vadd.f32 %v2377, %v2483
        %2485 = vmatmul.bf16.gmra.mxu0 %v2337
        %v2486 = vpop.f32.mrf.mxu0
        %v2487 = vadd.f32 %v2377, %v2486
        %v2488 = vpop.f32.mrf.mxu0
        %v2489 = vadd.f32 %v2377, %v2488
        %2490 = vmatmul.bf16.gmra.mxu0 %v2338
        %v2491 = vpop.f32.mrf.mxu0
        %v2492 = vadd.f32 %v2377, %v2491
        %v2493 = vpop.f32.mrf.mxu0
        %v2494 = vadd.f32 %v2377, %v2493
        %2495 = vmatmul.bf16.gmra.mxu0 %v2339
        %v2496 = vpop.f32.mrf.mxu0
        %v2497 = vadd.f32 %v2377, %v2496
        %v2498 = vpop.f32.mrf.mxu0
        %v2499 = vadd.f32 %v2377, %v2498
        %2500 = vmatmul.bf16.gmra.mxu0 %v2340
        %v2501 = vpop.f32.mrf.mxu0
        %v2502 = vadd.f32 %v2377, %v2501
        %v2503 = vpop.f32.mrf.mxu0
        %v2504 = vadd.f32 %v2377, %v2503
        %2505 = vmatmul.bf16.gmra.mxu0 %v2341
        %v2506 = vpop.f32.mrf.mxu0
        %v2507 = vadd.f32 %v2377, %v2506
        %v2508 = vpop.f32.mrf.mxu0
        %v2509 = vadd.f32 %v2377, %v2508
        %2510 = vmatmul.bf16.gmra.mxu0 %v2342
        %v2511 = vpop.f32.mrf.mxu0
        %v2512 = vadd.f32 %v2377, %v2511
        %v2513 = vpop.f32.mrf.mxu0
        %v2514 = vadd.f32 %v2377, %v2513
        %2515 = vmatmul.bf16.gmra.mxu0 %v2343
        %v2516 = vpop.f32.mrf.mxu0
        %v2517 = vadd.f32 %v2377, %v2516
        %v2518 = vpop.f32.mrf.mxu0
        %v2519 = vadd.f32 %v2377, %v2518
        %2520 = vmatmul.bf16.gmra.mxu0 %v2344
        %v2521 = vpop.f32.mrf.mxu0
        %v2522 = vadd.f32 %v2377, %v2521
        %v2523 = vpop.f32.mrf.mxu0
        %v2524 = vadd.f32 %v2377, %v2523
        %2525 = vmatmul.bf16.gmra.mxu0 %v2345
        %v2526 = vpop.f32.mrf.mxu0
        %v2527 = vadd.f32 %v2377, %v2526
        %v2528 = vpop.f32.mrf.mxu0
        %v2529 = vadd.f32 %v2377, %v2528
        %2530 = vmatmul.bf16.gmra.mxu0 %v2346
        %v2531 = vpop.f32.mrf.mxu0
        %v2532 = vadd.f32 %v2377, %v2531
        %v2533 = vpop.f32.mrf.mxu0
        %v2534 = vadd.f32 %v2377, %v2533
        %2535 = vmatmul.bf16.gmra.mxu0 %v2347
        %v2536 = vpop.f32.mrf.mxu0
        %v2537 = vadd.f32 %v2377, %v2536
        %v2538 = vpop.f32.mrf.mxu0
        %v2539 = vadd.f32 %v2377, %v2538
        %2540 = vmatmul.bf16.gmra.mxu0 %v2348
        %v2541 = vpop.f32.mrf.mxu0
        %v2542 = vadd.f32 %v2377, %v2541
        %v2543 = vpop.f32.mrf.mxu0
        %v2544 = vadd.f32 %v2377, %v2543
        %2545 = vmatmul.bf16.gmra.mxu0 %v2349
        %v2546 = vpop.f32.mrf.mxu0
        %v2547 = vadd.f32 %v2377, %v2546
        %v2548 = vpop.f32.mrf.mxu0
        %v2549 = vadd.f32 %v2377, %v2548
        %2550 = vmatmul.bf16.gmra.mxu0 %v2350
        %v2551 = vpop.f32.mrf.mxu0
        %v2552 = vadd.f32 %v2377, %v2551
        %v2553 = vpop.f32.mrf.mxu0
        %v2554 = vadd.f32 %v2377, %v2553
        %2555 = vmatmul.bf16.gmra.mxu0 %v2351
        %v2556 = vpop.f32.mrf.mxu0
        %v2557 = vadd.f32 %v2377, %v2556
        %v2558 = vpop.f32.mrf.mxu0
        %v2559 = vadd.f32 %v2377, %v2558
        %2560 = vmatmul.bf16.gmra.mxu0 %v2352
        %v2561 = vpop.f32.mrf.mxu0
        %v2562 = vadd.f32 %v2377, %v2561
        %v2563 = vpop.f32.mrf.mxu0
        %v2564 = vadd.f32 %v2377, %v2563
        %2565 = vmatmul.bf16.gmra.mxu0 %v2353
        %v2566 = vpop.f32.mrf.mxu0
        %v2567 = vadd.f32 %v2377, %v2566
        %v2568 = vpop.f32.mrf.mxu0
        %v2569 = vadd.f32 %v2377, %v2568
        %2570 = vmatmul.bf16.gmra.mxu0 %v2354
        %v2571 = vpop.f32.mrf.mxu0
        %v2572 = vadd.f32 %v2377, %v2571
        %v2573 = vpop.f32.mrf.mxu0
        %v2574 = vadd.f32 %v2377, %v2573
        %2575 = vmatmul.bf16.gmra.mxu0 %v2355
        %v2576 = vpop.f32.mrf.mxu0
        %v2577 = vadd.f32 %v2377, %v2576
        %v2578 = vpop.f32.mrf.mxu0
        %v2579 = vadd.f32 %v2377, %v2578
        %2580 = vmatmul.bf16.gmra.mxu0 %v2356
        %v2581 = vpop.f32.mrf.mxu0
        %v2582 = vadd.f32 %v2377, %v2581
        %v2583 = vpop.f32.mrf.mxu0
        %v2584 = vadd.f32 %v2377, %v2583
        %2585 = vmatmul.bf16.gmra.mxu0 %v2357
        %v2586 = vpop.f32.mrf.mxu0
        %v2587 = vadd.f32 %v2377, %v2586
        %v2588 = vpop.f32.mrf.mxu0
        %v2589 = vadd.f32 %v2377, %v2588
        %2590 = vmatmul.bf16.gmra.mxu0 %v2358
        %v2591 = vpop.f32.mrf.mxu0
        %v2592 = vadd.f32 %v2377, %v2591
        %v2593 = vpop.f32.mrf.mxu0
        %v2594 = vadd.f32 %v2377, %v2593
        %2595 = vdwg.mxu0
        %v2596 = vmax.f32 %v2437, 0.0
        %v2597 = vmax.f32 %v2439, 0.0
        %v2598 = vmax.f32 %v2442, 0.0
        %v2599 = vmax.f32 %v2444, 0.0
        %v2600 = vmax.f32 %v2447, 0.0
        %v2601 = vmax.f32 %v2449, 0.0
        %v2602 = vmax.f32 %v2452, 0.0
        %v2603 = vmax.f32 %v2454, 0.0
        %v2604 = vmax.f32 %v2457, 0.0
        %v2605 = vmax.f32 %v2459, 0.0
        %v2606 = vmax.f32 %v2462, 0.0
        %v2607 = vmax.f32 %v2464, 0.0
        %v2608 = vmax.f32 %v2467, 0.0
        %v2609 = vmax.f32 %v2469, 0.0
        %v2610 = vmax.f32 %v2472, 0.0
        %v2611 = vmax.f32 %v2474, 0.0
        %v2612 = vmax.f32 %v2477, 0.0
        %v2613 = vmax.f32 %v2479, 0.0
        %v2614 = vmax.f32 %v2482, 0.0
        %v2615 = vmax.f32 %v2484, 0.0
        %v2616 = vmax.f32 %v2487, 0.0
        %v2617 = vmax.f32 %v2489, 0.0
        %v2618 = vmax.f32 %v2492, 0.0
        %v2619 = vmax.f32 %v2494, 0.0
        %v2620 = vmax.f32 %v2497, 0.0
        %v2621 = vmax.f32 %v2499, 0.0
        %v2622 = vmax.f32 %v2502, 0.0
        %v2623 = vmax.f32 %v2504, 0.0
        %v2624 = vmax.f32 %v2507, 0.0
        %v2625 = vmax.f32 %v2509, 0.0
        %v2626 = vmax.f32 %v2512, 0.0
        %v2627 = vmax.f32 %v2514, 0.0
        %v2628 = vmax.f32 %v2517, 0.0
        %v2629 = vmax.f32 %v2519, 0.0
        %v2630 = vmax.f32 %v2522, 0.0
        %v2631 = vmax.f32 %v2524, 0.0
        %v2632 = vmax.f32 %v2527, 0.0
        %v2633 = vmax.f32 %v2529, 0.0
        %v2634 = vmax.f32 %v2532, 0.0
        %v2635 = vmax.f32 %v2534, 0.0
        %v2636 = vmax.f32 %v2537, 0.0
        %v2637 = vmax.f32 %v2539, 0.0
        %v2638 = vmax.f32 %v2542, 0.0
        %v2639 = vmax.f32 %v2544, 0.0
        %v2640 = vmax.f32 %v2547, 0.0
        %v2641 = vmax.f32 %v2549, 0.0
        %v2642 = vmax.f32 %v2552, 0.0
        %v2643 = vmax.f32 %v2554, 0.0
        %v2644 = vmax.f32 %v2557, 0.0
        %v2645 = vmax.f32 %v2559, 0.0
        %v2646 = vmax.f32 %v2562, 0.0
        %v2647 = vmax.f32 %v2564, 0.0
        %v2648 = vmax.f32 %v2567, 0.0
        %v2649 = vmax.f32 %v2569, 0.0
        %v2650 = vmax.f32 %v2572, 0.0
        %v2651 = vmax.f32 %v2574, 0.0
        %v2652 = vmax.f32 %v2577, 0.0
        %v2653 = vmax.f32 %v2579, 0.0
        %v2654 = vmax.f32 %v2582, 0.0
        %v2655 = vmax.f32 %v2584, 0.0
        %v2656 = vmax.f32 %v2587, 0.0
        %v2657 = vmax.f32 %v2589, 0.0
        %v2658 = vmax.f32 %v2592, 0.0
        %v2659 = vmax.f32 %v2594, 0.0
        %v2660 = vpack.c.bf16 %v2597, %v2596
        %v2661 = vpack.c.bf16 %v2599, %v2598
        %v2662 = vpack.c.bf16 %v2601, %v2600
        %v2663 = vpack.c.bf16 %v2603, %v2602
        %v2664 = vpack.c.bf16 %v2605, %v2604
        %v2665 = vpack.c.bf16 %v2607, %v2606
        %v2666 = vpack.c.bf16 %v2609, %v2608
        %v2667 = vpack.c.bf16 %v2611, %v2610
        %v2668 = vpack.c.bf16 %v2613, %v2612
        %v2669 = vpack.c.bf16 %v2615, %v2614
        %v2670 = vpack.c.bf16 %v2617, %v2616
        %v2671 = vpack.c.bf16 %v2619, %v2618
        %v2672 = vpack.c.bf16 %v2621, %v2620
        %v2673 = vpack.c.bf16 %v2623, %v2622
        %v2674 = vpack.c.bf16 %v2625, %v2624
        %v2675 = vpack.c.bf16 %v2627, %v2626
        %v2676 = vpack.c.bf16 %v2629, %v2628
        %v2677 = vpack.c.bf16 %v2631, %v2630
        %v2678 = vpack.c.bf16 %v2633, %v2632
        %v2679 = vpack.c.bf16 %v2635, %v2634
        %v2680 = vpack.c.bf16 %v2637, %v2636
        %v2681 = vpack.c.bf16 %v2639, %v2638
        %v2682 = vpack.c.bf16 %v2641, %v2640
        %v2683 = vpack.c.bf16 %v2643, %v2642
        %v2684 = vpack.c.bf16 %v2645, %v2644
        %v2685 = vpack.c.bf16 %v2647, %v2646
        %v2686 = vpack.c.bf16 %v2649, %v2648
        %v2687 = vpack.c.bf16 %v2651, %v2650
        %v2688 = vpack.c.bf16 %v2653, %v2652
        %v2689 = vpack.c.bf16 %v2655, %v2654
        %v2690 = vpack.c.bf16 %v2657, %v2656
        %v2691 = vpack.c.bf16 %v2659, %v2658
        %v2692 = vld [vmem:[%s12] sm:$0xf]
        %v2693 = vld [vmem:[%s12 + $0x4] sm:$0xf]
        %v2694 = vld [vmem:[%s12 + $0x8] sm:$0xf]
        %v2695 = vld [vmem:[%s12 + $0xc] sm:$0xf]
        %v2696 = vld [vmem:[%s12 + $0x10] sm:$0xf]
        %v2697 = vld [vmem:[%s12 + $0x14] sm:$0xf]
        %v2698 = vld [vmem:[%s12 + $0x18] sm:$0xf]
        %v2699 = vld [vmem:[%s12 + $0x1c] sm:$0xf]
        %v2700 = vld [vmem:[%s12 + $0x20] sm:$0xf]
        %v2701 = vld [vmem:[%s12 + $0x24] sm:$0xf]
        %v2702 = vld [vmem:[%s12 + $0x28] sm:$0xf]
        %v2703 = vld [vmem:[%s12 + $0x2c] sm:$0xf]
        %v2704 = vld [vmem:[%s12 + $0x30] sm:$0xf]
        %v2705 = vld [vmem:[%s12 + $0x34] sm:$0xf]
        %v2706 = vld [vmem:[%s12 + $0x38] sm:$0xf]
        %v2707 = vld [vmem:[%s12 + $0x3c] sm:$0xf]
        %v2708 = vld [vmem:[%s13] sm:$0xf]
        %v2709 = vld [vmem:[%s13 + $0x4] sm:$0xf]
        %v2710 = vld [vmem:[%s13 + $0x8] sm:$0xf]
        %v2711 = vld [vmem:[%s13 + $0xc] sm:$0xf]
        %v2712 = vld [vmem:[%s13 + $0x10] sm:$0xf]
        %v2713 = vld [vmem:[%s13 + $0x14] sm:$0xf]
        %v2714 = vld [vmem:[%s13 + $0x18] sm:$0xf]
        %v2715 = vld [vmem:[%s13 + $0x1c] sm:$0xf]
        %v2716 = vld [vmem:[%s13 + $0x20] sm:$0xf]
        %v2717 = vld [vmem:[%s13 + $0x24] sm:$0xf]
        %v2718 = vld [vmem:[%s13 + $0x28] sm:$0xf]
        %v2719 = vld [vmem:[%s13 + $0x2c] sm:$0xf]
        %v2720 = vld [vmem:[%s13 + $0x30] sm:$0xf]
        %v2721 = vld [vmem:[%s13 + $0x34] sm:$0xf]
        %v2722 = vld [vmem:[%s13 + $0x38] sm:$0xf]
        %v2723 = vld [vmem:[%s13 + $0x3c] sm:$0xf]
        %v2740 = vunpack.c.l.b16 %v2708
        %v2741 = vunpack.c.l.b16 %v2709
        %v2742 = vunpack.c.l.b16 %v2710
        %v2743 = vunpack.c.l.b16 %v2711
        %v2744 = vunpack.c.l.b16 %v2712
        %v2745 = vunpack.c.l.b16 %v2713
        %v2746 = vunpack.c.l.b16 %v2714
        %v2747 = vunpack.c.l.b16 %v2715
        %v2748 = vunpack.c.l.b16 %v2716
        %v2749 = vunpack.c.l.b16 %v2717
        %v2750 = vunpack.c.l.b16 %v2718
        %v2751 = vunpack.c.l.b16 %v2719
        %v2752 = vunpack.c.l.b16 %v2720
        %v2753 = vunpack.c.l.b16 %v2721
        %v2754 = vunpack.c.l.b16 %v2722
        %v2755 = vunpack.c.l.b16 %v2723
        %v2756 = vpack.c.b16 %v2741, %v2740
        %v2757 = vpack.c.b16 %v2743, %v2742
        %v2758 = vpack.c.b16 %v2745, %v2744
        %v2759 = vpack.c.b16 %v2747, %v2746
        %v2760 = vpack.c.b16 %v2749, %v2748
        %v2761 = vpack.c.b16 %v2751, %v2750
        %v2762 = vpack.c.b16 %v2753, %v2752
        %v2763 = vpack.c.b16 %v2755, %v2754
        %2772 = vmatpush.bf16.msra.mxu0 %v2763
        %2773 = vmatpush.bf16.msra.mxu0 %v2762
        %2774 = vmatpush.bf16.msra.mxu0 %v2761
        %2775 = vmatpush.bf16.msra.mxu0 %v2760
        %2776 = vmatpush.bf16.msra.mxu0 %v2759
        %2777 = vmatpush.bf16.msra.mxu0 %v2758
        %2778 = vmatpush.bf16.msra.mxu0 %v2757
        %2779 = vmatpush.bf16.msra.mxu0 %v2756
        %2780 = vmatmul.bf16.gmra.mxu0 %v786
        %v2781 = vpop.f32.mrf.mxu0
        %v2782 = vadd.f32 0.0, %v2781
        %v2783 = vpop.f32.mrf.mxu0
        %v2784 = vadd.f32 0.0, %v2783
        %2785 = vmatmul.bf16.gmra.mxu0 %v787
        %v2786 = vpop.f32.mrf.mxu0
        %v2787 = vadd.f32 0.0, %v2786
        %v2788 = vpop.f32.mrf.mxu0
        %v2789 = vadd.f32 0.0, %v2788
        %2790 = vmatmul.bf16.gmra.mxu0 %v788
        %v2791 = vpop.f32.mrf.mxu0
        %v2792 = vadd.f32 0.0, %v2791
        %v2793 = vpop.f32.mrf.mxu0
        %v2794 = vadd.f32 0.0, %v2793
        %2795 = vmatmul.bf16.gmra.mxu0 %v789
        %v2796 = vpop.f32.mrf.mxu0
        %v2797 = vadd.f32 0.0, %v2796
        %v2798 = vpop.f32.mrf.mxu0
        %v2799 = vadd.f32 0.0, %v2798
        %2800 = vmatmul.bf16.gmra.mxu0 %v790
        %v2801 = vpop.f32.mrf.mxu0
        %v2802 = vadd.f32 0.0, %v2801
        %v2803 = vpop.f32.mrf.mxu0
        %v2804 = vadd.f32 0.0, %v2803
        %2805 = vmatmul.bf16.gmra.mxu0 %v791
        %v2806 = vpop.f32.mrf.mxu0
        %v2807 = vadd.f32 0.0, %v2806
        %v2808 = vpop.f32.mrf.mxu0
        %v2809 = vadd.f32 0.0, %v2808
        %2810 = vmatmul.bf16.gmra.mxu0 %v792
        %v2811 = vpop.f32.mrf.mxu0
        %v2812 = vadd.f32 0.0, %v2811
        %v2813 = vpop.f32.mrf.mxu0
        %v2814 = vadd.f32 0.0, %v2813
        %2815 = vmatmul.bf16.gmra.mxu0 %v793
        %v2816 = vpop.f32.mrf.mxu0
        %v2817 = vadd.f32 0.0, %v2816
        %v2818 = vpop.f32.mrf.mxu0
        %v2819 = vadd.f32 0.0, %v2818
        %2820 = vmatmul.bf16.gmra.mxu0 %v794
        %v2821 = vpop.f32.mrf.mxu0
        %v2822 = vadd.f32 0.0, %v2821
        %v2823 = vpop.f32.mrf.mxu0
        %v2824 = vadd.f32 0.0, %v2823
        %2825 = vmatmul.bf16.gmra.mxu0 %v795
        %v2826 = vpop.f32.mrf.mxu0
        %v2827 = vadd.f32 0.0, %v2826
        %v2828 = vpop.f32.mrf.mxu0
        %v2829 = vadd.f32 0.0, %v2828
        %2830 = vmatmul.bf16.gmra.mxu0 %v796
        %v2831 = vpop.f32.mrf.mxu0
        %v2832 = vadd.f32 0.0, %v2831
        %v2833 = vpop.f32.mrf.mxu0
        %v2834 = vadd.f32 0.0, %v2833
        %2835 = vmatmul.bf16.gmra.mxu0 %v797
        %v2836 = vpop.f32.mrf.mxu0
        %v2837 = vadd.f32 0.0, %v2836
        %v2838 = vpop.f32.mrf.mxu0
        %v2839 = vadd.f32 0.0, %v2838
        %2840 = vmatmul.bf16.gmra.mxu0 %v798
        %v2841 = vpop.f32.mrf.mxu0
        %v2842 = vadd.f32 0.0, %v2841
        %v2843 = vpop.f32.mrf.mxu0
        %v2844 = vadd.f32 0.0, %v2843
        %2845 = vmatmul.bf16.gmra.mxu0 %v799
        %v2846 = vpop.f32.mrf.mxu0
        %v2847 = vadd.f32 0.0, %v2846
        %v2848 = vpop.f32.mrf.mxu0
        %v2849 = vadd.f32 0.0, %v2848
        %2850 = vmatmul.bf16.gmra.mxu0 %v800
        %v2851 = vpop.f32.mrf.mxu0
        %v2852 = vadd.f32 0.0, %v2851
        %v2853 = vpop.f32.mrf.mxu0
        %v2854 = vadd.f32 0.0, %v2853
        %2855 = vmatmul.bf16.gmra.mxu0 %v801
        %v2856 = vpop.f32.mrf.mxu0
        %v2857 = vadd.f32 0.0, %v2856
        %v2858 = vpop.f32.mrf.mxu0
        %v2859 = vadd.f32 0.0, %v2858
        %2860 = vmatmul.bf16.gmra.mxu0 %v802
        %v2861 = vpop.f32.mrf.mxu0
        %v2862 = vadd.f32 0.0, %v2861
        %v2863 = vpop.f32.mrf.mxu0
        %v2864 = vadd.f32 0.0, %v2863
        %2865 = vmatmul.bf16.gmra.mxu0 %v803
        %v2866 = vpop.f32.mrf.mxu0
        %v2867 = vadd.f32 0.0, %v2866
        %v2868 = vpop.f32.mrf.mxu0
        %v2869 = vadd.f32 0.0, %v2868
        %2870 = vmatmul.bf16.gmra.mxu0 %v804
        %v2871 = vpop.f32.mrf.mxu0
        %v2872 = vadd.f32 0.0, %v2871
        %v2873 = vpop.f32.mrf.mxu0
        %v2874 = vadd.f32 0.0, %v2873
        %2875 = vmatmul.bf16.gmra.mxu0 %v805
        %v2876 = vpop.f32.mrf.mxu0
        %v2877 = vadd.f32 0.0, %v2876
        %v2878 = vpop.f32.mrf.mxu0
        %v2879 = vadd.f32 0.0, %v2878
        %2880 = vmatmul.bf16.gmra.mxu0 %v806
        %v2881 = vpop.f32.mrf.mxu0
        %v2882 = vadd.f32 0.0, %v2881
        %v2883 = vpop.f32.mrf.mxu0
        %v2884 = vadd.f32 0.0, %v2883
        %2885 = vmatmul.bf16.gmra.mxu0 %v807
        %v2886 = vpop.f32.mrf.mxu0
        %v2887 = vadd.f32 0.0, %v2886
        %v2888 = vpop.f32.mrf.mxu0
        %v2889 = vadd.f32 0.0, %v2888
        %2890 = vmatmul.bf16.gmra.mxu0 %v808
        %v2891 = vpop.f32.mrf.mxu0
        %v2892 = vadd.f32 0.0, %v2891
        %v2893 = vpop.f32.mrf.mxu0
        %v2894 = vadd.f32 0.0, %v2893
        %2895 = vmatmul.bf16.gmra.mxu0 %v809
        %v2896 = vpop.f32.mrf.mxu0
        %v2897 = vadd.f32 0.0, %v2896
        %v2898 = vpop.f32.mrf.mxu0
        %v2899 = vadd.f32 0.0, %v2898
        %2900 = vmatmul.bf16.gmra.mxu0 %v810
        %v2901 = vpop.f32.mrf.mxu0
        %v2902 = vadd.f32 0.0, %v2901
        %v2903 = vpop.f32.mrf.mxu0
        %v2904 = vadd.f32 0.0, %v2903
        %2905 = vmatmul.bf16.gmra.mxu0 %v811
        %v2906 = vpop.f32.mrf.mxu0
        %v2907 = vadd.f32 0.0, %v2906
        %v2908 = vpop.f32.mrf.mxu0
        %v2909 = vadd.f32 0.0, %v2908
        %2910 = vmatmul.bf16.gmra.mxu0 %v812
        %v2911 = vpop.f32.mrf.mxu0
        %v2912 = vadd.f32 0.0, %v2911
        %v2913 = vpop.f32.mrf.mxu0
        %v2914 = vadd.f32 0.0, %v2913
        %2915 = vmatmul.bf16.gmra.mxu0 %v813
        %v2916 = vpop.f32.mrf.mxu0
        %v2917 = vadd.f32 0.0, %v2916
        %v2918 = vpop.f32.mrf.mxu0
        %v2919 = vadd.f32 0.0, %v2918
        %2920 = vmatmul.bf16.gmra.mxu0 %v814
        %v2921 = vpop.f32.mrf.mxu0
        %v2922 = vadd.f32 0.0, %v2921
        %v2923 = vpop.f32.mrf.mxu0
        %v2924 = vadd.f32 0.0, %v2923
        %2925 = vmatmul.bf16.gmra.mxu0 %v815
        %v2926 = vpop.f32.mrf.mxu0
        %v2927 = vadd.f32 0.0, %v2926
        %v2928 = vpop.f32.mrf.mxu0
        %v2929 = vadd.f32 0.0, %v2928
        %2930 = vmatmul.bf16.gmra.mxu0 %v816
        %v2931 = vpop.f32.mrf.mxu0
        %v2932 = vadd.f32 0.0, %v2931
        %v2933 = vpop.f32.mrf.mxu0
        %v2934 = vadd.f32 0.0, %v2933
        %2935 = vmatmul.bf16.gmra.mxu0 %v817
        %v2936 = vpop.f32.mrf.mxu0
        %v2937 = vadd.f32 0.0, %v2936
        %v2938 = vpop.f32.mrf.mxu0
        %v2939 = vadd.f32 0.0, %v2938
        %2940 = vdwg.mxu0
        %v2957 = vunpack.c.l.b16 %v2692
        %v2958 = vunpack.c.l.b16 %v2693
        %v2959 = vunpack.c.l.b16 %v2694
        %v2960 = vunpack.c.l.b16 %v2695
        %v2961 = vunpack.c.l.b16 %v2696
        %v2962 = vunpack.c.l.b16 %v2697
        %v2963 = vunpack.c.l.b16 %v2698
        %v2964 = vunpack.c.l.b16 %v2699
        %v2965 = vunpack.c.l.b16 %v2700
        %v2966 = vunpack.c.l.b16 %v2701
        %v2967 = vunpack.c.l.b16 %v2702
        %v2968 = vunpack.c.l.b16 %v2703
        %v2969 = vunpack.c.l.b16 %v2704
        %v2970 = vunpack.c.l.b16 %v2705
        %v2971 = vunpack.c.l.b16 %v2706
        %v2972 = vunpack.c.l.b16 %v2707
        %v2973 = vpack.c.b16 %v2958, %v2957
        %v2974 = vpack.c.b16 %v2960, %v2959
        %v2975 = vpack.c.b16 %v2962, %v2961
        %v2976 = vpack.c.b16 %v2964, %v2963
        %v2977 = vpack.c.b16 %v2966, %v2965
        %v2978 = vpack.c.b16 %v2968, %v2967
        %v2979 = vpack.c.b16 %v2970, %v2969
        %v2980 = vpack.c.b16 %v2972, %v2971
        %2989 = vmatpush.bf16.msra.mxu0 %v2980
        %2990 = vmatpush.bf16.msra.mxu0 %v2979
        %2991 = vmatpush.bf16.msra.mxu0 %v2978
        %2992 = vmatpush.bf16.msra.mxu0 %v2977
        %2993 = vmatpush.bf16.msra.mxu0 %v2976
        %2994 = vmatpush.bf16.msra.mxu0 %v2975
        %2995 = vmatpush.bf16.msra.mxu0 %v2974
        %2996 = vmatpush.bf16.msra.mxu0 %v2973
        %2997 = vmatmul.bf16.gmra.mxu0 %v2660
        %v2998 = vpop.f32.mrf.mxu0
        %v2999 = vadd.f32 %v2782, %v2998
        %v3000 = vpop.f32.mrf.mxu0
        %v3001 = vadd.f32 %v2784, %v3000
        %3002 = vmatmul.bf16.gmra.mxu0 %v2661
        %v3003 = vpop.f32.mrf.mxu0
        %v3004 = vadd.f32 %v2787, %v3003
        %v3005 = vpop.f32.mrf.mxu0
        %v3006 = vadd.f32 %v2789, %v3005
        %3007 = vmatmul.bf16.gmra.mxu0 %v2662
        %v3008 = vpop.f32.mrf.mxu0
        %v3009 = vadd.f32 %v2792, %v3008
        %v3010 = vpop.f32.mrf.mxu0
        %v3011 = vadd.f32 %v2794, %v3010
        %3012 = vmatmul.bf16.gmra.mxu0 %v2663
        %v3013 = vpop.f32.mrf.mxu0
        %v3014 = vadd.f32 %v2797, %v3013
        %v3015 = vpop.f32.mrf.mxu0
        %v3016 = vadd.f32 %v2799, %v3015
        %3017 = vmatmul.bf16.gmra.mxu0 %v2664
        %v3018 = vpop.f32.mrf.mxu0
        %v3019 = vadd.f32 %v2802, %v3018
        %v3020 = vpop.f32.mrf.mxu0
        %v3021 = vadd.f32 %v2804, %v3020
        %3022 = vmatmul.bf16.gmra.mxu0 %v2665
        %v3023 = vpop.f32.mrf.mxu0
        %v3024 = vadd.f32 %v2807, %v3023
        %v3025 = vpop.f32.mrf.mxu0
        %v3026 = vadd.f32 %v2809, %v3025
        %3027 = vmatmul.bf16.gmra.mxu0 %v2666
        %v3028 = vpop.f32.mrf.mxu0
        %v3029 = vadd.f32 %v2812, %v3028
        %v3030 = vpop.f32.mrf.mxu0
        %v3031 = vadd.f32 %v2814, %v3030
        %3032 = vmatmul.bf16.gmra.mxu0 %v2667
        %v3033 = vpop.f32.mrf.mxu0
        %v3034 = vadd.f32 %v2817, %v3033
        %v3035 = vpop.f32.mrf.mxu0
        %v3036 = vadd.f32 %v2819, %v3035
        %3037 = vmatmul.bf16.gmra.mxu0 %v2668
        %v3038 = vpop.f32.mrf.mxu0
        %v3039 = vadd.f32 %v2822, %v3038
        %v3040 = vpop.f32.mrf.mxu0
        %v3041 = vadd.f32 %v2824, %v3040
        %3042 = vmatmul.bf16.gmra.mxu0 %v2669
        %v3043 = vpop.f32.mrf.mxu0
        %v3044 = vadd.f32 %v2827, %v3043
        %v3045 = vpop.f32.mrf.mxu0
        %v3046 = vadd.f32 %v2829, %v3045
        %3047 = vmatmul.bf16.gmra.mxu0 %v2670
        %v3048 = vpop.f32.mrf.mxu0
        %v3049 = vadd.f32 %v2832, %v3048
        %v3050 = vpop.f32.mrf.mxu0
        %v3051 = vadd.f32 %v2834, %v3050
        %3052 = vmatmul.bf16.gmra.mxu0 %v2671
        %v3053 = vpop.f32.mrf.mxu0
        %v3054 = vadd.f32 %v2837, %v3053
        %v3055 = vpop.f32.mrf.mxu0
        %v3056 = vadd.f32 %v2839, %v3055
        %3057 = vmatmul.bf16.gmra.mxu0 %v2672
        %v3058 = vpop.f32.mrf.mxu0
        %v3059 = vadd.f32 %v2842, %v3058
        %v3060 = vpop.f32.mrf.mxu0
        %v3061 = vadd.f32 %v2844, %v3060
        %3062 = vmatmul.bf16.gmra.mxu0 %v2673
        %v3063 = vpop.f32.mrf.mxu0
        %v3064 = vadd.f32 %v2847, %v3063
        %v3065 = vpop.f32.mrf.mxu0
        %v3066 = vadd.f32 %v2849, %v3065
        %3067 = vmatmul.bf16.gmra.mxu0 %v2674
        %v3068 = vpop.f32.mrf.mxu0
        %v3069 = vadd.f32 %v2852, %v3068
        %v3070 = vpop.f32.mrf.mxu0
        %v3071 = vadd.f32 %v2854, %v3070
        %3072 = vmatmul.bf16.gmra.mxu0 %v2675
        %v3073 = vpop.f32.mrf.mxu0
        %v3074 = vadd.f32 %v2857, %v3073
        %v3075 = vpop.f32.mrf.mxu0
        %v3076 = vadd.f32 %v2859, %v3075
        %3077 = vmatmul.bf16.gmra.mxu0 %v2676
        %v3078 = vpop.f32.mrf.mxu0
        %v3079 = vadd.f32 %v2862, %v3078
        %v3080 = vpop.f32.mrf.mxu0
        %v3081 = vadd.f32 %v2864, %v3080
        %3082 = vmatmul.bf16.gmra.mxu0 %v2677
        %v3083 = vpop.f32.mrf.mxu0
        %v3084 = vadd.f32 %v2867, %v3083
        %v3085 = vpop.f32.mrf.mxu0
        %v3086 = vadd.f32 %v2869, %v3085
        %3087 = vmatmul.bf16.gmra.mxu0 %v2678
        %v3088 = vpop.f32.mrf.mxu0
        %v3089 = vadd.f32 %v2872, %v3088
        %v3090 = vpop.f32.mrf.mxu0
        %v3091 = vadd.f32 %v2874, %v3090
        %3092 = vmatmul.bf16.gmra.mxu0 %v2679
        %v3093 = vpop.f32.mrf.mxu0
        %v3094 = vadd.f32 %v2877, %v3093
        %v3095 = vpop.f32.mrf.mxu0
        %v3096 = vadd.f32 %v2879, %v3095
        %3097 = vmatmul.bf16.gmra.mxu0 %v2680
        %v3098 = vpop.f32.mrf.mxu0
        %v3099 = vadd.f32 %v2882, %v3098
        %v3100 = vpop.f32.mrf.mxu0
        %v3101 = vadd.f32 %v2884, %v3100
        %3102 = vmatmul.bf16.gmra.mxu0 %v2681
        %v3103 = vpop.f32.mrf.mxu0
        %v3104 = vadd.f32 %v2887, %v3103
        %v3105 = vpop.f32.mrf.mxu0
        %v3106 = vadd.f32 %v2889, %v3105
        %3107 = vmatmul.bf16.gmra.mxu0 %v2682
        %v3108 = vpop.f32.mrf.mxu0
        %v3109 = vadd.f32 %v2892, %v3108
        %v3110 = vpop.f32.mrf.mxu0
        %v3111 = vadd.f32 %v2894, %v3110
        %3112 = vmatmul.bf16.gmra.mxu0 %v2683
        %v3113 = vpop.f32.mrf.mxu0
        %v3114 = vadd.f32 %v2897, %v3113
        %v3115 = vpop.f32.mrf.mxu0
        %v3116 = vadd.f32 %v2899, %v3115
        %3117 = vmatmul.bf16.gmra.mxu0 %v2684
        %v3118 = vpop.f32.mrf.mxu0
        %v3119 = vadd.f32 %v2902, %v3118
        %v3120 = vpop.f32.mrf.mxu0
        %v3121 = vadd.f32 %v2904, %v3120
        %3122 = vmatmul.bf16.gmra.mxu0 %v2685
        %v3123 = vpop.f32.mrf.mxu0
        %v3124 = vadd.f32 %v2907, %v3123
        %v3125 = vpop.f32.mrf.mxu0
        %v3126 = vadd.f32 %v2909, %v3125
        %3127 = vmatmul.bf16.gmra.mxu0 %v2686
        %v3128 = vpop.f32.mrf.mxu0
        %v3129 = vadd.f32 %v2912, %v3128
        %v3130 = vpop.f32.mrf.mxu0
        %v3131 = vadd.f32 %v2914, %v3130
        %3132 = vmatmul.bf16.gmra.mxu0 %v2687
        %v3133 = vpop.f32.mrf.mxu0
        %v3134 = vadd.f32 %v2917, %v3133
        %v3135 = vpop.f32.mrf.mxu0
        %v3136 = vadd.f32 %v2919, %v3135
        %3137 = vmatmul.bf16.gmra.mxu0 %v2688
        %v3138 = vpop.f32.mrf.mxu0
        %v3139 = vadd.f32 %v2922, %v3138
        %v3140 = vpop.f32.mrf.mxu0
        %v3141 = vadd.f32 %v2924, %v3140
        %3142 = vmatmul.bf16.gmra.mxu0 %v2689
        %v3143 = vpop.f32.mrf.mxu0
        %v3144 = vadd.f32 %v2927, %v3143
        %v3145 = vpop.f32.mrf.mxu0
        %v3146 = vadd.f32 %v2929, %v3145
        %3147 = vmatmul.bf16.gmra.mxu0 %v2690
        %v3148 = vpop.f32.mrf.mxu0
        %v3149 = vadd.f32 %v2932, %v3148
        %v3150 = vpop.f32.mrf.mxu0
        %v3151 = vadd.f32 %v2934, %v3150
        %3152 = vmatmul.bf16.gmra.mxu0 %v2691
        %v3153 = vpop.f32.mrf.mxu0
        %v3154 = vadd.f32 %v2937, %v3153
        %v3155 = vpop.f32.mrf.mxu0
        %v3156 = vadd.f32 %v2939, %v3155
        %3157 = vdwg.mxu0
        %v3158 = vld [vmem:[%s14] sm:$0x1]
        %v3160 = vperm.slane %v3158, 0
        %v3162 = vadd.f32 %v2999, %v3160
        %v3163 = vadd.f32 %v3001, %v3160
        %v3164 = vadd.f32 %v3004, %v3160
        %v3165 = vadd.f32 %v3006, %v3160
        %v3166 = vadd.f32 %v3009, %v3160
        %v3167 = vadd.f32 %v3011, %v3160
        %v3168 = vadd.f32 %v3014, %v3160
        %v3169 = vadd.f32 %v3016, %v3160
        %v3170 = vadd.f32 %v3019, %v3160
        %v3171 = vadd.f32 %v3021, %v3160
        %v3172 = vadd.f32 %v3024, %v3160
        %v3173 = vadd.f32 %v3026, %v3160
        %v3174 = vadd.f32 %v3029, %v3160
        %v3175 = vadd.f32 %v3031, %v3160
        %v3176 = vadd.f32 %v3034, %v3160
        %v3177 = vadd.f32 %v3036, %v3160
        %v3178 = vadd.f32 %v3039, %v3160
        %v3179 = vadd.f32 %v3041, %v3160
        %v3180 = vadd.f32 %v3044, %v3160
        %v3181 = vadd.f32 %v3046, %v3160
        %v3182 = vadd.f32 %v3049, %v3160
        %v3183 = vadd.f32 %v3051, %v3160
        %v3184 = vadd.f32 %v3054, %v3160
        %v3185 = vadd.f32 %v3056, %v3160
        %v3186 = vadd.f32 %v3059, %v3160
        %v3187 = vadd.f32 %v3061, %v3160
        %v3188 = vadd.f32 %v3064, %v3160
        %v3189 = vadd.f32 %v3066, %v3160
        %v3190 = vadd.f32 %v3069, %v3160
        %v3191 = vadd.f32 %v3071, %v3160
        %v3192 = vadd.f32 %v3074, %v3160
        %v3193 = vadd.f32 %v3076, %v3160
        %v3194 = vadd.f32 %v3079, %v3160
        %v3195 = vadd.f32 %v3081, %v3160
        %v3196 = vadd.f32 %v3084, %v3160
        %v3197 = vadd.f32 %v3086, %v3160
        %v3198 = vadd.f32 %v3089, %v3160
        %v3199 = vadd.f32 %v3091, %v3160
        %v3200 = vadd.f32 %v3094, %v3160
        %v3201 = vadd.f32 %v3096, %v3160
        %v3202 = vadd.f32 %v3099, %v3160
        %v3203 = vadd.f32 %v3101, %v3160
        %v3204 = vadd.f32 %v3104, %v3160
        %v3205 = vadd.f32 %v3106, %v3160
        %v3206 = vadd.f32 %v3109, %v3160
        %v3207 = vadd.f32 %v3111, %v3160
        %v3208 = vadd.f32 %v3114, %v3160
        %v3209 = vadd.f32 %v3116, %v3160
        %v3210 = vadd.f32 %v3119, %v3160
        %v3211 = vadd.f32 %v3121, %v3160
        %v3212 = vadd.f32 %v3124, %v3160
        %v3213 = vadd.f32 %v3126, %v3160
        %v3214 = vadd.f32 %v3129, %v3160
        %v3215 = vadd.f32 %v3131, %v3160
        %v3216 = vadd.f32 %v3134, %v3160
        %v3217 = vadd.f32 %v3136, %v3160
        %v3218 = vadd.f32 %v3139, %v3160
        %v3219 = vadd.f32 %v3141, %v3160
        %v3220 = vadd.f32 %v3144, %v3160
        %v3221 = vadd.f32 %v3146, %v3160
        %v3222 = vadd.f32 %v3149, %v3160
        %v3223 = vadd.f32 %v3151, %v3160
        %v3224 = vadd.f32 %v3154, %v3160
        %v3225 = vadd.f32 %v3156, %v3160
        %v3226 = vmax.f32 %v3162, 0.0
        %v3227 = vmax.f32 %v3163, 0.0
        %v3228 = vmax.f32 %v3164, 0.0
        %v3229 = vmax.f32 %v3165, 0.0
        %v3230 = vmax.f32 %v3166, 0.0
        %v3231 = vmax.f32 %v3167, 0.0
        %v3232 = vmax.f32 %v3168, 0.0
        %v3233 = vmax.f32 %v3169, 0.0
        %v3234 = vmax.f32 %v3170, 0.0
        %v3235 = vmax.f32 %v3171, 0.0
        %v3236 = vmax.f32 %v3172, 0.0
        %v3237 = vmax.f32 %v3173, 0.0
        %v3238 = vmax.f32 %v3174, 0.0
        %v3239 = vmax.f32 %v3175, 0.0
        %v3240 = vmax.f32 %v3176, 0.0
        %v3241 = vmax.f32 %v3177, 0.0
        %v3242 = vmax.f32 %v3178, 0.0
        %v3243 = vmax.f32 %v3179, 0.0
        %v3244 = vmax.f32 %v3180, 0.0
        %v3245 = vmax.f32 %v3181, 0.0
        %v3246 = vmax.f32 %v3182, 0.0
        %v3247 = vmax.f32 %v3183, 0.0
        %v3248 = vmax.f32 %v3184, 0.0
        %v3249 = vmax.f32 %v3185, 0.0
        %v3250 = vmax.f32 %v3186, 0.0
        %v3251 = vmax.f32 %v3187, 0.0
        %v3252 = vmax.f32 %v3188, 0.0
        %v3253 = vmax.f32 %v3189, 0.0
        %v3254 = vmax.f32 %v3190, 0.0
        %v3255 = vmax.f32 %v3191, 0.0
        %v3256 = vmax.f32 %v3192, 0.0
        %v3257 = vmax.f32 %v3193, 0.0
        %v3258 = vmax.f32 %v3194, 0.0
        %v3259 = vmax.f32 %v3195, 0.0
        %v3260 = vmax.f32 %v3196, 0.0
        %v3261 = vmax.f32 %v3197, 0.0
        %v3262 = vmax.f32 %v3198, 0.0
        %v3263 = vmax.f32 %v3199, 0.0
        %v3264 = vmax.f32 %v3200, 0.0
        %v3265 = vmax.f32 %v3201, 0.0
        %v3266 = vmax.f32 %v3202, 0.0
        %v3267 = vmax.f32 %v3203, 0.0
        %v3268 = vmax.f32 %v3204, 0.0
        %v3269 = vmax.f32 %v3205, 0.0
        %v3270 = vmax.f32 %v3206, 0.0
        %v3271 = vmax.f32 %v3207, 0.0
        %v3272 = vmax.f32 %v3208, 0.0
        %v3273 = vmax.f32 %v3209, 0.0
        %v3274 = vmax.f32 %v3210, 0.0
        %v3275 = vmax.f32 %v3211, 0.0
        %v3276 = vmax.f32 %v3212, 0.0
        %v3277 = vmax.f32 %v3213, 0.0
        %v3278 = vmax.f32 %v3214, 0.0
        %v3279 = vmax.f32 %v3215, 0.0
        %v3280 = vmax.f32 %v3216, 0.0
        %v3281 = vmax.f32 %v3217, 0.0
        %v3282 = vmax.f32 %v3218, 0.0
        %v3283 = vmax.f32 %v3219, 0.0
        %v3284 = vmax.f32 %v3220, 0.0
        %v3285 = vmax.f32 %v3221, 0.0
        %v3286 = vmax.f32 %v3222, 0.0
        %v3287 = vmax.f32 %v3223, 0.0
        %v3288 = vmax.f32 %v3224, 0.0
        %v3289 = vmax.f32 %v3225, 0.0
        %3290 = vst [vmem:[%s549] sm:$0xff] %v3226
        %3291 = vst [vmem:[%s549 + $0x8] sm:$0xff] %v3227
        %3292 = vst [vmem:[%s549 + $0x10] sm:$0xff] %v3228
        %3293 = vst [vmem:[%s549 + $0x18] sm:$0xff] %v3229
        %3294 = vst [vmem:[%s549 + $0x20] sm:$0xff] %v3230
        %3295 = vst [vmem:[%s549 + $0x28] sm:$0xff] %v3231
        %3296 = vst [vmem:[%s549 + $0x30] sm:$0xff] %v3232
        %3297 = vst [vmem:[%s549 + $0x38] sm:$0xff] %v3233
        %3298 = vst [vmem:[%s549 + $0x40] sm:$0xff] %v3234
        %3299 = vst [vmem:[%s549 + $0x48] sm:$0xff] %v3235
        %3300 = vst [vmem:[%s549 + $0x50] sm:$0xff] %v3236
        %3301 = vst [vmem:[%s549 + $0x58] sm:$0xff] %v3237
        %3302 = vst [vmem:[%s549 + $0x60] sm:$0xff] %v3238
        %3303 = vst [vmem:[%s549 + $0x68] sm:$0xff] %v3239
        %3304 = vst [vmem:[%s549 + $0x70] sm:$0xff] %v3240
        %3305 = vst [vmem:[%s549 + $0x78] sm:$0xff] %v3241
        %3306 = vst [vmem:[%s549 + $0x80] sm:$0xff] %v3242
        %3307 = vst [vmem:[%s549 + $0x88] sm:$0xff] %v3243
        %3308 = vst [vmem:[%s549 + $0x90] sm:$0xff] %v3244
        %3309 = vst [vmem:[%s549 + $0x98] sm:$0xff] %v3245
        %3310 = vst [vmem:[%s549 + $0xa0] sm:$0xff] %v3246
        %3311 = vst [vmem:[%s549 + $0xa8] sm:$0xff] %v3247
        %3312 = vst [vmem:[%s549 + $0xb0] sm:$0xff] %v3248
        %3313 = vst [vmem:[%s549 + $0xb8] sm:$0xff] %v3249
        %3314 = vst [vmem:[%s549 + $0xc0] sm:$0xff] %v3250
        %3315 = vst [vmem:[%s549 + $0xc8] sm:$0xff] %v3251
        %3316 = vst [vmem:[%s549 + $0xd0] sm:$0xff] %v3252
        %3317 = vst [vmem:[%s549 + $0xd8] sm:$0xff] %v3253
        %3318 = vst [vmem:[%s549 + $0xe0] sm:$0xff] %v3254
        %3319 = vst [vmem:[%s549 + $0xe8] sm:$0xff] %v3255
        %3320 = vst [vmem:[%s549 + $0xf0] sm:$0xff] %v3256
        %3321 = vst [vmem:[%s549 + $0xf8] sm:$0xff] %v3257
        %3322 = vst [vmem:[%s549 + $0x100] sm:$0xff] %v3258
        %3323 = vst [vmem:[%s549 + $0x108] sm:$0xff] %v3259
        %3324 = vst [vmem:[%s549 + $0x110] sm:$0xff] %v3260
        %3325 = vst [vmem:[%s549 + $0x118] sm:$0xff] %v3261
        %3326 = vst [vmem:[%s549 + $0x120] sm:$0xff] %v3262
        %3327 = vst [vmem:[%s549 + $0x128] sm:$0xff] %v3263
        %3328 = vst [vmem:[%s549 + $0x130] sm:$0xff] %v3264
        %3329 = vst [vmem:[%s549 + $0x138] sm:$0xff] %v3265
        %3330 = vst [vmem:[%s549 + $0x140] sm:$0xff] %v3266
        %3331 = vst [vmem:[%s549 + $0x148] sm:$0xff] %v3267
        %3332 = vst [vmem:[%s549 + $0x150] sm:$0xff] %v3268
        %3333 = vst [vmem:[%s549 + $0x158] sm:$0xff] %v3269
        %3334 = vst [vmem:[%s549 + $0x160] sm:$0xff] %v3270
        %3335 = vst [vmem:[%s549 + $0x168] sm:$0xff] %v3271
        %3336 = vst [vmem:[%s549 + $0x170] sm:$0xff] %v3272
        %3337 = vst [vmem:[%s549 + $0x178] sm:$0xff] %v3273
        %3338 = vst [vmem:[%s549 + $0x180] sm:$0xff] %v3274
        %3339 = vst [vmem:[%s549 + $0x188] sm:$0xff] %v3275
        %3340 = vst [vmem:[%s549 + $0x190] sm:$0xff] %v3276
        %3341 = vst [vmem:[%s549 + $0x198] sm:$0xff] %v3277
        %3342 = vst [vmem:[%s549 + $0x1a0] sm:$0xff] %v3278
        %3343 = vst [vmem:[%s549 + $0x1a8] sm:$0xff] %v3279
        %3344 = vst [vmem:[%s549 + $0x1b0] sm:$0xff] %v3280
        %3345 = vst [vmem:[%s549 + $0x1b8] sm:$0xff] %v3281
        %3346 = vst [vmem:[%s549 + $0x1c0] sm:$0xff] %v3282
        %3347 = vst [vmem:[%s549 + $0x1c8] sm:$0xff] %v3283
        %3348 = vst [vmem:[%s549 + $0x1d0] sm:$0xff] %v3284
        %3349 = vst [vmem:[%s549 + $0x1d8] sm:$0xff] %v3285
        %3350 = vst [vmem:[%s549 + $0x1e0] sm:$0xff] %v3286
        %3351 = vst [vmem:[%s549 + $0x1e8] sm:$0xff] %v3287
        %3352 = vst [vmem:[%s549 + $0x1f0] sm:$0xff] %v3288
        %3353 = vst [vmem:[%s549 + $0x1f8] sm:$0xff] %v3289
        %s3354 = sand.u32 %s388, 1
        %s3355 = scalar_lea.sflag [#allocation3], %s3354
        %s3356 = sand.u32 %s388, 1
        %s3357 = smul.addr %s3356, 512
        %s3358 = scalar_lea.vmem [#allocation2], %s3357
        // Predicated region
        $region81: #{spatial_ocr_pallas.3} parent=79 // pred_check
          %p3359 = pneg %p398
        $region82: #{spatial_ocr_pallas.3} parent=79 // pred_check_branch
          %3361 = sbr.rel (%p3359) target = $region84
        $region83: #{spatial_ocr_pallas.3} parent=79 // pred_region
          %s3362 = smul.u32 64, %s34
          %3364 = vsyncadd %s3355, 0
          %s3365 = smul.addr %s33, 128
          %s3366 = sadd.s32 %s3362, %s3365
          %s3367 = smul.addr %s3366, 8
          %s3368 = scalar_lea.hbm %s15, %s3367
          %s3369 = sshll.u32 %s3358, 4
          %s3370 = int_to_ptr.vmem [resolvable:$true] %s3369
          %s3371 = sshll.u32 %s3368, 4
          %s3372 = int_to_ptr.hbm [resolvable:$true] %s3371
          %3377 = dma.vmem_to_hbm [thread:$0]  %s3370, 8192, %s3372, %s3355, 128, 128, 8
        $region84: #{spatial_ocr_pallas.3} parent=79 // pred_fallthru
          _
      $region80: #{spatial_ocr_pallas.3} parent=5 // pred_fallthru
        _
      %p3378 = scmp.le.s32.totalorder 2, %s24
      // Predicated region
      $region85: #{spatial_ocr_pallas.3} parent=5 // pred_check
        %p3379 = pneg %p3378
      $region86: #{spatial_ocr_pallas.3} parent=5 // pred_check_branch
        %3381 = sbr.rel (%p3379) target = $region88
      $region87: #{spatial_ocr_pallas.3} parent=5 // pred_region
        %s3382 = ssub.s32 %s24, 2
        // Predicated region
        $region89: #{spatial_ocr_pallas.3} parent=87 // pred_check
          %p3383 = pneg %p404
        $region90: #{spatial_ocr_pallas.3} parent=87 // pred_check_branch
          %3385 = sbr.rel (%p3383) target = $region92
        $region91: #{spatial_ocr_pallas.3} parent=87 // pred_region
          %s3386 = sand.u32 %s389, 1
          %s3387 = scalar_lea.sflag [#allocation3], %s3386
          %s3388 = sand.u32 %s389, 1
          %s3389 = smul.addr %s3388, 512
          %s3390 = scalar_lea.vmem [#allocation2], %s3389
          %3392 = dma.done %s3387, 8192
        $region92: #{spatial_ocr_pallas.3} parent=87 // pred_fallthru
          _
      $region88: #{spatial_ocr_pallas.3} parent=5 // pred_fallthru
        _
    $region6: #{spatial_ocr_pallas.3} parent=1 // loop_footer
      %s28 = sadd.s32 1, %s24
    $region7: #{spatial_ocr_pallas.3} parent=1 // loop_footer_branch
      %23 = sbr.rel target = $region3
    $region8: #{spatial_ocr_pallas.3} parent=1 // loop_exit
      _
    %3393 = vsyncpa [#allocation3], 1
    %s3394 = scalar_lea.sflag [#allocation3], 1
    %3395 = vsyncpa %s3394, 1

</llo_original>
